<compile_context>
chip_gen: v7x
topology: tpu7x:2x2x1
jax: 0.10.0
libtpu: 0.0.40
codegen_flags: <defaults>
</compile_context>

<pallas_src>
import functools

import jax
import jax.numpy as jnp
from jax.experimental import pallas as pl
from jax.experimental.pallas import tpu as pltpu


def _round_up(x, m):
    return (x + m - 1) // m * m


def _conv_tile(x_ref, w_ref, h_tile, *, K, stride, th, Wo):
    """f32 conv output for one (th, Wo) output-row tile: K*K shifted matmuls.

    x_ref: (1, Hp, Wp, Cin) padded image, resident in VMEM.
    w_ref: (K*K, Cin, Coutp) weights, tap-major.
    Returns (th*Wo, Coutp) f32.
    """
    Cin = x_ref.shape[-1]
    Coutp = w_ref.shape[-1]
    # th is a multiple of 8, so the tile's first input row is 8-aligned.
    row0 = pl.multiple_of(h_tile * th * stride, 8)
    acc = jnp.zeros((th * Wo, Coutp), jnp.float32)
    for kh in range(K):
        for kw in range(K):
            if stride == 1:
                r_idx = pl.ds(row0 + kh, th)
                c_idx = pl.ds(kw, Wo)
            else:
                r_idx = pl.ds(row0 + kh, th, stride)
                c_idx = pl.ds(kw, Wo, stride)
            xs = x_ref[0, r_idx, c_idx, :]                     # (th, Wo, Cin)
            # NOTE: Wo that is not a multiple of 8 forces a relayout for this
            # collapse; correct, just slower.
            acc = acc + jnp.dot(xs.reshape(th * Wo, Cin), w_ref[kh * K + kw],
                                preferred_element_type=jnp.float32)
    return acc


def _stats_kernel(x_ref, w_ref, stats_ref, *, K, stride, th, Wo, Ho):
    """Pass 1: conv tile (recomputed, never stored) -> per-tile BN partials."""
    h_tile = pl.program_id(1)
    y = _conv_tile(x_ref, w_ref, h_tile, K=K, stride=stride, th=th, Wo=Wo)
    if Ho % th != 0:
        # Mask rows that fall past the real output height (tile padding).
        t_idx = jax.lax.broadcasted_iota(jnp.int32, (th, Wo), 0)
        valid = ((h_tile * th + t_idx) < Ho).reshape(th * Wo, 1)
        y = jnp.where(valid, y, 0.0)
    # Row 0 = sum, row 1 = sum of squares; rows 2..7 of the 8-row block are
    # never read on the host (no zero-pad concat -> no relayout / wasted vst).
    stats_ref[0:1, :] = jnp.sum(y, axis=0, keepdims=True)
    stats_ref[1:2, :] = jnp.sum(y * y, axis=0, keepdims=True)


def _conv_bn_act_kernel(x_ref, w_ref, scale_ref, shift_ref, o_ref,
                        *, K, stride, th, Wo, act):
    """Pass 2: recompute conv tile, fuse BN affine + activation into the store."""
    h_tile = pl.program_id(1)
    y = _conv_tile(x_ref, w_ref, h_tile, K=K, stride=stride, th=th, Wo=Wo)
    y = y * scale_ref[...] + shift_ref[...]
    if act == "relu":
        y = jnp.maximum(y, 0.0)
    # TODO(synk): other Activation(act) variants (hardswish, sigmoid, ...) not needed here.
    o_ref[...] = y.astype(o_ref.dtype)


def conv_bn_layer(x_nchw, weight_oihw, gamma, beta, *, stride=1, act="relu",
                  eps=1e-5, th=None, compute_dtype=jnp.float32,
                  out_dtype=jnp.float32):
    """Forward of ConvBNLayer. x_nchw: (N, Cin, H, W). Returns (N, Cout, Ho, Wo)."""
    N, Cin, H, W = x_nchw.shape
    Cout, Cin_w, K, K2 = weight_oihw.shape
    assert Cin_w == Cin and K == K2, "groups=1 conv expected"
    # TODO(synk): groups != 1 (depthwise) ConvBNLayer variant not implemented.
    pad = (K - 1) // 2
    Ho = (H + 2 * pad - K) // stride + 1
    Wo = (W + 2 * pad - K) // stride + 1
    Coutp = _round_up(Cout, 128)                         # lane-dense outputs / stats

    in_b = jnp.dtype(compute_dtype).itemsize
    out_b = jnp.dtype(out_dtype).itemsize

    # ---- per-generation VMEM budget (small cap on v7x, large on v5e/v6e) ----
    try:
        vmem_phys = int(pltpu.get_tpu_info().vmem_capacity_bytes)
    except Exception:
        vmem_phys = 64 << 20                              # conservative (v7x-class)
    if vmem_phys <= (64 << 20):
        vmem_cap = int(vmem_phys * 0.6)                   # ~38 MiB on v7x
    else:
        vmem_cap = min(int(vmem_phys * 0.78), 100 << 20)  # ~100 MiB on v5e/v6e

    # ---- row-tile size: multiple of 8, large enough to amortize per-step
    #      overhead, small enough that acc + output double buffer fit easily ----
    if th is None:
        th = max(8, _round_up(min(_round_up(Ho, 8), max(8, 2048 // max(Wo, 1))), 8))
        while th > 8 and 4 * th * Wo * Coutp * 4 > vmem_cap // 4:
            th -= 8
    else:
        th = max(8, _round_up(th, 8))
    HT = pl.cdiv(Ho, th)
    Mp = N * HT * th * Wo

    # ---- host prep (cheap, no K^2 blow-up): NHWC + spatial zero pad only ----
    x = jnp.transpose(x_nchw, (0, 2, 3, 1)).astype(compute_dtype)       # NHWC
    Hp_need = (HT * th - 1) * stride + K          # rows touched incl. tile padding
    pad_h_extra = max(0, Hp_need - (H + 2 * pad))
    xp = jnp.pad(x, ((0, 0), (pad, pad + pad_h_extra), (pad, pad), (0, 0)))
    _, Hp, Wp, _ = xp.shape

    w = jnp.transpose(weight_oihw, (2, 3, 1, 0)).reshape(K * K, Cin, Cout)
    w = jnp.pad(w, ((0, 0), (0, 0), (0, Coutp - Cout))).astype(compute_dtype)

    # Padded image resident across the row-tile axis (index map invariant in h).
    x_spec = pl.BlockSpec((1, Hp, Wp, Cin), lambda n, h: (n, 0, 0, 0))
    # Grid-invariant weights: single-buffered to save VMEM headroom.
    w_spec = pl.BlockSpec((K * K, Cin, Coutp), lambda n, h: (0, 0, 0),
                          pipeline_mode=pl.Buffered(1))

    x_blk = Hp * Wp * Cin * in_b
    w_blk = K * K * Cin * Coutp * in_b
    o_blk = th * Wo * Coutp * out_b
    acc_blk = th * Wo * Coutp * 4
    est = (2 * x_blk + w_blk + 2 * o_blk + 2 * 8 * Coutp * 4
           + 4 * Coutp * 4 + 4 * acc_blk)
    vmem_limit = int(min(vmem_cap, max(16 << 20, 2 * est)))
    cp = pltpu.CompilerParams(dimension_semantics=("parallel", "parallel"),
                              vmem_limit_bytes=vmem_limit)

    flops = 2 * Mp * K * K * Cin * Coutp
    cost1 = pl.CostEstimate(flops=flops, transcendentals=0,
                            bytes_accessed=N * x_blk + w_blk + N * HT * 8 * Coutp * 4)
    cost2 = pl.CostEstimate(flops=flops, transcendentals=0,
                            bytes_accessed=N * x_blk + w_blk + Mp * Coutp * out_b)

    grid = (N, HT)

    # ---- pass 1: per-tile BN partial statistics (no conv intermediate) ----
    stats = pl.pallas_call(
        functools.partial(_stats_kernel, K=K, stride=stride, th=th, Wo=Wo, Ho=Ho),
        out_shape=jax.ShapeDtypeStruct((N * HT * 8, Coutp), jnp.float32),
        grid=grid,
        in_specs=[x_spec, w_spec],
        out_specs=pl.BlockSpec((8, Coutp), lambda n, h: (n * HT + h, 0)),
        compiler_params=cp,
        cost_estimate=cost1,
    )(xp, w)

    # ---- finalize global BN stats (tiny) + fold gamma/beta into scale/shift ----
    stats = stats.reshape(N * HT, 8, Coutp)
    M = N * Ho * Wo
    mean = stats[:, 0, :].sum(axis=0) / M
    # TODO(synk): E[y^2]-E[y]^2 can cancel when |mean| >> std; switch to a centered
    # second stats pass if tolerances ever tighten.
    var = jnp.maximum(stats[:, 1, :].sum(axis=0) / M - mean * mean, 0.0)
    g = jnp.pad(gamma.astype(jnp.float32), (0, Coutp - Cout))
    b = jnp.pad(beta.astype(jnp.float32), (0, Coutp - Cout))
    scale = (g * jax.lax.rsqrt(var + eps)).reshape(1, Coutp)
    shift = (b - mean * scale[0]).reshape(1, Coutp)
    # TODO(synk): BatchNorm2d running_mean/running_var updates (and eval-mode
    # normalization with running stats) are not modeled.

    # ---- pass 2: recompute conv, fuse BN affine + activation into the store ----
    out = pl.pallas_call(
        functools.partial(_conv_bn_act_kernel, K=K, stride=stride, th=th, Wo=Wo, act=act),
        out_shape=jax.ShapeDtypeStruct((Mp, Coutp), out_dtype),
        grid=grid,
        in_specs=[x_spec, w_spec,
                  pl.BlockSpec((1, Coutp), lambda n, h: (0, 0)),
                  pl.BlockSpec((1, Coutp), lambda n, h: (0, 0))],
        out_specs=pl.BlockSpec((th * Wo, Coutp), lambda n, h: (n * HT + h, 0)),
        compiler_params=cp,
        cost_estimate=cost2,
    )(xp, w, scale, shift)

    out = out.reshape(N, HT * th, Wo, Coutp)[:, :Ho, :, :Cout]
    return jnp.transpose(out, (0, 3, 1, 2)).astype(out_dtype)     # back to NCHW


def _reference(x_nchw, weight_oihw, gamma, beta, *, stride, act, eps=1e-5):
    """Pure-JAX reference matching PyTorch Conv2d + BatchNorm2d(train) + relu."""
    K = weight_oihw.shape[-1]
    pad = (K - 1) // 2
    y = jax.lax.conv_general_dilated(
        x_nchw, weight_oihw, window_strides=(stride, stride),
        padding=[(pad, pad), (pad, pad)],
        dimension_numbers=("NCHW", "OIHW", "NCHW"))
    mean = y.mean(axis=(0, 2, 3), keepdims=True)
    var = ((y - mean) ** 2).mean(axis=(0, 2, 3), keepdims=True)
    y = (y - mean) * jax.lax.rsqrt(var + eps)
    y = y * gamma[None, :, None, None] + beta[None, :, None, None]
    if act == "relu":
        y = jnp.maximum(y, 0.0)
    return y


if __name__ == "__main__":
    # Small, deterministic example: in_channels=4, out_channels=8, kernel_size=3,
    # stride=1, act="relu"; input x: (2, 4, 16, 16).
    key = jax.random.PRNGKey(0)
    k_x, k_w, k_g, k_b = jax.random.split(key, 4)

    N, Cin, H, W = 2, 4, 16, 16
    Cout, K, stride = 8, 3, 1

    x = jax.random.normal(k_x, (N, Cin, H, W), dtype=jnp.float32)
    weight = jax.random.normal(k_w, (Cout, Cin, K, K), dtype=jnp.float32) * 0.1
    gamma = jax.random.normal(k_g, (Cout,), dtype=jnp.float32) * 0.2 + 1.0
    beta = jax.random.normal(k_b, (Cout,), dtype=jnp.float32) * 0.1

    # th=8 so the Ho=16 toy case exercises a multi-tile grid (grid=(2,2)) and the
    # cross-tile two-pass BatchNorm reduction.
    fwd = jax.jit(functools.partial(conv_bn_layer, stride=stride, act="relu", th=8))
    y = jax.block_until_ready(fwd(x, weight, gamma, beta))

    y_ref = _reference(x, weight, gamma, beta, stride=stride, act="relu")
    assert y.shape == y_ref.shape
    assert jnp.allclose(y, y_ref, rtol=5e-4, atol=5e-4), "mismatch vs reference"

    print("KERNEL_OK")
</pallas_src>

<mosaic_0001>
module attributes {stable_mosaic.version = 11 : i64} {
  func.func @_stats_kernel(%arg0: i32, %arg1: i32, %arg2: memref<1x18x18x4xf32, #tpu.memory_space<vmem>>, %arg3: memref<9x4x128xf32, #tpu.memory_space<vmem>>, %arg4: memref<8x128xf32, #tpu.memory_space<vmem>>) attributes {dimension_semantics = [#tpu.dimension_semantics<parallel>, #tpu.dimension_semantics<parallel>], iteration_bounds = array<i64: 2, 2>, scalar_prefetch = 0 : i64, scratch_operands = 0 : i64, tpu.core_type = #tpu.core_type<tc>, window_params = [{transform_indices = @transform_0, window_bounds = array<i64: 1, 18, 18, 4>}, {pipeline_mode = #tpu.pipeline_mode<synchronous>, transform_indices = @transform_1, window_bounds = array<i64: 9, 4, 128>}, {transform_indices = @transform_2, window_bounds = array<i64: 8, 128>}]} {
    %c8_i32 = arith.constant 8 : i32
    %0 = arith.muli %arg1, %c8_i32 : i32
    %c1_i32 = arith.constant 1 : i32
    %1 = arith.muli %0, %c1_i32 : i32
    %2 = tpu.assume_multiple %1, 8 : i32
    %cst = arith.constant 0.000000e+00 : f32
    %3 = vector.broadcast %cst : f32 to vector<128x128xf32>
    %c0_i32 = arith.constant 0 : i32
    %4 = arith.addi %2, %c0_i32 : i32
    %c0 = arith.constant 0 : index
    %5 = arith.index_cast %4 : i32 to index
    %c0_0 = arith.constant 0 : index
    %c0_1 = arith.constant 0 : index
    %6 = vector.load %arg2[%c0, %5, %c0_0, %c0_1] : memref<1x18x18x4xf32, #tpu.memory_space<vmem>>, vector<1x8x16x4xf32>
    %7 = vector.shape_cast %6 : vector<1x8x16x4xf32> to vector<8x16x4xf32>
    %8 = vector.shape_cast %7 : vector<8x16x4xf32> to vector<128x4xf32>
    %c0_2 = arith.constant 0 : index
    %c0_3 = arith.constant 0 : index
    %c0_4 = arith.constant 0 : index
    %9 = vector.load %arg3[%c0_2, %c0_3, %c0_4] : memref<9x4x128xf32, #tpu.memory_space<vmem>>, vector<1x4x128xf32>
    %10 = vector.shape_cast %9 : vector<1x4x128xf32> to vector<4x128xf32>
    %cst_5 = arith.constant dense<0.000000e+00> : vector<128x128xf32>
    %11 = tpu.matmul %8, %10, %cst_5 {dimension_numbers = #tpu.dot_dimension_numbers<[1], [0], [0], [1], [0, 0, 1, 1], [], []>} : vector<128x4xf32>, vector<4x128xf32>, vector<128x128xf32> -> vector<128x128xf32>
    %12 = arith.addf %3, %11 : vector<128x128xf32>
    %c0_i32_6 = arith.constant 0 : i32
    %13 = arith.addi %2, %c0_i32_6 : i32
    %c0_7 = arith.constant 0 : index
    %14 = arith.index_cast %13 : i32 to index
    %c1 = arith.constant 1 : index
    %c0_8 = arith.constant 0 : index
    %15 = vector.load %arg2[%c0_7, %14, %c1, %c0_8] : memref<1x18x18x4xf32, #tpu.memory_space<vmem>>, vector<1x8x16x4xf32>
    %16 = vector.shape_cast %15 : vector<1x8x16x4xf32> to vector<8x16x4xf32>
    %17 = vector.shape_cast %16 : vector<8x16x4xf32> to vector<128x4xf32>
    %c1_9 = arith.constant 1 : index
    %c0_10 = arith.constant 0 : index
    %c0_11 = arith.constant 0 : index
    %18 = vector.load %arg3[%c1_9, %c0_10, %c0_11] : memref<9x4x128xf32, #tpu.memory_space<vmem>>, vector<1x4x128xf32>
    %19 = vector.shape_cast %18 : vector<1x4x128xf32> to vector<4x128xf32>
    %cst_12 = arith.constant dense<0.000000e+00> : vector<128x128xf32>
    %20 = tpu.matmul %17, %19, %cst_12 {dimension_numbers = #tpu.dot_dimension_numbers<[1], [0], [0], [1], [0, 0, 1, 1], [], []>} : vector<128x4xf32>, vector<4x128xf32>, vector<128x128xf32> -> vector<128x128xf32>
    %21 = arith.addf %12, %20 : vector<128x128xf32>
    %c0_i32_13 = arith.constant 0 : i32
    %22 = arith.addi %2, %c0_i32_13 : i32
    %c0_14 = arith.constant 0 : index
    %23 = arith.index_cast %22 : i32 to index
    %c2 = arith.constant 2 : index
    %c0_15 = arith.constant 0 : index
    %24 = vector.load %arg2[%c0_14, %23, %c2, %c0_15] : memref<1x18x18x4xf32, #tpu.memory_space<vmem>>, vector<1x8x16x4xf32>
    %25 = vector.shape_cast %24 : vector<1x8x16x4xf32> to vector<8x16x4xf32>
    %26 = vector.shape_cast %25 : vector<8x16x4xf32> to vector<128x4xf32>
    %c2_16 = arith.constant 2 : index
    %c0_17 = arith.constant 0 : index
    %c0_18 = arith.constant 0 : index
    %27 = vector.load %arg3[%c2_16, %c0_17, %c0_18] : memref<9x4x128xf32, #tpu.memory_space<vmem>>, vector<1x4x128xf32>
    %28 = vector.shape_cast %27 : vector<1x4x128xf32> to vector<4x128xf32>
    %cst_19 = arith.constant dense<0.000000e+00> : vector<128x128xf32>
    %29 = tpu.matmul %26, %28, %cst_19 {dimension_numbers = #tpu.dot_dimension_numbers<[1], [0], [0], [1], [0, 0, 1, 1], [], []>} : vector<128x4xf32>, vector<4x128xf32>, vector<128x128xf32> -> vector<128x128xf32>
    %30 = arith.addf %21, %29 : vector<128x128xf32>
    %c1_i32_20 = arith.constant 1 : i32
    %31 = arith.addi %2, %c1_i32_20 : i32
    %c0_21 = arith.constant 0 : index
    %32 = arith.index_cast %31 : i32 to index
    %c0_22 = arith.constant 0 : index
    %c0_23 = arith.constant 0 : index
    %33 = vector.load %arg2[%c0_21, %32, %c0_22, %c0_23] : memref<1x18x18x4xf32, #tpu.memory_space<vmem>>, vector<1x8x16x4xf32>
    %34 = vector.shape_cast %33 : vector<1x8x16x4xf32> to vector<8x16x4xf32>
    %35 = vector.shape_cast %34 : vector<8x16x4xf32> to vector<128x4xf32>
    %c3 = arith.constant 3 : index
    %c0_24 = arith.constant 0 : index
    %c0_25 = arith.constant 0 : index
    %36 = vector.load %arg3[%c3, %c0_24, %c0_25] : memref<9x4x128xf32, #tpu.memory_space<vmem>>, vector<1x4x128xf32>
    %37 = vector.shape_cast %36 : vector<1x4x128xf32> to vector<4x128xf32>
    %cst_26 = arith.constant dense<0.000000e+00> : vector<128x128xf32>
    %38 = tpu.matmul %35, %37, %cst_26 {dimension_numbers = #tpu.dot_dimension_numbers<[1], [0], [0], [1], [0, 0, 1, 1], [], []>} : vector<128x4xf32>, vector<4x128xf32>, vector<128x128xf32> -> vector<128x128xf32>
    %39 = arith.addf %30, %38 : vector<128x128xf32>
    %c1_i32_27 = arith.constant 1 : i32
    %40 = arith.addi %2, %c1_i32_27 : i32
    %c0_28 = arith.constant 0 : index
    %41 = arith.index_cast %40 : i32 to index
    %c1_29 = arith.constant 1 : index
    %c0_30 = arith.constant 0 : index
    %42 = vector.load %arg2[%c0_28, %41, %c1_29, %c0_30] : memref<1x18x18x4xf32, #tpu.memory_space<vmem>>, vector<1x8x16x4xf32>
    %43 = vector.shape_cast %42 : vector<1x8x16x4xf32> to vector<8x16x4xf32>
    %44 = vector.shape_cast %43 : vector<8x16x4xf32> to vector<128x4xf32>
    %c4 = arith.constant 4 : index
    %c0_31 = arith.constant 0 : index
    %c0_32 = arith.constant 0 : index
    %45 = vector.load %arg3[%c4, %c0_31, %c0_32] : memref<9x4x128xf32, #tpu.memory_space<vmem>>, vector<1x4x128xf32>
    %46 = vector.shape_cast %45 : vector<1x4x128xf32> to vector<4x128xf32>
    %cst_33 = arith.constant dense<0.000000e+00> : vector<128x128xf32>
    %47 = tpu.matmul %44, %46, %cst_33 {dimension_numbers = #tpu.dot_dimension_numbers<[1], [0], [0], [1], [0, 0, 1, 1], [], []>} : vector<128x4xf32>, vector<4x128xf32>, vector<128x128xf32> -> vector<128x128xf32>
    %48 = arith.addf %39, %47 : vector<128x128xf32>
    %c1_i32_34 = arith.constant 1 : i32
    %49 = arith.addi %2, %c1_i32_34 : i32
    %c0_35 = arith.constant 0 : index
    %50 = arith.index_cast %49 : i32 to index
    %c2_36 = arith.constant 2 : index
    %c0_37 = arith.constant 0 : index
    %51 = vector.load %arg2[%c0_35, %50, %c2_36, %c0_37] : memref<1x18x18x4xf32, #tpu.memory_space<vmem>>, vector<1x8x16x4xf32>
    %52 = vector.shape_cast %51 : vector<1x8x16x4xf32> to vector<8x16x4xf32>
    %53 = vector.shape_cast %52 : vector<8x16x4xf32> to vector<128x4xf32>
    %c5 = arith.constant 5 : index
    %c0_38 = arith.constant 0 : index
    %c0_39 = arith.constant 0 : index
    %54 = vector.load %arg3[%c5, %c0_38, %c0_39] : memref<9x4x128xf32, #tpu.memory_space<vmem>>, vector<1x4x128xf32>
    %55 = vector.shape_cast %54 : vector<1x4x128xf32> to vector<4x128xf32>
    %cst_40 = arith.constant dense<0.000000e+00> : vector<128x128xf32>
    %56 = tpu.matmul %53, %55, %cst_40 {dimension_numbers = #tpu.dot_dimension_numbers<[1], [0], [0], [1], [0, 0, 1, 1], [], []>} : vector<128x4xf32>, vector<4x128xf32>, vector<128x128xf32> -> vector<128x128xf32>
    %57 = arith.addf %48, %56 : vector<128x128xf32>
    %c2_i32 = arith.constant 2 : i32
    %58 = arith.addi %2, %c2_i32 : i32
    %c0_41 = arith.constant 0 : index
    %59 = arith.index_cast %58 : i32 to index
    %c0_42 = arith.constant 0 : index
    %c0_43 = arith.constant 0 : index
    %60 = vector.load %arg2[%c0_41, %59, %c0_42, %c0_43] : memref<1x18x18x4xf32, #tpu.memory_space<vmem>>, vector<1x8x16x4xf32>
    %61 = vector.shape_cast %60 : vector<1x8x16x4xf32> to vector<8x16x4xf32>
    %62 = vector.shape_cast %61 : vector<8x16x4xf32> to vector<128x4xf32>
    %c6 = arith.constant 6 : index
    %c0_44 = arith.constant 0 : index
    %c0_45 = arith.constant 0 : index
    %63 = vector.load %arg3[%c6, %c0_44, %c0_45] : memref<9x4x128xf32, #tpu.memory_space<vmem>>, vector<1x4x128xf32>
    %64 = vector.shape_cast %63 : vector<1x4x128xf32> to vector<4x128xf32>
    %cst_46 = arith.constant dense<0.000000e+00> : vector<128x128xf32>
    %65 = tpu.matmul %62, %64, %cst_46 {dimension_numbers = #tpu.dot_dimension_numbers<[1], [0], [0], [1], [0, 0, 1, 1], [], []>} : vector<128x4xf32>, vector<4x128xf32>, vector<128x128xf32> -> vector<128x128xf32>
    %66 = arith.addf %57, %65 : vector<128x128xf32>
    %c2_i32_47 = arith.constant 2 : i32
    %67 = arith.addi %2, %c2_i32_47 : i32
    %c0_48 = arith.constant 0 : index
    %68 = arith.index_cast %67 : i32 to index
    %c1_49 = arith.constant 1 : index
    %c0_50 = arith.constant 0 : index
    %69 = vector.load %arg2[%c0_48, %68, %c1_49, %c0_50] : memref<1x18x18x4xf32, #tpu.memory_space<vmem>>, vector<1x8x16x4xf32>
    %70 = vector.shape_cast %69 : vector<1x8x16x4xf32> to vector<8x16x4xf32>
    %71 = vector.shape_cast %70 : vector<8x16x4xf32> to vector<128x4xf32>
    %c7 = arith.constant 7 : index
    %c0_51 = arith.constant 0 : index
    %c0_52 = arith.constant 0 : index
    %72 = vector.load %arg3[%c7, %c0_51, %c0_52] : memref<9x4x128xf32, #tpu.memory_space<vmem>>, vector<1x4x128xf32>
    %73 = vector.shape_cast %72 : vector<1x4x128xf32> to vector<4x128xf32>
    %cst_53 = arith.constant dense<0.000000e+00> : vector<128x128xf32>
    %74 = tpu.matmul %71, %73, %cst_53 {dimension_numbers = #tpu.dot_dimension_numbers<[1], [0], [0], [1], [0, 0, 1, 1], [], []>} : vector<128x4xf32>, vector<4x128xf32>, vector<128x128xf32> -> vector<128x128xf32>
    %75 = arith.addf %66, %74 : vector<128x128xf32>
    %c2_i32_54 = arith.constant 2 : i32
    %76 = arith.addi %2, %c2_i32_54 : i32
    %c0_55 = arith.constant 0 : index
    %77 = arith.index_cast %76 : i32 to index
    %c2_56 = arith.constant 2 : index
    %c0_57 = arith.constant 0 : index
    %78 = vector.load %arg2[%c0_55, %77, %c2_56, %c0_57] : memref<1x18x18x4xf32, #tpu.memory_space<vmem>>, vector<1x8x16x4xf32>
    %79 = vector.shape_cast %78 : vector<1x8x16x4xf32> to vector<8x16x4xf32>
    %80 = vector.shape_cast %79 : vector<8x16x4xf32> to vector<128x4xf32>
    %c8 = arith.constant 8 : index
    %c0_58 = arith.constant 0 : index
    %c0_59 = arith.constant 0 : index
    %81 = vector.load %arg3[%c8, %c0_58, %c0_59] : memref<9x4x128xf32, #tpu.memory_space<vmem>>, vector<1x4x128xf32>
    %82 = vector.shape_cast %81 : vector<1x4x128xf32> to vector<4x128xf32>
    %cst_60 = arith.constant dense<0.000000e+00> : vector<128x128xf32>
    %83 = tpu.matmul %80, %82, %cst_60 {dimension_numbers = #tpu.dot_dimension_numbers<[1], [0], [0], [1], [0, 0, 1, 1], [], []>} : vector<128x4xf32>, vector<4x128xf32>, vector<128x128xf32> -> vector<128x128xf32>
    %84 = arith.addf %75, %83 : vector<128x128xf32>
    %cst_61 = arith.constant dense<0.000000e+00> : vector<128xf32>
    %85 = vector.multi_reduction <add>, %84, %cst_61 [0] : vector<128x128xf32> to vector<128xf32>
    %86 = vector.shape_cast %85 : vector<128xf32> to vector<1x128xf32>
    %c0_62 = arith.constant 0 : index
    %c0_63 = arith.constant 0 : index
    %87 = vector.load %arg4[%c0_62, %c0_63] : memref<8x128xf32, #tpu.memory_space<vmem>>, vector<1x128xf32>
    tpu.vector_store %arg4[%c0_62, %c0_63], %86 {strides = array<i32>} : memref<8x128xf32, #tpu.memory_space<vmem>>, vector<1x128xf32>,
    %88 = arith.mulf %84, %84 : vector<128x128xf32>
    %cst_64 = arith.constant dense<0.000000e+00> : vector<128xf32>
    %89 = vector.multi_reduction <add>, %88, %cst_64 [0] : vector<128x128xf32> to vector<128xf32>
    %90 = vector.shape_cast %89 : vector<128xf32> to vector<1x128xf32>
    %c1_65 = arith.constant 1 : index
    %c0_66 = arith.constant 0 : index
    %91 = vector.load %arg4[%c1_65, %c0_66] : memref<8x128xf32, #tpu.memory_space<vmem>>, vector<1x128xf32>
    tpu.vector_store %arg4[%c1_65, %c0_66], %90 {strides = array<i32>} : memref<8x128xf32, #tpu.memory_space<vmem>>, vector<1x128xf32>,
    return
  }
  func.func @transform_0(%arg0: i32, %arg1: i32) -> (i32, i32, i32, i32) {
    %c0_i32 = arith.constant 0 : i32
    %c0_i32_0 = arith.constant 0 : i32
    %c0_i32_1 = arith.constant 0 : i32
    %c0_i32_2 = arith.constant 0 : i32
    return %arg0, %c0_i32, %c0_i32_0, %c0_i32_1 : i32, i32, i32, i32
  }
  func.func @transform_1(%arg0: i32, %arg1: i32) -> (i32, i32, i32) {
    %c0_i32 = arith.constant 0 : i32
    %c0_i32_0 = arith.constant 0 : i32
    %c0_i32_1 = arith.constant 0 : i32
    %c0_i32_2 = arith.constant 0 : i32
    return %c0_i32, %c0_i32_0, %c0_i32_1 : i32, i32, i32
  }
  func.func @transform_2(%arg0: i32, %arg1: i32) -> (i32, i32) {
    %c2_i32 = arith.constant 2 : i32
    %0 = arith.muli %arg0, %c2_i32 : i32
    %1 = arith.addi %0, %arg1 : i32
    %c0_i32 = arith.constant 0 : i32
    %c0_i32_0 = arith.constant 0 : i32
    return %1, %c0_i32 : i32, i32
  }
}

module attributes {stable_mosaic.version = 11 : i64} {
  func.func @_conv_bn_act_kernel(%arg0: i32, %arg1: i32, %arg2: memref<1x18x18x4xf32, #tpu.memory_space<vmem>>, %arg3: memref<9x4x128xf32, #tpu.memory_space<vmem>>, %arg4: memref<1x128xf32, #tpu.memory_space<vmem>>, %arg5: memref<1x128xf32, #tpu.memory_space<vmem>>, %arg6: memref<128x128xf32, #tpu.memory_space<vmem>>) attributes {dimension_semantics = [#tpu.dimension_semantics<parallel>, #tpu.dimension_semantics<parallel>], iteration_bounds = array<i64: 2, 2>, scalar_prefetch = 0 : i64, scratch_operands = 0 : i64, tpu.core_type = #tpu.core_type<tc>, window_params = [{transform_indices = @transform_0, window_bounds = array<i64: 1, 18, 18, 4>}, {pipeline_mode = #tpu.pipeline_mode<synchronous>, transform_indices = @transform_1, window_bounds = array<i64: 9, 4, 128>}, {pipeline_mode = #tpu.pipeline_mode<synchronous>, transform_indices = @transform_2, window_bounds = array<i64: 1, 128>}, {pipeline_mode = #tpu.pipeline_mode<synchronous>, transform_indices = @transform_3, window_bounds = array<i64: 1, 128>}, {transform_indices = @transform_4, window_bounds = array<i64: 128, 128>}]} {
    %c8_i32 = arith.constant 8 : i32
    %0 = arith.muli %arg1, %c8_i32 : i32
    %c1_i32 = arith.constant 1 : i32
    %1 = arith.muli %0, %c1_i32 : i32
    %2 = tpu.assume_multiple %1, 8 : i32
    %cst = arith.constant 0.000000e+00 : f32
    %3 = vector.broadcast %cst : f32 to vector<128x128xf32>
    %c0_i32 = arith.constant 0 : i32
    %4 = arith.addi %2, %c0_i32 : i32
    %c0 = arith.constant 0 : index
    %5 = arith.index_cast %4 : i32 to index
    %c0_0 = arith.constant 0 : index
    %c0_1 = arith.constant 0 : index
    %6 = vector.load %arg2[%c0, %5, %c0_0, %c0_1] : memref<1x18x18x4xf32, #tpu.memory_space<vmem>>, vector<1x8x16x4xf32>
    %7 = vector.shape_cast %6 : vector<1x8x16x4xf32> to vector<8x16x4xf32>
    %8 = vector.shape_cast %7 : vector<8x16x4xf32> to vector<128x4xf32>
    %c0_2 = arith.constant 0 : index
    %c0_3 = arith.constant 0 : index
    %c0_4 = arith.constant 0 : index
    %9 = vector.load %arg3[%c0_2, %c0_3, %c0_4] : memref<9x4x128xf32, #tpu.memory_space<vmem>>, vector<1x4x128xf32>
    %10 = vector.shape_cast %9 : vector<1x4x128xf32> to vector<4x128xf32>
    %cst_5 = arith.constant dense<0.000000e+00> : vector<128x128xf32>
    %11 = tpu.matmul %8, %10, %cst_5 {dimension_numbers = #tpu.dot_dimension_numbers<[1], [0], [0], [1], [0, 0, 1, 1], [], []>} : vector<128x4xf32>, vector<4x128xf32>, vector<128x128xf32> -> vector<128x128xf32>
    %12 = arith.addf %3, %11 : vector<128x128xf32>
    %c0_i32_6 = arith.constant 0 : i32
    %13 = arith.addi %2, %c0_i32_6 : i32
    %c0_7 = arith.constant 0 : index
    %14 = arith.index_cast %13 : i32 to index
    %c1 = arith.constant 1 : index
    %c0_8 = arith.constant 0 : index
    %15 = vector.load %arg2[%c0_7, %14, %c1, %c0_8] : memref<1x18x18x4xf32, #tpu.memory_space<vmem>>, vector<1x8x16x4xf32>
    %16 = vector.shape_cast %15 : vector<1x8x16x4xf32> to vector<8x16x4xf32>
    %17 = vector.shape_cast %16 : vector<8x16x4xf32> to vector<128x4xf32>
    %c1_9 = arith.constant 1 : index
    %c0_10 = arith.constant 0 : index
    %c0_11 = arith.constant 0 : index
    %18 = vector.load %arg3[%c1_9, %c0_10, %c0_11] : memref<9x4x128xf32, #tpu.memory_space<vmem>>, vector<1x4x128xf32>
    %19 = vector.shape_cast %18 : vector<1x4x128xf32> to vector<4x128xf32>
    %cst_12 = arith.constant dense<0.000000e+00> : vector<128x128xf32>
    %20 = tpu.matmul %17, %19, %cst_12 {dimension_numbers = #tpu.dot_dimension_numbers<[1], [0], [0], [1], [0, 0, 1, 1], [], []>} : vector<128x4xf32>, vector<4x128xf32>, vector<128x128xf32> -> vector<128x128xf32>
    %21 = arith.addf %12, %20 : vector<128x128xf32>
    %c0_i32_13 = arith.constant 0 : i32
    %22 = arith.addi %2, %c0_i32_13 : i32
    %c0_14 = arith.constant 0 : index
    %23 = arith.index_cast %22 : i32 to index
    %c2 = arith.constant 2 : index
    %c0_15 = arith.constant 0 : index
    %24 = vector.load %arg2[%c0_14, %23, %c2, %c0_15] : memref<1x18x18x4xf32, #tpu.memory_space<vmem>>, vector<1x8x16x4xf32>
    %25 = vector.shape_cast %24 : vector<1x8x16x4xf32> to vector<8x16x4xf32>
    %26 = vector.shape_cast %25 : vector<8x16x4xf32> to vector<128x4xf32>
    %c2_16 = arith.constant 2 : index
    %c0_17 = arith.constant 0 : index
    %c0_18 = arith.constant 0 : index
    %27 = vector.load %arg3[%c2_16, %c0_17, %c0_18] : memref<9x4x128xf32, #tpu.memory_space<vmem>>, vector<1x4x128xf32>
    %28 = vector.shape_cast %27 : vector<1x4x128xf32> to vector<4x128xf32>
    %cst_19 = arith.constant dense<0.000000e+00> : vector<128x128xf32>
    %29 = tpu.matmul %26, %28, %cst_19 {dimension_numbers = #tpu.dot_dimension_numbers<[1], [0], [0], [1], [0, 0, 1, 1], [], []>} : vector<128x4xf32>, vector<4x128xf32>, vector<128x128xf32> -> vector<128x128xf32>
    %30 = arith.addf %21, %29 : vector<128x128xf32>
    %c1_i32_20 = arith.constant 1 : i32
    %31 = arith.addi %2, %c1_i32_20 : i32
    %c0_21 = arith.constant 0 : index
    %32 = arith.index_cast %31 : i32 to index
    %c0_22 = arith.constant 0 : index
    %c0_23 = arith.constant 0 : index
    %33 = vector.load %arg2[%c0_21, %32, %c0_22, %c0_23] : memref<1x18x18x4xf32, #tpu.memory_space<vmem>>, vector<1x8x16x4xf32>
    %34 = vector.shape_cast %33 : vector<1x8x16x4xf32> to vector<8x16x4xf32>
    %35 = vector.shape_cast %34 : vector<8x16x4xf32> to vector<128x4xf32>
    %c3 = arith.constant 3 : index
    %c0_24 = arith.constant 0 : index
    %c0_25 = arith.constant 0 : index
    %36 = vector.load %arg3[%c3, %c0_24, %c0_25] : memref<9x4x128xf32, #tpu.memory_space<vmem>>, vector<1x4x128xf32>
    %37 = vector.shape_cast %36 : vector<1x4x128xf32> to vector<4x128xf32>
    %cst_26 = arith.constant dense<0.000000e+00> : vector<128x128xf32>
    %38 = tpu.matmul %35, %37, %cst_26 {dimension_numbers = #tpu.dot_dimension_numbers<[1], [0], [0], [1], [0, 0, 1, 1], [], []>} : vector<128x4xf32>, vector<4x128xf32>, vector<128x128xf32> -> vector<128x128xf32>
    %39 = arith.addf %30, %38 : vector<128x128xf32>
    %c1_i32_27 = arith.constant 1 : i32
    %40 = arith.addi %2, %c1_i32_27 : i32
    %c0_28 = arith.constant 0 : index
    %41 = arith.index_cast %40 : i32 to index
    %c1_29 = arith.constant 1 : index
    %c0_30 = arith.constant 0 : index
    %42 = vector.load %arg2[%c0_28, %41, %c1_29, %c0_30] : memref<1x18x18x4xf32, #tpu.memory_space<vmem>>, vector<1x8x16x4xf32>
    %43 = vector.shape_cast %42 : vector<1x8x16x4xf32> to vector<8x16x4xf32>
    %44 = vector.shape_cast %43 : vector<8x16x4xf32> to vector<128x4xf32>
    %c4 = arith.constant 4 : index
    %c0_31 = arith.constant 0 : index
    %c0_32 = arith.constant 0 : index
    %45 = vector.load %arg3[%c4, %c0_31, %c0_32] : memref<9x4x128xf32, #tpu.memory_space<vmem>>, vector<1x4x128xf32>
    %46 = vector.shape_cast %45 : vector<1x4x128xf32> to vector<4x128xf32>
    %cst_33 = arith.constant dense<0.000000e+00> : vector<128x128xf32>
    %47 = tpu.matmul %44, %46, %cst_33 {dimension_numbers = #tpu.dot_dimension_numbers<[1], [0], [0], [1], [0, 0, 1, 1], [], []>} : vector<128x4xf32>, vector<4x128xf32>, vector<128x128xf32> -> vector<128x128xf32>
    %48 = arith.addf %39, %47 : vector<128x128xf32>
    %c1_i32_34 = arith.constant 1 : i32
    %49 = arith.addi %2, %c1_i32_34 : i32
    %c0_35 = arith.constant 0 : index
    %50 = arith.index_cast %49 : i32 to index
    %c2_36 = arith.constant 2 : index
    %c0_37 = arith.constant 0 : index
    %51 = vector.load %arg2[%c0_35, %50, %c2_36, %c0_37] : memref<1x18x18x4xf32, #tpu.memory_space<vmem>>, vector<1x8x16x4xf32>
    %52 = vector.shape_cast %51 : vector<1x8x16x4xf32> to vector<8x16x4xf32>
    %53 = vector.shape_cast %52 : vector<8x16x4xf32> to vector<128x4xf32>
    %c5 = arith.constant 5 : index
    %c0_38 = arith.constant 0 : index
    %c0_39 = arith.constant 0 : index
    %54 = vector.load %arg3[%c5, %c0_38, %c0_39] : memref<9x4x128xf32, #tpu.memory_space<vmem>>, vector<1x4x128xf32>
    %55 = vector.shape_cast %54 : vector<1x4x128xf32> to vector<4x128xf32>
    %cst_40 = arith.constant dense<0.000000e+00> : vector<128x128xf32>
    %56 = tpu.matmul %53, %55, %cst_40 {dimension_numbers = #tpu.dot_dimension_numbers<[1], [0], [0], [1], [0, 0, 1, 1], [], []>} : vector<128x4xf32>, vector<4x128xf32>, vector<128x128xf32> -> vector<128x128xf32>
    %57 = arith.addf %48, %56 : vector<128x128xf32>
    %c2_i32 = arith.constant 2 : i32
    %58 = arith.addi %2, %c2_i32 : i32
    %c0_41 = arith.constant 0 : index
    %59 = arith.index_cast %58 : i32 to index
    %c0_42 = arith.constant 0 : index
    %c0_43 = arith.constant 0 : index
    %60 = vector.load %arg2[%c0_41, %59, %c0_42, %c0_43] : memref<1x18x18x4xf32, #tpu.memory_space<vmem>>, vector<1x8x16x4xf32>
    %61 = vector.shape_cast %60 : vector<1x8x16x4xf32> to vector<8x16x4xf32>
    %62 = vector.shape_cast %61 : vector<8x16x4xf32> to vector<128x4xf32>
    %c6 = arith.constant 6 : index
    %c0_44 = arith.constant 0 : index
    %c0_45 = arith.constant 0 : index
    %63 = vector.load %arg3[%c6, %c0_44, %c0_45] : memref<9x4x128xf32, #tpu.memory_space<vmem>>, vector<1x4x128xf32>
    %64 = vector.shape_cast %63 : vector<1x4x128xf32> to vector<4x128xf32>
    %cst_46 = arith.constant dense<0.000000e+00> : vector<128x128xf32>
    %65 = tpu.matmul %62, %64, %cst_46 {dimension_numbers = #tpu.dot_dimension_numbers<[1], [0], [0], [1], [0, 0, 1, 1], [], []>} : vector<128x4xf32>, vector<4x128xf32>, vector<128x128xf32> -> vector<128x128xf32>
    %66 = arith.addf %57, %65 : vector<128x128xf32>
    %c2_i32_47 = arith.constant 2 : i32
    %67 = arith.addi %2, %c2_i32_47 : i32
    %c0_48 = arith.constant 0 : index
    %68 = arith.index_cast %67 : i32 to index
    %c1_49 = arith.constant 1 : index
    %c0_50 = arith.constant 0 : index
    %69 = vector.load %arg2[%c0_48, %68, %c1_49, %c0_50] : memref<1x18x18x4xf32, #tpu.memory_space<vmem>>, vector<1x8x16x4xf32>
    %70 = vector.shape_cast %69 : vector<1x8x16x4xf32> to vector<8x16x4xf32>
    %71 = vector.shape_cast %70 : vector<8x16x4xf32> to vector<128x4xf32>
    %c7 = arith.constant 7 : index
    %c0_51 = arith.constant 0 : index
    %c0_52 = arith.constant 0 : index
    %72 = vector.load %arg3[%c7, %c0_51, %c0_52] : memref<9x4x128xf32, #tpu.memory_space<vmem>>, vector<1x4x128xf32>
    %73 = vector.shape_cast %72 : vector<1x4x128xf32> to vector<4x128xf32>
    %cst_53 = arith.constant dense<0.000000e+00> : vector<128x128xf32>
    %74 = tpu.matmul %71, %73, %cst_53 {dimension_numbers = #tpu.dot_dimension_numbers<[1], [0], [0], [1], [0, 0, 1, 1], [], []>} : vector<128x4xf32>, vector<4x128xf32>, vector<128x128xf32> -> vector<128x128xf32>
    %75 = arith.addf %66, %74 : vector<128x128xf32>
    %c2_i32_54 = arith.constant 2 : i32
    %76 = arith.addi %2, %c2_i32_54 : i32
    %c0_55 = arith.constant 0 : index
    %77 = arith.index_cast %76 : i32 to index
    %c2_56 = arith.constant 2 : index
    %c0_57 = arith.constant 0 : index
    %78 = vector.load %arg2[%c0_55, %77, %c2_56, %c0_57] : memref<1x18x18x4xf32, #tpu.memory_space<vmem>>, vector<1x8x16x4xf32>
    %79 = vector.shape_cast %78 : vector<1x8x16x4xf32> to vector<8x16x4xf32>
    %80 = vector.shape_cast %79 : vector<8x16x4xf32> to vector<128x4xf32>
    %c8 = arith.constant 8 : index
    %c0_58 = arith.constant 0 : index
    %c0_59 = arith.constant 0 : index
    %81 = vector.load %arg3[%c8, %c0_58, %c0_59] : memref<9x4x128xf32, #tpu.memory_space<vmem>>, vector<1x4x128xf32>
    %82 = vector.shape_cast %81 : vector<1x4x128xf32> to vector<4x128xf32>
    %cst_60 = arith.constant dense<0.000000e+00> : vector<128x128xf32>
    %83 = tpu.matmul %80, %82, %cst_60 {dimension_numbers = #tpu.dot_dimension_numbers<[1], [0], [0], [1], [0, 0, 1, 1], [], []>} : vector<128x4xf32>, vector<4x128xf32>, vector<128x128xf32> -> vector<128x128xf32>
    %84 = arith.addf %75, %83 : vector<128x128xf32>
    %c0_61 = arith.constant 0 : index
    %c0_62 = arith.constant 0 : index
    %85 = vector.load %arg4[%c0_61, %c0_62] : memref<1x128xf32, #tpu.memory_space<vmem>>, vector<1x128xf32>
    %86 = vector.broadcast %85 : vector<1x128xf32> to vector<128x128xf32>
    %87 = arith.mulf %84, %86 : vector<128x128xf32>
    %c0_63 = arith.constant 0 : index
    %c0_64 = arith.constant 0 : index
    %88 = vector.load %arg5[%c0_63, %c0_64] : memref<1x128xf32, #tpu.memory_space<vmem>>, vector<1x128xf32>
    %89 = vector.broadcast %88 : vector<1x128xf32> to vector<128x128xf32>
    %90 = arith.addf %87, %89 : vector<128x128xf32>
    %cst_65 = arith.constant 0.000000e+00 : f32
    %91 = vector.broadcast %cst_65 : f32 to vector<128x128xf32>
    %92 = arith.maximumf %90, %91 : vector<128x128xf32>
    %c0_66 = arith.constant 0 : index
    %c0_67 = arith.constant 0 : index
    %93 = vector.load %arg6[%c0_66, %c0_67] : memref<128x128xf32, #tpu.memory_space<vmem>>, vector<128x128xf32>
    tpu.vector_store %arg6[%c0_66, %c0_67], %92 {strides = array<i32>} : memref<128x128xf32, #tpu.memory_space<vmem>>, vector<128x128xf32>,
    return
  }
  func.func @transform_0(%arg0: i32, %arg1: i32) -> (i32, i32, i32, i32) {
    %c0_i32 = arith.constant 0 : i32
    %c0_i32_0 = arith.constant 0 : i32
    %c0_i32_1 = arith.constant 0 : i32
    %c0_i32_2 = arith.constant 0 : i32
    return %arg0, %c0_i32, %c0_i32_0, %c0_i32_1 : i32, i32, i32, i32
  }
  func.func @transform_1(%arg0: i32, %arg1: i32) -> (i32, i32, i32) {
    %c0_i32 = arith.constant 0 : i32
    %c0_i32_0 = arith.constant 0 : i32
    %c0_i32_1 = arith.constant 0 : i32
    %c0_i32_2 = arith.constant 0 : i32
    return %c0_i32, %c0_i32_0, %c0_i32_1 : i32, i32, i32
  }
  func.func @transform_2(%arg0: i32, %arg1: i32) -> (i32, i32) {
    %c0_i32 = arith.constant 0 : i32
    %c0_i32_0 = arith.constant 0 : i32
    %c0_i32_1 = arith.constant 0 : i32
    return %c0_i32, %c0_i32_0 : i32, i32
  }
  func.func @transform_3(%arg0: i32, %arg1: i32) -> (i32, i32) {
    %c0_i32 = arith.constant 0 : i32
    %c0_i32_0 = arith.constant 0 : i32
    %c0_i32_1 = arith.constant 0 : i32
    return %c0_i32, %c0_i32_0 : i32, i32
  }
  func.func @transform_4(%arg0: i32, %arg1: i32) -> (i32, i32) {
    %c2_i32 = arith.constant 2 : i32
    %0 = arith.muli %arg0, %c2_i32 : i32
    %1 = arith.addi %0, %arg1 : i32
    %c0_i32 = arith.constant 0 : i32
    %c0_i32_0 = arith.constant 0 : i32
    return %1, %c0_i32 : i32, i32
  }
}

</mosaic_0001>

<llo_original>
// kernel: conv_bn_layer.2
$region0: #{conv_bn_layer.2}
  #allocation0 [shape = 'u32[]', space=smem, size = 0x4, offset = 0x4, fixed_abs, tag = 'smem constant byte address 0x4 - core index']
  #allocation1 [shape = 'u32[144,128]{1,0:T(1,128)}', space=vmem, size = 0x12000, scoped, tag = 'internal scratch']
  %s0 = inlined_call_operand.vmem [shape: f32[2,18,18,4], index: 0, kind: input, shape index: {}]
  %s1 = inlined_call_operand.vmem [shape: f32[9,4,128], index: 1, kind: input, shape index: {}]
  %s2 = inlined_call_operand.vmem [shape: f32[32,128], index: 2, kind: output, shape index: {}]
  %s3 = sld [smem:[#allocation0]]
  $region41: #{conv_bn_layer.2} parent=0
    _
  %s5 = ssub.s32 1, %s3
  %s6 = scalar_select 0, %s5, %s3
  loop: start=0, step=1, limit=6
  $region2: #{conv_bn_layer.2} parent=0 // loop_pre_header
    _
  $region3: #{conv_bn_layer.2} parent=0 // loop_header
    %s8 = sphi 0, %s12
    %p9 = scmp.ge.s32.totalorder %s8, 6
    %s15 = sphi 0, %s27
    %s16 = sphi 0, %s23
    %s17 = sphi 0, %s15
    %s18 = sphi 0, %s16
    %s19 = sphi 0, %s17
    %s20 = sphi 0, %s18
    %s30 = sphi 0, %s32
    %s33 = sphi 0, %s30
    %s34 = sphi 0, %s33
    %s50 = sphi 0, %s34
    %s54 = sphi 0, %s54
    %s56 = sphi 0, %s54
    %s57 = sphi 0, %s56
    %s71 = sphi 0, %s57
    %s81 = sphi 0, %s83
    %s84 = sphi 0, %s81
    %s85 = sphi 0, %s84
    %s101 = sphi 0, %s85
  $region4: #{conv_bn_layer.2} parent=0 // loop_header_branch
    %11 = sbr.rel (%p9) target = $region8
  $region5: #{conv_bn_layer.2} parent=0 // loop_body
    %s13 = ssub.s32 %s8, 1
    %s14 = ssub.s32 %s8, 2
    %s21 = sadd.s32 1, %s16
    %p22 = scmp.ge.s32.totalorder %s21, 2
    %s23 = scalar_select %p22, 0, %s21
    %s24 = sadd.s32 1, %s15
    %s25 = scalar_select %p22, %s24, %s15
    %p26 = scmp.ge.s32.totalorder %s25, 2
    %s27 = scalar_select %p26, 0, %s25
    %s28 = ssub.s32 %s15, %s27
    %p29 = scmp.eq.s32.totalorder %s28, 0
    %s31 = sadd.s32 %s30, 1
    %s32 = scalar_select %p29, %s30, %s31
    %p35 = pneg %p29
    %p36 = scmp.eq.s32.totalorder %s8, 3
    %p37 = por %p35, %p36
    %p38 = scmp.ne.s32.totalorder %s30, %s33
    %p39 = scmp.eq.s32.totalorder %s8, 0
    %p40 = por %p38, %p39
    %p41 = scmp.ne.s32.totalorder %s30, %s33
    %p42 = scmp.eq.s32.totalorder %s13, 3
    %p43 = por %p41, %p42
    %p44 = scmp.ne.s32.totalorder %s33, %s34
    %p45 = scmp.eq.s32.totalorder %s13, 0
    %p46 = por %p44, %p45
    %p47 = scmp.ne.s32.totalorder %s33, %s34
    %p48 = scmp.eq.s32.totalorder %s14, 3
    %p49 = por %p47, %p48
    %p51 = scmp.ne.s32.totalorder %s34, %s50
    %p52 = scmp.eq.s32.totalorder %s14, 0
    %p53 = por %p51, %p52
    %s55 = sadd.s32 %s54, 1
    %p58 = scmp.eq.s32.totalorder %s8, 3
    %p59 = scmp.ne.s32.totalorder %s54, %s56
    %p60 = scmp.eq.s32.totalorder %s8, 0
    %p61 = por %p59, %p60
    %p62 = scmp.ne.s32.totalorder %s54, %s56
    %p63 = scmp.eq.s32.totalorder %s13, 3
    %p64 = por %p62, %p63
    %p65 = scmp.ne.s32.totalorder %s56, %s57
    %p66 = scmp.eq.s32.totalorder %s13, 0
    %p67 = por %p65, %p66
    %p68 = scmp.ne.s32.totalorder %s56, %s57
    %p69 = scmp.eq.s32.totalorder %s14, 3
    %p70 = por %p68, %p69
    %p72 = scmp.ne.s32.totalorder %s57, %s71
    %p73 = scmp.eq.s32.totalorder %s14, 0
    %p74 = por %p72, %p73
    %s75 = smul.u32 %s15, 2
    %s76 = sadd.s32 %s75, %s16
    %s77 = smul.u32 %s27, 2
    %s78 = sadd.s32 %s77, %s23
    %s79 = ssub.s32 %s76, %s78
    %p80 = scmp.eq.s32.totalorder %s79, 0
    %s82 = sadd.s32 %s81, 1
    %s83 = scalar_select %p80, %s81, %s82
    %p86 = pneg %p80
    %p87 = scmp.eq.s32.totalorder %s8, 3
    %p88 = por %p86, %p87
    %p89 = scmp.ne.s32.totalorder %s81, %s84
    %p90 = scmp.eq.s32.totalorder %s8, 0
    %p91 = por %p89, %p90
    %p92 = scmp.ne.s32.totalorder %s81, %s84
    %p93 = scmp.eq.s32.totalorder %s13, 3
    %p94 = por %p92, %p93
    %p95 = scmp.ne.s32.totalorder %s84, %s85
    %p96 = scmp.eq.s32.totalorder %s13, 0
    %p97 = por %p95, %p96
    %p98 = scmp.ne.s32.totalorder %s84, %s85
    %p99 = scmp.eq.s32.totalorder %s14, 3
    %p100 = por %p98, %p99
    %p102 = scmp.ne.s32.totalorder %s85, %s101
    %p103 = scmp.eq.s32.totalorder %s14, 0
    %p104 = por %p102, %p103
    %p105 = scmp.le.s32.totalorder 1, %s8
    %p106 = scmp.lt.s32.totalorder %s8, 5
    %p107 = pnand %p105, %p106
    %p108 = pneg %p107
    // Predicated region
    $region9: #{conv_bn_layer.2} parent=5 // pred_check
      _
    $region10: #{conv_bn_layer.2} parent=5 // pred_check_branch
      %110 = sbr.rel (%p107) target = $region12
    $region11: #{conv_bn_layer.2} parent=5 // pred_region
      %s111 = ssub.s32 %s8, 1
      // Predicated region
      $region13: #{conv_bn_layer.2} parent=11 // pred_check
        %p112 = pneg %p67
      $region14: #{conv_bn_layer.2} parent=11 // pred_check_branch
        %114 = sbr.rel (%p112) target = $region16
      $region15: #{conv_bn_layer.2} parent=11 // pred_region
        _
      $region16: #{conv_bn_layer.2} parent=11 // pred_fallthru
        _
    $region12: #{conv_bn_layer.2} parent=5 // pred_fallthru
      _
    %p115 = scmp.lt.s32.totalorder %s8, 4
    // Predicated region
    $region17: #{conv_bn_layer.2} parent=5 // pred_check
      %p116 = pneg %p115
    $region18: #{conv_bn_layer.2} parent=5 // pred_check_branch
      %118 = sbr.rel (%p116) target = $region20
    $region19: #{conv_bn_layer.2} parent=5 // pred_region
      // Predicated region
      $region21: #{conv_bn_layer.2} parent=19 // pred_check
        %p119 = pneg %p40
      $region22: #{conv_bn_layer.2} parent=19 // pred_check_branch
        %121 = sbr.rel (%p119) target = $region24
      $region23: #{conv_bn_layer.2} parent=19 // pred_region
        %p122 = scmp.lt.s32.totalorder %s15, 1
        %s123 = scalar_select %p122, %s15, 1
        %s124 = smul.addr %s123, 54
        %s125 = smul.addr %s124, 8
        %s126 = scalar_lea.vmem %s0, %s125
      $region24: #{conv_bn_layer.2} parent=19 // pred_fallthru
        _
    $region20: #{conv_bn_layer.2} parent=5 // pred_fallthru
      _
    %p127 = scmp.le.s32.totalorder 1, %s8
    %p128 = scmp.lt.s32.totalorder %s8, 5
    %p129 = pnand %p127, %p128
    %p130 = pneg %p129
    // Predicated region
    $region25: #{conv_bn_layer.2} parent=5 // pred_check
      _
    $region26: #{conv_bn_layer.2} parent=5 // pred_check_branch
      %132 = sbr.rel (%p129) target = $region28
    $region27: #{conv_bn_layer.2} parent=5 // pred_region
      %s133 = ssub.s32 %s8, 1
      %p134 = scmp.lt.s32.totalorder %s17, 1
      %s135 = scalar_select %p134, %s17, 1
      %s136 = smul.addr %s135, 54
      %s137 = smul.addr %s136, 8
      %s138 = scalar_lea.vmem %s0, %s137
      %p139 = pneg %p46
      %p140 = pneg %p43
      %p141 = pneg %p67
      %p142 = pneg %p64
      %p143 = pneg %p97
      %p144 = pneg %p94
      %s145 = smul.u32 %s17, 2
      %s146 = sadd.s32 %s145, %s18
      %p147 = scmp.lt.s32.totalorder %s146, 3
      %s148 = scalar_select %p147, %s146, 3
      %s149 = smul.addr %s148, 8
      %s150 = scalar_lea.vmem %s2, %s149
      %p151 = scmp.lt.s32.totalorder %s17, 1
      %s152 = scalar_select %p151, %s17, 1
      %s153 = smul.addr %s152, 54
      %s154 = smul.addr %s153, 8
      %s155 = scalar_lea.vmem %s0, %s154
      %s156 = smul.u32 %s17, 2
      %s157 = sadd.s32 %s156, %s18
      %p158 = scmp.lt.s32.totalorder %s157, 3
      %s159 = scalar_select %p158, %s157, 3
      %s160 = smul.addr %s159, 8
      %s161 = scalar_lea.vmem %s2, %s160
      %s162 = smul.u32 %s17, 2
      %s163 = sadd.s32 %s162, %s18
      %s164 = smul.u32 %s18, 8
      %s165 = smul.u32 %s164, 24
      %s166 = scalar_lea.vmem %s155, %s165
      %v167 = vld [vmem:[%s166] sm:$0xff]
      %v168 = vld [vmem:[%s166 + $0x8] sm:$0xff]
      %v169 = vld [vmem:[%s166 + $0x18] sm:$0xff]
      %v170 = vld [vmem:[%s166 + $0x20] sm:$0xff]
      %v171 = vld [vmem:[%s166 + $0x30] sm:$0xff]
      %v172 = vld [vmem:[%s166 + $0x38] sm:$0xff]
      %v173 = vld [vmem:[%s166 + $0x48] sm:$0xff]
      %v174 = vld [vmem:[%s166 + $0x50] sm:$0xff]
      %v175 = vld [vmem:[%s166 + $0x60] sm:$0xff]
      %v176 = vld [vmem:[%s166 + $0x68] sm:$0xff]
      %v177 = vld [vmem:[%s166 + $0x78] sm:$0xff]
      %v178 = vld [vmem:[%s166 + $0x80] sm:$0xff]
      %v179 = vld [vmem:[%s166 + $0x90] sm:$0xff]
      %v180 = vld [vmem:[%s166 + $0x98] sm:$0xff]
      %v181 = vld [vmem:[%s166 + $0xa8] sm:$0xff]
      %v182 = vld [vmem:[%s166 + $0xb0] sm:$0xff]
      %v183 = vld [vmem:[%s1] sm:$0xf]
      %v184 = vld [vmem:[%s166 + $0x1] sm:$0xff]
      %v185 = vld [vmem:[%s166 + $0x9] sm:$0xff]
      %v186 = vld [vmem:[%s166 + $0x19] sm:$0xff]
      %v187 = vld [vmem:[%s166 + $0x21] sm:$0xff]
      %v188 = vld [vmem:[%s166 + $0x31] sm:$0xff]
      %v189 = vld [vmem:[%s166 + $0x39] sm:$0xff]
      %v190 = vld [vmem:[%s166 + $0x49] sm:$0xff]
      %v191 = vld [vmem:[%s166 + $0x51] sm:$0xff]
      %v192 = vld [vmem:[%s166 + $0x61] sm:$0xff]
      %v193 = vld [vmem:[%s166 + $0x69] sm:$0xff]
      %v194 = vld [vmem:[%s166 + $0x79] sm:$0xff]
      %v195 = vld [vmem:[%s166 + $0x81] sm:$0xff]
      %v196 = vld [vmem:[%s166 + $0x91] sm:$0xff]
      %v197 = vld [vmem:[%s166 + $0x99] sm:$0xff]
      %v198 = vld [vmem:[%s166 + $0xa9] sm:$0xff]
      %v199 = vld [vmem:[%s166 + $0xb1] sm:$0xff]
      %s200 = scalar_lea.vmem %s1, 4
      %v201 = vld [vmem:[%s200] sm:$0xf]
      %vm202 = vcmask 31744
      %v204 = vsel %vm202, %v184, 0
      %v207 = vsel %vm202, %v185, 0
      %v210 = vsel %vm202, %v186, 0
      %v213 = vsel %vm202, %v187, 0
      %v216 = vsel %vm202, %v188, 0
      %v219 = vsel %vm202, %v189, 0
      %v222 = vsel %vm202, %v190, 0
      %v225 = vsel %vm202, %v191, 0
      %v228 = vsel %vm202, %v192, 0
      %v231 = vsel %vm202, %v193, 0
      %v234 = vsel %vm202, %v194, 0
      %v237 = vsel %vm202, %v195, 0
      %v240 = vsel %vm202, %v196, 0
      %v243 = vsel %vm202, %v197, 0
      %v246 = vsel %vm202, %v198, 0
      %v249 = vsel %vm202, %v199, 0
      %vm251 = vcmask 1043456
      %v253 = vsel %vm251, %v201, 0
      %255 = vmatprep.subr.mxu0 0.0
      %256 = vmatpush1.msra.mxu0 %v253
      %257 = vmatprep.subr.mxu0 0.0
      %258 = vmatpush1.msra.mxu0 0.0
      %259 = vmatprep.subr.mxu0 0.0
      %260 = vmatpush1.msra.mxu0 0.0
      %261 = vmatprep.subr.mxu0 0.0
      %262 = vmatpush1.msra.mxu0 0.0
      %263 = vmatprep.subr.mxu0 0.0
      %264 = vmatpush1.msra.mxu0 0.0
      %265 = vmatprep.subr.mxu0 0.0
      %266 = vmatpush1.msra.mxu0 0.0
      %267 = vmatprep.subr.mxu0 0.0
      %268 = vmatpush1.msra.mxu0 0.0
      %269 = vmatprep.subr.mxu0 0.0
      %270 = vmatpush1.msra.mxu0 0.0
      %271 = vmatprep.subr.mxu0 0.0
      %272 = vmatpush1.msra.mxu0 0.0
      %273 = vmatprep.subr.mxu0 0.0
      %274 = vmatpush1.msra.mxu0 0.0
      %275 = vmatprep.subr.mxu0 0.0
      %276 = vmatpush1.msra.mxu0 0.0
      %277 = vmatprep.subr.mxu0 0.0
      %278 = vmatpush1.msra.mxu0 0.0
      %279 = vmatprep.subr.mxu0 0.0
      %280 = vmatpush1.msra.mxu0 0.0
      %281 = vmatprep.subr.mxu0 0.0
      %282 = vmatpush1.msra.mxu0 0.0
      %283 = vmatprep.subr.mxu0 0.0
      %284 = vmatpush1.msra.mxu0 0.0
      %285 = vmatprep.subr.mxu0 0.0
      %286 = vmatpush1.msra.mxu0 0.0
      %287 = vmatprep.subr.mxu0 0.0
      %288 = vmatpush1.msra.mxu0 0.0
      %289 = vmatprep.subr.mxu0 0.0
      %290 = vmatpush1.msra.mxu0 0.0
      %291 = vmatprep.subr.mxu0 0.0
      %292 = vmatpush1.msra.mxu0 0.0
      %293 = vmatprep.subr.mxu0 0.0
      %294 = vmatpush1.msra.mxu0 0.0
      %295 = vmatprep.subr.mxu0 0.0
      %296 = vmatpush1.msra.mxu0 0.0
      %297 = vmatprep.subr.mxu0 0.0
      %298 = vmatpush1.msra.mxu0 0.0
      %299 = vmatprep.subr.mxu0 0.0
      %300 = vmatpush1.msra.mxu0 0.0
      %301 = vmatprep.subr.mxu0 0.0
      %302 = vmatpush1.msra.mxu0 0.0
      %303 = vmatprep.subr.mxu0 0.0
      %304 = vmatpush1.msra.mxu0 0.0
      %305 = vmatprep.subr.mxu0 0.0
      %306 = vmatpush1.msra.mxu0 0.0
      %307 = vmatprep.subr.mxu0 0.0
      %308 = vmatpush1.msra.mxu0 0.0
      %309 = vmatprep.subr.mxu0 0.0
      %310 = vmatpush1.msra.mxu0 0.0
      %311 = vmatprep.subr.mxu0 0.0
      %312 = vmatpush1.msra.mxu0 0.0
      %313 = vmatprep.subr.mxu0 0.0
      %314 = vmatpush1.msra.mxu0 0.0
      %315 = vmatprep.subr.mxu0 0.0
      %316 = vmatpush1.msra.mxu0 0.0
      %317 = vmatprep.subr.mxu0 0.0
      %318 = vmatpush1.msra.mxu0 0.0
      %319 = vmatprep.mubr.f32.mxu0 0.0
      %320 = vmatmul.mubr.f32.gmra.mrb[0].mxu0 %v204
      %v321 = vpop.f32.mrb[0].mxu0
      %v322 = vadd.f32 0.0, %v321
      %v323 = vpop.f32.mrb[0].mxu0
      %324 = vmatprep.mubr.f32.mxu0 0.0
      %325 = vmatmul.mubr.f32.gmra.mrb[0].mxu0 %v207
      %v326 = vpop.f32.mrb[0].mxu0
      %v327 = vadd.f32 0.0, %v326
      %v328 = vpop.f32.mrb[0].mxu0
      %329 = vmatprep.mubr.f32.mxu0 0.0
      %330 = vmatmul.mubr.f32.gmra.mrb[0].mxu0 %v210
      %v331 = vpop.f32.mrb[0].mxu0
      %v332 = vadd.f32 0.0, %v331
      %v333 = vpop.f32.mrb[0].mxu0
      %334 = vmatprep.mubr.f32.mxu0 0.0
      %335 = vmatmul.mubr.f32.gmra.mrb[0].mxu0 %v213
      %v336 = vpop.f32.mrb[0].mxu0
      %v337 = vadd.f32 0.0, %v336
      %v338 = vpop.f32.mrb[0].mxu0
      %339 = vmatprep.mubr.f32.mxu0 0.0
      %340 = vmatmul.mubr.f32.gmra.mrb[0].mxu0 %v216
      %v341 = vpop.f32.mrb[0].mxu0
      %v342 = vadd.f32 0.0, %v341
      %v343 = vpop.f32.mrb[0].mxu0
      %344 = vmatprep.mubr.f32.mxu0 0.0
      %345 = vmatmul.mubr.f32.gmra.mrb[0].mxu0 %v219
      %v346 = vpop.f32.mrb[0].mxu0
      %v347 = vadd.f32 0.0, %v346
      %v348 = vpop.f32.mrb[0].mxu0
      %349 = vmatprep.mubr.f32.mxu0 0.0
      %350 = vmatmul.mubr.f32.gmra.mrb[0].mxu0 %v222
      %v351 = vpop.f32.mrb[0].mxu0
      %v352 = vadd.f32 0.0, %v351
      %v353 = vpop.f32.mrb[0].mxu0
      %354 = vmatprep.mubr.f32.mxu0 0.0
      %355 = vmatmul.mubr.f32.gmra.mrb[0].mxu0 %v225
      %v356 = vpop.f32.mrb[0].mxu0
      %v357 = vadd.f32 0.0, %v356
      %v358 = vpop.f32.mrb[0].mxu0
      %359 = vmatprep.mubr.f32.mxu0 0.0
      %360 = vmatmul.mubr.f32.gmra.mrb[0].mxu0 %v228
      %v361 = vpop.f32.mrb[0].mxu0
      %v362 = vadd.f32 0.0, %v361
      %v363 = vpop.f32.mrb[0].mxu0
      %364 = vmatprep.mubr.f32.mxu0 0.0
      %365 = vmatmul.mubr.f32.gmra.mrb[0].mxu0 %v231
      %v366 = vpop.f32.mrb[0].mxu0
      %v367 = vadd.f32 0.0, %v366
      %v368 = vpop.f32.mrb[0].mxu0
      %369 = vmatprep.mubr.f32.mxu0 0.0
      %370 = vmatmul.mubr.f32.gmra.mrb[0].mxu0 %v234
      %v371 = vpop.f32.mrb[0].mxu0
      %v372 = vadd.f32 0.0, %v371
      %v373 = vpop.f32.mrb[0].mxu0
      %374 = vmatprep.mubr.f32.mxu0 0.0
      %375 = vmatmul.mubr.f32.gmra.mrb[0].mxu0 %v237
      %v376 = vpop.f32.mrb[0].mxu0
      %v377 = vadd.f32 0.0, %v376
      %v378 = vpop.f32.mrb[0].mxu0
      %379 = vmatprep.mubr.f32.mxu0 0.0
      %380 = vmatmul.mubr.f32.gmra.mrb[0].mxu0 %v240
      %v381 = vpop.f32.mrb[0].mxu0
      %v382 = vadd.f32 0.0, %v381
      %v383 = vpop.f32.mrb[0].mxu0
      %384 = vmatprep.mubr.f32.mxu0 0.0
      %385 = vmatmul.mubr.f32.gmra.mrb[0].mxu0 %v243
      %v386 = vpop.f32.mrb[0].mxu0
      %v387 = vadd.f32 0.0, %v386
      %v388 = vpop.f32.mrb[0].mxu0
      %389 = vmatprep.mubr.f32.mxu0 0.0
      %390 = vmatmul.mubr.f32.gmra.mrb[0].mxu0 %v246
      %v391 = vpop.f32.mrb[0].mxu0
      %v392 = vadd.f32 0.0, %v391
      %v393 = vpop.f32.mrb[0].mxu0
      %394 = vmatprep.mubr.f32.mxu0 0.0
      %395 = vmatmul.mubr.f32.gmra.mrb[0].mxu0 %v249
      %v396 = vpop.f32.mrb[0].mxu0
      %v397 = vadd.f32 0.0, %v396
      %v398 = vpop.f32.mrb[0].mxu0
      %399 = vdwg.mxu0
      %v401 = vsel %vm202, %v167, 0
      %v404 = vsel %vm202, %v168, 0
      %v407 = vsel %vm202, %v169, 0
      %v410 = vsel %vm202, %v170, 0
      %v413 = vsel %vm202, %v171, 0
      %v416 = vsel %vm202, %v172, 0
      %v419 = vsel %vm202, %v173, 0
      %v422 = vsel %vm202, %v174, 0
      %v425 = vsel %vm202, %v175, 0
      %v428 = vsel %vm202, %v176, 0
      %v431 = vsel %vm202, %v177, 0
      %v434 = vsel %vm202, %v178, 0
      %v437 = vsel %vm202, %v179, 0
      %v440 = vsel %vm202, %v180, 0
      %v443 = vsel %vm202, %v181, 0
      %v446 = vsel %vm202, %v182, 0
      %v449 = vsel %vm251, %v183, 0
      %451 = vmatprep.subr.mxu0 0.0
      %452 = vmatpush1.msra.mxu0 %v449
      %453 = vmatprep.subr.mxu0 0.0
      %454 = vmatpush1.msra.mxu0 0.0
      %455 = vmatprep.subr.mxu0 0.0
      %456 = vmatpush1.msra.mxu0 0.0
      %457 = vmatprep.subr.mxu0 0.0
      %458 = vmatpush1.msra.mxu0 0.0
      %459 = vmatprep.subr.mxu0 0.0
      %460 = vmatpush1.msra.mxu0 0.0
      %461 = vmatprep.subr.mxu0 0.0
      %462 = vmatpush1.msra.mxu0 0.0
      %463 = vmatprep.subr.mxu0 0.0
      %464 = vmatpush1.msra.mxu0 0.0
      %465 = vmatprep.subr.mxu0 0.0
      %466 = vmatpush1.msra.mxu0 0.0
      %467 = vmatprep.subr.mxu0 0.0
      %468 = vmatpush1.msra.mxu0 0.0
      %469 = vmatprep.subr.mxu0 0.0
      %470 = vmatpush1.msra.mxu0 0.0
      %471 = vmatprep.subr.mxu0 0.0
      %472 = vmatpush1.msra.mxu0 0.0
      %473 = vmatprep.subr.mxu0 0.0
      %474 = vmatpush1.msra.mxu0 0.0
      %475 = vmatprep.subr.mxu0 0.0
      %476 = vmatpush1.msra.mxu0 0.0
      %477 = vmatprep.subr.mxu0 0.0
      %478 = vmatpush1.msra.mxu0 0.0
      %479 = vmatprep.subr.mxu0 0.0
      %480 = vmatpush1.msra.mxu0 0.0
      %481 = vmatprep.subr.mxu0 0.0
      %482 = vmatpush1.msra.mxu0 0.0
      %483 = vmatprep.subr.mxu0 0.0
      %484 = vmatpush1.msra.mxu0 0.0
      %485 = vmatprep.subr.mxu0 0.0
      %486 = vmatpush1.msra.mxu0 0.0
      %487 = vmatprep.subr.mxu0 0.0
      %488 = vmatpush1.msra.mxu0 0.0
      %489 = vmatprep.subr.mxu0 0.0
      %490 = vmatpush1.msra.mxu0 0.0
      %491 = vmatprep.subr.mxu0 0.0
      %492 = vmatpush1.msra.mxu0 0.0
      %493 = vmatprep.subr.mxu0 0.0
      %494 = vmatpush1.msra.mxu0 0.0
      %495 = vmatprep.subr.mxu0 0.0
      %496 = vmatpush1.msra.mxu0 0.0
      %497 = vmatprep.subr.mxu0 0.0
      %498 = vmatpush1.msra.mxu0 0.0
      %499 = vmatprep.subr.mxu0 0.0
      %500 = vmatpush1.msra.mxu0 0.0
      %501 = vmatprep.subr.mxu0 0.0
      %502 = vmatpush1.msra.mxu0 0.0
      %503 = vmatprep.subr.mxu0 0.0
      %504 = vmatpush1.msra.mxu0 0.0
      %505 = vmatprep.subr.mxu0 0.0
      %506 = vmatpush1.msra.mxu0 0.0
      %507 = vmatprep.subr.mxu0 0.0
      %508 = vmatpush1.msra.mxu0 0.0
      %509 = vmatprep.subr.mxu0 0.0
      %510 = vmatpush1.msra.mxu0 0.0
      %511 = vmatprep.subr.mxu0 0.0
      %512 = vmatpush1.msra.mxu0 0.0
      %513 = vmatprep.subr.mxu0 0.0
      %514 = vmatpush1.msra.mxu0 0.0
      %515 = vmatprep.mubr.f32.mxu0 0.0
      %516 = vmatmul.mubr.f32.gmra.mrb[0].mxu0 %v401
      %v517 = vpop.f32.mrb[0].mxu0
      %v518 = vadd.f32 %v322, %v517
      %v519 = vpop.f32.mrb[0].mxu0
      %520 = vmatprep.mubr.f32.mxu0 0.0
      %521 = vmatmul.mubr.f32.gmra.mrb[0].mxu0 %v404
      %v522 = vpop.f32.mrb[0].mxu0
      %v523 = vadd.f32 %v327, %v522
      %v524 = vpop.f32.mrb[0].mxu0
      %525 = vmatprep.mubr.f32.mxu0 0.0
      %526 = vmatmul.mubr.f32.gmra.mrb[0].mxu0 %v407
      %v527 = vpop.f32.mrb[0].mxu0
      %v528 = vadd.f32 %v332, %v527
      %v529 = vpop.f32.mrb[0].mxu0
      %530 = vmatprep.mubr.f32.mxu0 0.0
      %531 = vmatmul.mubr.f32.gmra.mrb[0].mxu0 %v410
      %v532 = vpop.f32.mrb[0].mxu0
      %v533 = vadd.f32 %v337, %v532
      %v534 = vpop.f32.mrb[0].mxu0
      %535 = vmatprep.mubr.f32.mxu0 0.0
      %536 = vmatmul.mubr.f32.gmra.mrb[0].mxu0 %v413
      %v537 = vpop.f32.mrb[0].mxu0
      %v538 = vadd.f32 %v342, %v537
      %v539 = vpop.f32.mrb[0].mxu0
      %540 = vmatprep.mubr.f32.mxu0 0.0
      %541 = vmatmul.mubr.f32.gmra.mrb[0].mxu0 %v416
      %v542 = vpop.f32.mrb[0].mxu0
      %v543 = vadd.f32 %v347, %v542
      %v544 = vpop.f32.mrb[0].mxu0
      %545 = vmatprep.mubr.f32.mxu0 0.0
      %546 = vmatmul.mubr.f32.gmra.mrb[0].mxu0 %v419
      %v547 = vpop.f32.mrb[0].mxu0
      %v548 = vadd.f32 %v352, %v547
      %v549 = vpop.f32.mrb[0].mxu0
      %550 = vmatprep.mubr.f32.mxu0 0.0
      %551 = vmatmul.mubr.f32.gmra.mrb[0].mxu0 %v422
      %v552 = vpop.f32.mrb[0].mxu0
      %v553 = vadd.f32 %v357, %v552
      %v554 = vpop.f32.mrb[0].mxu0
      %555 = vmatprep.mubr.f32.mxu0 0.0
      %556 = vmatmul.mubr.f32.gmra.mrb[0].mxu0 %v425
      %v557 = vpop.f32.mrb[0].mxu0
      %v558 = vadd.f32 %v362, %v557
      %v559 = vpop.f32.mrb[0].mxu0
      %560 = vmatprep.mubr.f32.mxu0 0.0
      %561 = vmatmul.mubr.f32.gmra.mrb[0].mxu0 %v428
      %v562 = vpop.f32.mrb[0].mxu0
      %v563 = vadd.f32 %v367, %v562
      %v564 = vpop.f32.mrb[0].mxu0
      %565 = vmatprep.mubr.f32.mxu0 0.0
      %566 = vmatmul.mubr.f32.gmra.mrb[0].mxu0 %v431
      %v567 = vpop.f32.mrb[0].mxu0
      %v568 = vadd.f32 %v372, %v567
      %v569 = vpop.f32.mrb[0].mxu0
      %570 = vmatprep.mubr.f32.mxu0 0.0
      %571 = vmatmul.mubr.f32.gmra.mrb[0].mxu0 %v434
      %v572 = vpop.f32.mrb[0].mxu0
      %v573 = vadd.f32 %v377, %v572
      %v574 = vpop.f32.mrb[0].mxu0
      %575 = vmatprep.mubr.f32.mxu0 0.0
      %576 = vmatmul.mubr.f32.gmra.mrb[0].mxu0 %v437
      %v577 = vpop.f32.mrb[0].mxu0
      %v578 = vadd.f32 %v382, %v577
      %v579 = vpop.f32.mrb[0].mxu0
      %580 = vmatprep.mubr.f32.mxu0 0.0
      %581 = vmatmul.mubr.f32.gmra.mrb[0].mxu0 %v440
      %v582 = vpop.f32.mrb[0].mxu0
      %v583 = vadd.f32 %v387, %v582
      %v584 = vpop.f32.mrb[0].mxu0
      %585 = vmatprep.mubr.f32.mxu0 0.0
      %586 = vmatmul.mubr.f32.gmra.mrb[0].mxu0 %v443
      %v587 = vpop.f32.mrb[0].mxu0
      %v588 = vadd.f32 %v392, %v587
      %v589 = vpop.f32.mrb[0].mxu0
      %590 = vmatprep.mubr.f32.mxu0 0.0
      %591 = vmatmul.mubr.f32.gmra.mrb[0].mxu0 %v446
      %v592 = vpop.f32.mrb[0].mxu0
      %v593 = vadd.f32 %v397, %v592
      %v594 = vpop.f32.mrb[0].mxu0
      %595 = vdwg.mxu0
      %v596 = vld [vmem:[%s166 + $0x2] sm:$0xff]
      %v597 = vld [vmem:[%s166 + $0xa] sm:$0xff]
      %v598 = vld [vmem:[%s166 + $0x1a] sm:$0xff]
      %v599 = vld [vmem:[%s166 + $0x22] sm:$0xff]
      %v600 = vld [vmem:[%s166 + $0x32] sm:$0xff]
      %v601 = vld [vmem:[%s166 + $0x3a] sm:$0xff]
      %v602 = vld [vmem:[%s166 + $0x4a] sm:$0xff]
      %v603 = vld [vmem:[%s166 + $0x52] sm:$0xff]
      %v604 = vld [vmem:[%s166 + $0x62] sm:$0xff]
      %v605 = vld [vmem:[%s166 + $0x6a] sm:$0xff]
      %v606 = vld [vmem:[%s166 + $0x7a] sm:$0xff]
      %v607 = vld [vmem:[%s166 + $0x82] sm:$0xff]
      %v608 = vld [vmem:[%s166 + $0x92] sm:$0xff]
      %v609 = vld [vmem:[%s166 + $0x9a] sm:$0xff]
      %v610 = vld [vmem:[%s166 + $0xaa] sm:$0xff]
      %v611 = vld [vmem:[%s166 + $0xb2] sm:$0xff]
      %s612 = scalar_lea.vmem %s1, 8
      %v613 = vld [vmem:[%s612] sm:$0xf]
      %v615 = vsel %vm202, %v596, 0
      %v618 = vsel %vm202, %v597, 0
      %v621 = vsel %vm202, %v598, 0
      %v624 = vsel %vm202, %v599, 0
      %v627 = vsel %vm202, %v600, 0
      %v630 = vsel %vm202, %v601, 0
      %v633 = vsel %vm202, %v602, 0
      %v636 = vsel %vm202, %v603, 0
      %v639 = vsel %vm202, %v604, 0
      %v642 = vsel %vm202, %v605, 0
      %v645 = vsel %vm202, %v606, 0
      %v648 = vsel %vm202, %v607, 0
      %v651 = vsel %vm202, %v608, 0
      %v654 = vsel %vm202, %v609, 0
      %v657 = vsel %vm202, %v610, 0
      %v660 = vsel %vm202, %v611, 0
      %v663 = vsel %vm251, %v613, 0
      %665 = vmatprep.subr.mxu0 0.0
      %666 = vmatpush1.msra.mxu0 %v663
      %667 = vmatprep.subr.mxu0 0.0
      %668 = vmatpush1.msra.mxu0 0.0
      %669 = vmatprep.subr.mxu0 0.0
      %670 = vmatpush1.msra.mxu0 0.0
      %671 = vmatprep.subr.mxu0 0.0
      %672 = vmatpush1.msra.mxu0 0.0
      %673 = vmatprep.subr.mxu0 0.0
      %674 = vmatpush1.msra.mxu0 0.0
      %675 = vmatprep.subr.mxu0 0.0
      %676 = vmatpush1.msra.mxu0 0.0
      %677 = vmatprep.subr.mxu0 0.0
      %678 = vmatpush1.msra.mxu0 0.0
      %679 = vmatprep.subr.mxu0 0.0
      %680 = vmatpush1.msra.mxu0 0.0
      %681 = vmatprep.subr.mxu0 0.0
      %682 = vmatpush1.msra.mxu0 0.0
      %683 = vmatprep.subr.mxu0 0.0
      %684 = vmatpush1.msra.mxu0 0.0
      %685 = vmatprep.subr.mxu0 0.0
      %686 = vmatpush1.msra.mxu0 0.0
      %687 = vmatprep.subr.mxu0 0.0
      %688 = vmatpush1.msra.mxu0 0.0
      %689 = vmatprep.subr.mxu0 0.0
      %690 = vmatpush1.msra.mxu0 0.0
      %691 = vmatprep.subr.mxu0 0.0
      %692 = vmatpush1.msra.mxu0 0.0
      %693 = vmatprep.subr.mxu0 0.0
      %694 = vmatpush1.msra.mxu0 0.0
      %695 = vmatprep.subr.mxu0 0.0
      %696 = vmatpush1.msra.mxu0 0.0
      %697 = vmatprep.subr.mxu0 0.0
      %698 = vmatpush1.msra.mxu0 0.0
      %699 = vmatprep.subr.mxu0 0.0
      %700 = vmatpush1.msra.mxu0 0.0
      %701 = vmatprep.subr.mxu0 0.0
      %702 = vmatpush1.msra.mxu0 0.0
      %703 = vmatprep.subr.mxu0 0.0
      %704 = vmatpush1.msra.mxu0 0.0
      %705 = vmatprep.subr.mxu0 0.0
      %706 = vmatpush1.msra.mxu0 0.0
      %707 = vmatprep.subr.mxu0 0.0
      %708 = vmatpush1.msra.mxu0 0.0
      %709 = vmatprep.subr.mxu0 0.0
      %710 = vmatpush1.msra.mxu0 0.0
      %711 = vmatprep.subr.mxu0 0.0
      %712 = vmatpush1.msra.mxu0 0.0
      %713 = vmatprep.subr.mxu0 0.0
      %714 = vmatpush1.msra.mxu0 0.0
      %715 = vmatprep.subr.mxu0 0.0
      %716 = vmatpush1.msra.mxu0 0.0
      %717 = vmatprep.subr.mxu0 0.0
      %718 = vmatpush1.msra.mxu0 0.0
      %719 = vmatprep.subr.mxu0 0.0
      %720 = vmatpush1.msra.mxu0 0.0
      %721 = vmatprep.subr.mxu0 0.0
      %722 = vmatpush1.msra.mxu0 0.0
      %723 = vmatprep.subr.mxu0 0.0
      %724 = vmatpush1.msra.mxu0 0.0
      %725 = vmatprep.subr.mxu0 0.0
      %726 = vmatpush1.msra.mxu0 0.0
      %727 = vmatprep.subr.mxu0 0.0
      %728 = vmatpush1.msra.mxu0 0.0
      %729 = vmatprep.mubr.f32.mxu0 0.0
      %730 = vmatmul.mubr.f32.gmra.mrb[0].mxu0 %v615
      %v731 = vpop.f32.mrb[0].mxu0
      %v732 = vadd.f32 0.0, %v731
      %v733 = vpop.f32.mrb[0].mxu0
      %734 = vmatprep.mubr.f32.mxu0 0.0
      %735 = vmatmul.mubr.f32.gmra.mrb[0].mxu0 %v618
      %v736 = vpop.f32.mrb[0].mxu0
      %v737 = vadd.f32 0.0, %v736
      %v738 = vpop.f32.mrb[0].mxu0
      %739 = vmatprep.mubr.f32.mxu0 0.0
      %740 = vmatmul.mubr.f32.gmra.mrb[0].mxu0 %v621
      %v741 = vpop.f32.mrb[0].mxu0
      %v742 = vadd.f32 0.0, %v741
      %v743 = vpop.f32.mrb[0].mxu0
      %744 = vmatprep.mubr.f32.mxu0 0.0
      %745 = vmatmul.mubr.f32.gmra.mrb[0].mxu0 %v624
      %v746 = vpop.f32.mrb[0].mxu0
      %v747 = vadd.f32 0.0, %v746
      %v748 = vpop.f32.mrb[0].mxu0
      %749 = vmatprep.mubr.f32.mxu0 0.0
      %750 = vmatmul.mubr.f32.gmra.mrb[0].mxu0 %v627
      %v751 = vpop.f32.mrb[0].mxu0
      %v752 = vadd.f32 0.0, %v751
      %v753 = vpop.f32.mrb[0].mxu0
      %754 = vmatprep.mubr.f32.mxu0 0.0
      %755 = vmatmul.mubr.f32.gmra.mrb[0].mxu0 %v630
      %v756 = vpop.f32.mrb[0].mxu0
      %v757 = vadd.f32 0.0, %v756
      %v758 = vpop.f32.mrb[0].mxu0
      %759 = vmatprep.mubr.f32.mxu0 0.0
      %760 = vmatmul.mubr.f32.gmra.mrb[0].mxu0 %v633
      %v761 = vpop.f32.mrb[0].mxu0
      %v762 = vadd.f32 0.0, %v761
      %v763 = vpop.f32.mrb[0].mxu0
      %764 = vmatprep.mubr.f32.mxu0 0.0
      %765 = vmatmul.mubr.f32.gmra.mrb[0].mxu0 %v636
      %v766 = vpop.f32.mrb[0].mxu0
      %v767 = vadd.f32 0.0, %v766
      %v768 = vpop.f32.mrb[0].mxu0
      %769 = vmatprep.mubr.f32.mxu0 0.0
      %770 = vmatmul.mubr.f32.gmra.mrb[0].mxu0 %v639
      %v771 = vpop.f32.mrb[0].mxu0
      %v772 = vadd.f32 0.0, %v771
      %v773 = vpop.f32.mrb[0].mxu0
      %774 = vmatprep.mubr.f32.mxu0 0.0
      %775 = vmatmul.mubr.f32.gmra.mrb[0].mxu0 %v642
      %v776 = vpop.f32.mrb[0].mxu0
      %v777 = vadd.f32 0.0, %v776
      %v778 = vpop.f32.mrb[0].mxu0
      %779 = vmatprep.mubr.f32.mxu0 0.0
      %780 = vmatmul.mubr.f32.gmra.mrb[0].mxu0 %v645
      %v781 = vpop.f32.mrb[0].mxu0
      %v782 = vadd.f32 0.0, %v781
      %v783 = vpop.f32.mrb[0].mxu0
      %784 = vmatprep.mubr.f32.mxu0 0.0
      %785 = vmatmul.mubr.f32.gmra.mrb[0].mxu0 %v648
      %v786 = vpop.f32.mrb[0].mxu0
      %v787 = vadd.f32 0.0, %v786
      %v788 = vpop.f32.mrb[0].mxu0
      %789 = vmatprep.mubr.f32.mxu0 0.0
      %790 = vmatmul.mubr.f32.gmra.mrb[0].mxu0 %v651
      %v791 = vpop.f32.mrb[0].mxu0
      %v792 = vadd.f32 0.0, %v791
      %v793 = vpop.f32.mrb[0].mxu0
      %794 = vmatprep.mubr.f32.mxu0 0.0
      %795 = vmatmul.mubr.f32.gmra.mrb[0].mxu0 %v654
      %v796 = vpop.f32.mrb[0].mxu0
      %v797 = vadd.f32 0.0, %v796
      %v798 = vpop.f32.mrb[0].mxu0
      %799 = vmatprep.mubr.f32.mxu0 0.0
      %800 = vmatmul.mubr.f32.gmra.mrb[0].mxu0 %v657
      %v801 = vpop.f32.mrb[0].mxu0
      %v802 = vadd.f32 0.0, %v801
      %v803 = vpop.f32.mrb[0].mxu0
      %804 = vmatprep.mubr.f32.mxu0 0.0
      %805 = vmatmul.mubr.f32.gmra.mrb[0].mxu0 %v660
      %v806 = vpop.f32.mrb[0].mxu0
      %v807 = vadd.f32 0.0, %v806
      %v808 = vpop.f32.mrb[0].mxu0
      %809 = vdwg.mxu0
      %v810 = vadd.f32 %v518, %v732
      %v811 = vadd.f32 %v523, %v737
      %v812 = vadd.f32 %v528, %v742
      %v813 = vadd.f32 %v533, %v747
      %v814 = vadd.f32 %v538, %v752
      %v815 = vadd.f32 %v543, %v757
      %v816 = vadd.f32 %v548, %v762
      %v817 = vadd.f32 %v553, %v767
      %v818 = vadd.f32 %v558, %v772
      %v819 = vadd.f32 %v563, %v777
      %v820 = vadd.f32 %v568, %v782
      %v821 = vadd.f32 %v573, %v787
      %v822 = vadd.f32 %v578, %v792
      %v823 = vadd.f32 %v583, %v797
      %v824 = vadd.f32 %v588, %v802
      %v825 = vadd.f32 %v593, %v807
      %s826 = sadd.s32 %s164, 1
      %s827 = smul.u32 %s826, 24
      %s828 = scalar_lea.vmem %s155, %s827
      %v829 = vld [vmem:[%s828] sm:$0xff]
      %v830 = vld [vmem:[%s828 + $0x8] sm:$0xff]
      %v831 = vld [vmem:[%s828 + $0x18] sm:$0xff]
      %v832 = vld [vmem:[%s828 + $0x20] sm:$0xff]
      %v833 = vld [vmem:[%s828 + $0x30] sm:$0xff]
      %v834 = vld [vmem:[%s828 + $0x38] sm:$0xff]
      %v835 = vld [vmem:[%s828 + $0x48] sm:$0xff]
      %v836 = vld [vmem:[%s828 + $0x50] sm:$0xff]
      %v837 = vld [vmem:[%s828 + $0x60] sm:$0xff]
      %v838 = vld [vmem:[%s828 + $0x68] sm:$0xff]
      %v839 = vld [vmem:[%s828 + $0x78] sm:$0xff]
      %v840 = vld [vmem:[%s828 + $0x80] sm:$0xff]
      %v841 = vld [vmem:[%s828 + $0x90] sm:$0xff]
      %v842 = vld [vmem:[%s828 + $0x98] sm:$0xff]
      %v843 = vld [vmem:[%s828 + $0xa8] sm:$0xff]
      %v844 = vld [vmem:[%s828 + $0xb0] sm:$0xff]
      %s845 = scalar_lea.vmem %s1, 12
      %v846 = vld [vmem:[%s845] sm:$0xf]
      %v848 = vsel %vm202, %v829, 0
      %v851 = vsel %vm202, %v830, 0
      %v854 = vsel %vm202, %v831, 0
      %v857 = vsel %vm202, %v832, 0
      %v860 = vsel %vm202, %v833, 0
      %v863 = vsel %vm202, %v834, 0
      %v866 = vsel %vm202, %v835, 0
      %v869 = vsel %vm202, %v836, 0
      %v872 = vsel %vm202, %v837, 0
      %v875 = vsel %vm202, %v838, 0
      %v878 = vsel %vm202, %v839, 0
      %v881 = vsel %vm202, %v840, 0
      %v884 = vsel %vm202, %v841, 0
      %v887 = vsel %vm202, %v842, 0
      %v890 = vsel %vm202, %v843, 0
      %v893 = vsel %vm202, %v844, 0
      %v896 = vsel %vm251, %v846, 0
      %898 = vmatprep.subr.mxu0 0.0
      %899 = vmatpush1.msra.mxu0 %v896
      %900 = vmatprep.subr.mxu0 0.0
      %901 = vmatpush1.msra.mxu0 0.0
      %902 = vmatprep.subr.mxu0 0.0
      %903 = vmatpush1.msra.mxu0 0.0
      %904 = vmatprep.subr.mxu0 0.0
      %905 = vmatpush1.msra.mxu0 0.0
      %906 = vmatprep.subr.mxu0 0.0
      %907 = vmatpush1.msra.mxu0 0.0
      %908 = vmatprep.subr.mxu0 0.0
      %909 = vmatpush1.msra.mxu0 0.0
      %910 = vmatprep.subr.mxu0 0.0
      %911 = vmatpush1.msra.mxu0 0.0
      %912 = vmatprep.subr.mxu0 0.0
      %913 = vmatpush1.msra.mxu0 0.0
      %914 = vmatprep.subr.mxu0 0.0
      %915 = vmatpush1.msra.mxu0 0.0
      %916 = vmatprep.subr.mxu0 0.0
      %917 = vmatpush1.msra.mxu0 0.0
      %918 = vmatprep.subr.mxu0 0.0
      %919 = vmatpush1.msra.mxu0 0.0
      %920 = vmatprep.subr.mxu0 0.0
      %921 = vmatpush1.msra.mxu0 0.0
      %922 = vmatprep.subr.mxu0 0.0
      %923 = vmatpush1.msra.mxu0 0.0
      %924 = vmatprep.subr.mxu0 0.0
      %925 = vmatpush1.msra.mxu0 0.0
      %926 = vmatprep.subr.mxu0 0.0
      %927 = vmatpush1.msra.mxu0 0.0
      %928 = vmatprep.subr.mxu0 0.0
      %929 = vmatpush1.msra.mxu0 0.0
      %930 = vmatprep.subr.mxu0 0.0
      %931 = vmatpush1.msra.mxu0 0.0
      %932 = vmatprep.subr.mxu0 0.0
      %933 = vmatpush1.msra.mxu0 0.0
      %934 = vmatprep.subr.mxu0 0.0
      %935 = vmatpush1.msra.mxu0 0.0
      %936 = vmatprep.subr.mxu0 0.0
      %937 = vmatpush1.msra.mxu0 0.0
      %938 = vmatprep.subr.mxu0 0.0
      %939 = vmatpush1.msra.mxu0 0.0
      %940 = vmatprep.subr.mxu0 0.0
      %941 = vmatpush1.msra.mxu0 0.0
      %942 = vmatprep.subr.mxu0 0.0
      %943 = vmatpush1.msra.mxu0 0.0
      %944 = vmatprep.subr.mxu0 0.0
      %945 = vmatpush1.msra.mxu0 0.0
      %946 = vmatprep.subr.mxu0 0.0
      %947 = vmatpush1.msra.mxu0 0.0
      %948 = vmatprep.subr.mxu0 0.0
      %949 = vmatpush1.msra.mxu0 0.0
      %950 = vmatprep.subr.mxu0 0.0
      %951 = vmatpush1.msra.mxu0 0.0
      %952 = vmatprep.subr.mxu0 0.0
      %953 = vmatpush1.msra.mxu0 0.0
      %954 = vmatprep.subr.mxu0 0.0
      %955 = vmatpush1.msra.mxu0 0.0
      %956 = vmatprep.subr.mxu0 0.0
      %957 = vmatpush1.msra.mxu0 0.0
      %958 = vmatprep.subr.mxu0 0.0
      %959 = vmatpush1.msra.mxu0 0.0
      %960 = vmatprep.subr.mxu0 0.0
      %961 = vmatpush1.msra.mxu0 0.0
      %962 = vmatprep.mubr.f32.mxu0 0.0
      %963 = vmatmul.mubr.f32.gmra.mrb[0].mxu0 %v848
      %v964 = vpop.f32.mrb[0].mxu0
      %v965 = vadd.f32 0.0, %v964
      %v966 = vpop.f32.mrb[0].mxu0
      %967 = vmatprep.mubr.f32.mxu0 0.0
      %968 = vmatmul.mubr.f32.gmra.mrb[0].mxu0 %v851
      %v969 = vpop.f32.mrb[0].mxu0
      %v970 = vadd.f32 0.0, %v969
      %v971 = vpop.f32.mrb[0].mxu0
      %972 = vmatprep.mubr.f32.mxu0 0.0
      %973 = vmatmul.mubr.f32.gmra.mrb[0].mxu0 %v854
      %v974 = vpop.f32.mrb[0].mxu0
      %v975 = vadd.f32 0.0, %v974
      %v976 = vpop.f32.mrb[0].mxu0
      %977 = vmatprep.mubr.f32.mxu0 0.0
      %978 = vmatmul.mubr.f32.gmra.mrb[0].mxu0 %v857
      %v979 = vpop.f32.mrb[0].mxu0
      %v980 = vadd.f32 0.0, %v979
      %v981 = vpop.f32.mrb[0].mxu0
      %982 = vmatprep.mubr.f32.mxu0 0.0
      %983 = vmatmul.mubr.f32.gmra.mrb[0].mxu0 %v860
      %v984 = vpop.f32.mrb[0].mxu0
      %v985 = vadd.f32 0.0, %v984
      %v986 = vpop.f32.mrb[0].mxu0
      %987 = vmatprep.mubr.f32.mxu0 0.0
      %988 = vmatmul.mubr.f32.gmra.mrb[0].mxu0 %v863
      %v989 = vpop.f32.mrb[0].mxu0
      %v990 = vadd.f32 0.0, %v989
      %v991 = vpop.f32.mrb[0].mxu0
      %992 = vmatprep.mubr.f32.mxu0 0.0
      %993 = vmatmul.mubr.f32.gmra.mrb[0].mxu0 %v866
      %v994 = vpop.f32.mrb[0].mxu0
      %v995 = vadd.f32 0.0, %v994
      %v996 = vpop.f32.mrb[0].mxu0
      %997 = vmatprep.mubr.f32.mxu0 0.0
      %998 = vmatmul.mubr.f32.gmra.mrb[0].mxu0 %v869
      %v999 = vpop.f32.mrb[0].mxu0
      %v1000 = vadd.f32 0.0, %v999
      %v1001 = vpop.f32.mrb[0].mxu0
      %1002 = vmatprep.mubr.f32.mxu0 0.0
      %1003 = vmatmul.mubr.f32.gmra.mrb[0].mxu0 %v872
      %v1004 = vpop.f32.mrb[0].mxu0
      %v1005 = vadd.f32 0.0, %v1004
      %v1006 = vpop.f32.mrb[0].mxu0
      %1007 = vmatprep.mubr.f32.mxu0 0.0
      %1008 = vmatmul.mubr.f32.gmra.mrb[0].mxu0 %v875
      %v1009 = vpop.f32.mrb[0].mxu0
      %v1010 = vadd.f32 0.0, %v1009
      %v1011 = vpop.f32.mrb[0].mxu0
      %1012 = vmatprep.mubr.f32.mxu0 0.0
      %1013 = vmatmul.mubr.f32.gmra.mrb[0].mxu0 %v878
      %v1014 = vpop.f32.mrb[0].mxu0
      %v1015 = vadd.f32 0.0, %v1014
      %v1016 = vpop.f32.mrb[0].mxu0
      %1017 = vmatprep.mubr.f32.mxu0 0.0
      %1018 = vmatmul.mubr.f32.gmra.mrb[0].mxu0 %v881
      %v1019 = vpop.f32.mrb[0].mxu0
      %v1020 = vadd.f32 0.0, %v1019
      %v1021 = vpop.f32.mrb[0].mxu0
      %1022 = vmatprep.mubr.f32.mxu0 0.0
      %1023 = vmatmul.mubr.f32.gmra.mrb[0].mxu0 %v884
      %v1024 = vpop.f32.mrb[0].mxu0
      %v1025 = vadd.f32 0.0, %v1024
      %v1026 = vpop.f32.mrb[0].mxu0
      %1027 = vmatprep.mubr.f32.mxu0 0.0
      %1028 = vmatmul.mubr.f32.gmra.mrb[0].mxu0 %v887
      %v1029 = vpop.f32.mrb[0].mxu0
      %v1030 = vadd.f32 0.0, %v1029
      %v1031 = vpop.f32.mrb[0].mxu0
      %1032 = vmatprep.mubr.f32.mxu0 0.0
      %1033 = vmatmul.mubr.f32.gmra.mrb[0].mxu0 %v890
      %v1034 = vpop.f32.mrb[0].mxu0
      %v1035 = vadd.f32 0.0, %v1034
      %v1036 = vpop.f32.mrb[0].mxu0
      %1037 = vmatprep.mubr.f32.mxu0 0.0
      %1038 = vmatmul.mubr.f32.gmra.mrb[0].mxu0 %v893
      %v1039 = vpop.f32.mrb[0].mxu0
      %v1040 = vadd.f32 0.0, %v1039
      %v1041 = vpop.f32.mrb[0].mxu0
      %1042 = vdwg.mxu0
      %v1043 = vadd.f32 %v810, %v965
      %v1044 = vadd.f32 %v811, %v970
      %v1045 = vadd.f32 %v812, %v975
      %v1046 = vadd.f32 %v813, %v980
      %v1047 = vadd.f32 %v814, %v985
      %v1048 = vadd.f32 %v815, %v990
      %v1049 = vadd.f32 %v816, %v995
      %v1050 = vadd.f32 %v817, %v1000
      %v1051 = vadd.f32 %v818, %v1005
      %v1052 = vadd.f32 %v819, %v1010
      %v1053 = vadd.f32 %v820, %v1015
      %v1054 = vadd.f32 %v821, %v1020
      %v1055 = vadd.f32 %v822, %v1025
      %v1056 = vadd.f32 %v823, %v1030
      %v1057 = vadd.f32 %v824, %v1035
      %v1058 = vadd.f32 %v825, %v1040
      %v1059 = vld [vmem:[%s828 + $0x1] sm:$0xff]
      %v1060 = vld [vmem:[%s828 + $0x9] sm:$0xff]
      %v1061 = vld [vmem:[%s828 + $0x19] sm:$0xff]
      %v1062 = vld [vmem:[%s828 + $0x21] sm:$0xff]
      %v1063 = vld [vmem:[%s828 + $0x31] sm:$0xff]
      %v1064 = vld [vmem:[%s828 + $0x39] sm:$0xff]
      %v1065 = vld [vmem:[%s828 + $0x49] sm:$0xff]
      %v1066 = vld [vmem:[%s828 + $0x51] sm:$0xff]
      %v1067 = vld [vmem:[%s828 + $0x61] sm:$0xff]
      %v1068 = vld [vmem:[%s828 + $0x69] sm:$0xff]
      %v1069 = vld [vmem:[%s828 + $0x79] sm:$0xff]
      %v1070 = vld [vmem:[%s828 + $0x81] sm:$0xff]
      %v1071 = vld [vmem:[%s828 + $0x91] sm:$0xff]
      %v1072 = vld [vmem:[%s828 + $0x99] sm:$0xff]
      %v1073 = vld [vmem:[%s828 + $0xa9] sm:$0xff]
      %v1074 = vld [vmem:[%s828 + $0xb1] sm:$0xff]
      %s1075 = scalar_lea.vmem %s1, 16
      %v1076 = vld [vmem:[%s1075] sm:$0xf]
      %v1078 = vsel %vm202, %v1059, 0
      %v1081 = vsel %vm202, %v1060, 0
      %v1084 = vsel %vm202, %v1061, 0
      %v1087 = vsel %vm202, %v1062, 0
      %v1090 = vsel %vm202, %v1063, 0
      %v1093 = vsel %vm202, %v1064, 0
      %v1096 = vsel %vm202, %v1065, 0
      %v1099 = vsel %vm202, %v1066, 0
      %v1102 = vsel %vm202, %v1067, 0
      %v1105 = vsel %vm202, %v1068, 0
      %v1108 = vsel %vm202, %v1069, 0
      %v1111 = vsel %vm202, %v1070, 0
      %v1114 = vsel %vm202, %v1071, 0
      %v1117 = vsel %vm202, %v1072, 0
      %v1120 = vsel %vm202, %v1073, 0
      %v1123 = vsel %vm202, %v1074, 0
      %v1126 = vsel %vm251, %v1076, 0
      %1128 = vmatprep.subr.mxu0 0.0
      %1129 = vmatpush1.msra.mxu0 %v1126
      %1130 = vmatprep.subr.mxu0 0.0
      %1131 = vmatpush1.msra.mxu0 0.0
      %1132 = vmatprep.subr.mxu0 0.0
      %1133 = vmatpush1.msra.mxu0 0.0
      %1134 = vmatprep.subr.mxu0 0.0
      %1135 = vmatpush1.msra.mxu0 0.0
      %1136 = vmatprep.subr.mxu0 0.0
      %1137 = vmatpush1.msra.mxu0 0.0
      %1138 = vmatprep.subr.mxu0 0.0
      %1139 = vmatpush1.msra.mxu0 0.0
      %1140 = vmatprep.subr.mxu0 0.0
      %1141 = vmatpush1.msra.mxu0 0.0
      %1142 = vmatprep.subr.mxu0 0.0
      %1143 = vmatpush1.msra.mxu0 0.0
      %1144 = vmatprep.subr.mxu0 0.0
      %1145 = vmatpush1.msra.mxu0 0.0
      %1146 = vmatprep.subr.mxu0 0.0
      %1147 = vmatpush1.msra.mxu0 0.0
      %1148 = vmatprep.subr.mxu0 0.0
      %1149 = vmatpush1.msra.mxu0 0.0
      %1150 = vmatprep.subr.mxu0 0.0
      %1151 = vmatpush1.msra.mxu0 0.0
      %1152 = vmatprep.subr.mxu0 0.0
      %1153 = vmatpush1.msra.mxu0 0.0
      %1154 = vmatprep.subr.mxu0 0.0
      %1155 = vmatpush1.msra.mxu0 0.0
      %1156 = vmatprep.subr.mxu0 0.0
      %1157 = vmatpush1.msra.mxu0 0.0
      %1158 = vmatprep.subr.mxu0 0.0
      %1159 = vmatpush1.msra.mxu0 0.0
      %1160 = vmatprep.subr.mxu0 0.0
      %1161 = vmatpush1.msra.mxu0 0.0
      %1162 = vmatprep.subr.mxu0 0.0
      %1163 = vmatpush1.msra.mxu0 0.0
      %1164 = vmatprep.subr.mxu0 0.0
      %1165 = vmatpush1.msra.mxu0 0.0
      %1166 = vmatprep.subr.mxu0 0.0
      %1167 = vmatpush1.msra.mxu0 0.0
      %1168 = vmatprep.subr.mxu0 0.0
      %1169 = vmatpush1.msra.mxu0 0.0
      %1170 = vmatprep.subr.mxu0 0.0
      %1171 = vmatpush1.msra.mxu0 0.0
      %1172 = vmatprep.subr.mxu0 0.0
      %1173 = vmatpush1.msra.mxu0 0.0
      %1174 = vmatprep.subr.mxu0 0.0
      %1175 = vmatpush1.msra.mxu0 0.0
      %1176 = vmatprep.subr.mxu0 0.0
      %1177 = vmatpush1.msra.mxu0 0.0
      %1178 = vmatprep.subr.mxu0 0.0
      %1179 = vmatpush1.msra.mxu0 0.0
      %1180 = vmatprep.subr.mxu0 0.0
      %1181 = vmatpush1.msra.mxu0 0.0
      %1182 = vmatprep.subr.mxu0 0.0
      %1183 = vmatpush1.msra.mxu0 0.0
      %1184 = vmatprep.subr.mxu0 0.0
      %1185 = vmatpush1.msra.mxu0 0.0
      %1186 = vmatprep.subr.mxu0 0.0
      %1187 = vmatpush1.msra.mxu0 0.0
      %1188 = vmatprep.subr.mxu0 0.0
      %1189 = vmatpush1.msra.mxu0 0.0
      %1190 = vmatprep.subr.mxu0 0.0
      %1191 = vmatpush1.msra.mxu0 0.0
      %1192 = vmatprep.mubr.f32.mxu0 0.0
      %1193 = vmatmul.mubr.f32.gmra.mrb[0].mxu0 %v1078
      %v1194 = vpop.f32.mrb[0].mxu0
      %v1195 = vadd.f32 0.0, %v1194
      %v1196 = vpop.f32.mrb[0].mxu0
      %1197 = vmatprep.mubr.f32.mxu0 0.0
      %1198 = vmatmul.mubr.f32.gmra.mrb[0].mxu0 %v1081
      %v1199 = vpop.f32.mrb[0].mxu0
      %v1200 = vadd.f32 0.0, %v1199
      %v1201 = vpop.f32.mrb[0].mxu0
      %1202 = vmatprep.mubr.f32.mxu0 0.0
      %1203 = vmatmul.mubr.f32.gmra.mrb[0].mxu0 %v1084
      %v1204 = vpop.f32.mrb[0].mxu0
      %v1205 = vadd.f32 0.0, %v1204
      %v1206 = vpop.f32.mrb[0].mxu0
      %1207 = vmatprep.mubr.f32.mxu0 0.0
      %1208 = vmatmul.mubr.f32.gmra.mrb[0].mxu0 %v1087
      %v1209 = vpop.f32.mrb[0].mxu0
      %v1210 = vadd.f32 0.0, %v1209
      %v1211 = vpop.f32.mrb[0].mxu0
      %1212 = vmatprep.mubr.f32.mxu0 0.0
      %1213 = vmatmul.mubr.f32.gmra.mrb[0].mxu0 %v1090
      %v1214 = vpop.f32.mrb[0].mxu0
      %v1215 = vadd.f32 0.0, %v1214
      %v1216 = vpop.f32.mrb[0].mxu0
      %1217 = vmatprep.mubr.f32.mxu0 0.0
      %1218 = vmatmul.mubr.f32.gmra.mrb[0].mxu0 %v1093
      %v1219 = vpop.f32.mrb[0].mxu0
      %v1220 = vadd.f32 0.0, %v1219
      %v1221 = vpop.f32.mrb[0].mxu0
      %1222 = vmatprep.mubr.f32.mxu0 0.0
      %1223 = vmatmul.mubr.f32.gmra.mrb[0].mxu0 %v1096
      %v1224 = vpop.f32.mrb[0].mxu0
      %v1225 = vadd.f32 0.0, %v1224
      %v1226 = vpop.f32.mrb[0].mxu0
      %1227 = vmatprep.mubr.f32.mxu0 0.0
      %1228 = vmatmul.mubr.f32.gmra.mrb[0].mxu0 %v1099
      %v1229 = vpop.f32.mrb[0].mxu0
      %v1230 = vadd.f32 0.0, %v1229
      %v1231 = vpop.f32.mrb[0].mxu0
      %1232 = vmatprep.mubr.f32.mxu0 0.0
      %1233 = vmatmul.mubr.f32.gmra.mrb[0].mxu0 %v1102
      %v1234 = vpop.f32.mrb[0].mxu0
      %v1235 = vadd.f32 0.0, %v1234
      %v1236 = vpop.f32.mrb[0].mxu0
      %1237 = vmatprep.mubr.f32.mxu0 0.0
      %1238 = vmatmul.mubr.f32.gmra.mrb[0].mxu0 %v1105
      %v1239 = vpop.f32.mrb[0].mxu0
      %v1240 = vadd.f32 0.0, %v1239
      %v1241 = vpop.f32.mrb[0].mxu0
      %1242 = vmatprep.mubr.f32.mxu0 0.0
      %1243 = vmatmul.mubr.f32.gmra.mrb[0].mxu0 %v1108
      %v1244 = vpop.f32.mrb[0].mxu0
      %v1245 = vadd.f32 0.0, %v1244
      %v1246 = vpop.f32.mrb[0].mxu0
      %1247 = vmatprep.mubr.f32.mxu0 0.0
      %1248 = vmatmul.mubr.f32.gmra.mrb[0].mxu0 %v1111
      %v1249 = vpop.f32.mrb[0].mxu0
      %v1250 = vadd.f32 0.0, %v1249
      %v1251 = vpop.f32.mrb[0].mxu0
      %1252 = vmatprep.mubr.f32.mxu0 0.0
      %1253 = vmatmul.mubr.f32.gmra.mrb[0].mxu0 %v1114
      %v1254 = vpop.f32.mrb[0].mxu0
      %v1255 = vadd.f32 0.0, %v1254
      %v1256 = vpop.f32.mrb[0].mxu0
      %1257 = vmatprep.mubr.f32.mxu0 0.0
      %1258 = vmatmul.mubr.f32.gmra.mrb[0].mxu0 %v1117
      %v1259 = vpop.f32.mrb[0].mxu0
      %v1260 = vadd.f32 0.0, %v1259
      %v1261 = vpop.f32.mrb[0].mxu0
      %1262 = vmatprep.mubr.f32.mxu0 0.0
      %1263 = vmatmul.mubr.f32.gmra.mrb[0].mxu0 %v1120
      %v1264 = vpop.f32.mrb[0].mxu0
      %v1265 = vadd.f32 0.0, %v1264
      %v1266 = vpop.f32.mrb[0].mxu0
      %1267 = vmatprep.mubr.f32.mxu0 0.0
      %1268 = vmatmul.mubr.f32.gmra.mrb[0].mxu0 %v1123
      %v1269 = vpop.f32.mrb[0].mxu0
      %v1270 = vadd.f32 0.0, %v1269
      %v1271 = vpop.f32.mrb[0].mxu0
      %1272 = vdwg.mxu0
      %v1273 = vadd.f32 %v1043, %v1195
      %v1274 = vadd.f32 %v1044, %v1200
      %v1275 = vadd.f32 %v1045, %v1205
      %v1276 = vadd.f32 %v1046, %v1210
      %v1277 = vadd.f32 %v1047, %v1215
      %v1278 = vadd.f32 %v1048, %v1220
      %v1279 = vadd.f32 %v1049, %v1225
      %v1280 = vadd.f32 %v1050, %v1230
      %v1281 = vadd.f32 %v1051, %v1235
      %v1282 = vadd.f32 %v1052, %v1240
      %v1283 = vadd.f32 %v1053, %v1245
      %v1284 = vadd.f32 %v1054, %v1250
      %v1285 = vadd.f32 %v1055, %v1255
      %v1286 = vadd.f32 %v1056, %v1260
      %v1287 = vadd.f32 %v1057, %v1265
      %v1288 = vadd.f32 %v1058, %v1270
      %v1289 = vld [vmem:[%s828 + $0x2] sm:$0xff]
      %v1290 = vld [vmem:[%s828 + $0xa] sm:$0xff]
      %v1291 = vld [vmem:[%s828 + $0x1a] sm:$0xff]
      %v1292 = vld [vmem:[%s828 + $0x22] sm:$0xff]
      %v1293 = vld [vmem:[%s828 + $0x32] sm:$0xff]
      %v1294 = vld [vmem:[%s828 + $0x3a] sm:$0xff]
      %v1295 = vld [vmem:[%s828 + $0x4a] sm:$0xff]
      %v1296 = vld [vmem:[%s828 + $0x52] sm:$0xff]
      %v1297 = vld [vmem:[%s828 + $0x62] sm:$0xff]
      %v1298 = vld [vmem:[%s828 + $0x6a] sm:$0xff]
      %v1299 = vld [vmem:[%s828 + $0x7a] sm:$0xff]
      %v1300 = vld [vmem:[%s828 + $0x82] sm:$0xff]
      %v1301 = vld [vmem:[%s828 + $0x92] sm:$0xff]
      %v1302 = vld [vmem:[%s828 + $0x9a] sm:$0xff]
      %v1303 = vld [vmem:[%s828 + $0xaa] sm:$0xff]
      %v1304 = vld [vmem:[%s828 + $0xb2] sm:$0xff]
      %s1305 = scalar_lea.vmem %s1, 20
      %v1306 = vld [vmem:[%s1305] sm:$0xf]
      %v1308 = vsel %vm202, %v1289, 0
      %v1311 = vsel %vm202, %v1290, 0
      %v1314 = vsel %vm202, %v1291, 0
      %v1317 = vsel %vm202, %v1292, 0
      %v1320 = vsel %vm202, %v1293, 0
      %v1323 = vsel %vm202, %v1294, 0
      %v1326 = vsel %vm202, %v1295, 0
      %v1329 = vsel %vm202, %v1296, 0
      %v1332 = vsel %vm202, %v1297, 0
      %v1335 = vsel %vm202, %v1298, 0
      %v1338 = vsel %vm202, %v1299, 0
      %v1341 = vsel %vm202, %v1300, 0
      %v1344 = vsel %vm202, %v1301, 0
      %v1347 = vsel %vm202, %v1302, 0
      %v1350 = vsel %vm202, %v1303, 0
      %v1353 = vsel %vm202, %v1304, 0
      %v1356 = vsel %vm251, %v1306, 0
      %1358 = vmatprep.subr.mxu0 0.0
      %1359 = vmatpush1.msra.mxu0 %v1356
      %1360 = vmatprep.subr.mxu0 0.0
      %1361 = vmatpush1.msra.mxu0 0.0
      %1362 = vmatprep.subr.mxu0 0.0
      %1363 = vmatpush1.msra.mxu0 0.0
      %1364 = vmatprep.subr.mxu0 0.0
      %1365 = vmatpush1.msra.mxu0 0.0
      %1366 = vmatprep.subr.mxu0 0.0
      %1367 = vmatpush1.msra.mxu0 0.0
      %1368 = vmatprep.subr.mxu0 0.0
      %1369 = vmatpush1.msra.mxu0 0.0
      %1370 = vmatprep.subr.mxu0 0.0
      %1371 = vmatpush1.msra.mxu0 0.0
      %1372 = vmatprep.subr.mxu0 0.0
      %1373 = vmatpush1.msra.mxu0 0.0
      %1374 = vmatprep.subr.mxu0 0.0
      %1375 = vmatpush1.msra.mxu0 0.0
      %1376 = vmatprep.subr.mxu0 0.0
      %1377 = vmatpush1.msra.mxu0 0.0
      %1378 = vmatprep.subr.mxu0 0.0
      %1379 = vmatpush1.msra.mxu0 0.0
      %1380 = vmatprep.subr.mxu0 0.0
      %1381 = vmatpush1.msra.mxu0 0.0
      %1382 = vmatprep.subr.mxu0 0.0
      %1383 = vmatpush1.msra.mxu0 0.0
      %1384 = vmatprep.subr.mxu0 0.0
      %1385 = vmatpush1.msra.mxu0 0.0
      %1386 = vmatprep.subr.mxu0 0.0
      %1387 = vmatpush1.msra.mxu0 0.0
      %1388 = vmatprep.subr.mxu0 0.0
      %1389 = vmatpush1.msra.mxu0 0.0
      %1390 = vmatprep.subr.mxu0 0.0
      %1391 = vmatpush1.msra.mxu0 0.0
      %1392 = vmatprep.subr.mxu0 0.0
      %1393 = vmatpush1.msra.mxu0 0.0
      %1394 = vmatprep.subr.mxu0 0.0
      %1395 = vmatpush1.msra.mxu0 0.0
      %1396 = vmatprep.subr.mxu0 0.0
      %1397 = vmatpush1.msra.mxu0 0.0
      %1398 = vmatprep.subr.mxu0 0.0
      %1399 = vmatpush1.msra.mxu0 0.0
      %1400 = vmatprep.subr.mxu0 0.0
      %1401 = vmatpush1.msra.mxu0 0.0
      %1402 = vmatprep.subr.mxu0 0.0
      %1403 = vmatpush1.msra.mxu0 0.0
      %1404 = vmatprep.subr.mxu0 0.0
      %1405 = vmatpush1.msra.mxu0 0.0
      %1406 = vmatprep.subr.mxu0 0.0
      %1407 = vmatpush1.msra.mxu0 0.0
      %1408 = vmatprep.subr.mxu0 0.0
      %1409 = vmatpush1.msra.mxu0 0.0
      %1410 = vmatprep.subr.mxu0 0.0
      %1411 = vmatpush1.msra.mxu0 0.0
      %1412 = vmatprep.subr.mxu0 0.0
      %1413 = vmatpush1.msra.mxu0 0.0
      %1414 = vmatprep.subr.mxu0 0.0
      %1415 = vmatpush1.msra.mxu0 0.0
      %1416 = vmatprep.subr.mxu0 0.0
      %1417 = vmatpush1.msra.mxu0 0.0
      %1418 = vmatprep.subr.mxu0 0.0
      %1419 = vmatpush1.msra.mxu0 0.0
      %1420 = vmatprep.subr.mxu0 0.0
      %1421 = vmatpush1.msra.mxu0 0.0
      %1422 = vmatprep.mubr.f32.mxu0 0.0
      %1423 = vmatmul.mubr.f32.gmra.mrb[0].mxu0 %v1308
      %v1424 = vpop.f32.mrb[0].mxu0
      %v1425 = vadd.f32 0.0, %v1424
      %v1426 = vpop.f32.mrb[0].mxu0
      %1427 = vmatprep.mubr.f32.mxu0 0.0
      %1428 = vmatmul.mubr.f32.gmra.mrb[0].mxu0 %v1311
      %v1429 = vpop.f32.mrb[0].mxu0
      %v1430 = vadd.f32 0.0, %v1429
      %v1431 = vpop.f32.mrb[0].mxu0
      %1432 = vmatprep.mubr.f32.mxu0 0.0
      %1433 = vmatmul.mubr.f32.gmra.mrb[0].mxu0 %v1314
      %v1434 = vpop.f32.mrb[0].mxu0
      %v1435 = vadd.f32 0.0, %v1434
      %v1436 = vpop.f32.mrb[0].mxu0
      %1437 = vmatprep.mubr.f32.mxu0 0.0
      %1438 = vmatmul.mubr.f32.gmra.mrb[0].mxu0 %v1317
      %v1439 = vpop.f32.mrb[0].mxu0
      %v1440 = vadd.f32 0.0, %v1439
      %v1441 = vpop.f32.mrb[0].mxu0
      %1442 = vmatprep.mubr.f32.mxu0 0.0
      %1443 = vmatmul.mubr.f32.gmra.mrb[0].mxu0 %v1320
      %v1444 = vpop.f32.mrb[0].mxu0
      %v1445 = vadd.f32 0.0, %v1444
      %v1446 = vpop.f32.mrb[0].mxu0
      %1447 = vmatprep.mubr.f32.mxu0 0.0
      %1448 = vmatmul.mubr.f32.gmra.mrb[0].mxu0 %v1323
      %v1449 = vpop.f32.mrb[0].mxu0
      %v1450 = vadd.f32 0.0, %v1449
      %v1451 = vpop.f32.mrb[0].mxu0
      %1452 = vmatprep.mubr.f32.mxu0 0.0
      %1453 = vmatmul.mubr.f32.gmra.mrb[0].mxu0 %v1326
      %v1454 = vpop.f32.mrb[0].mxu0
      %v1455 = vadd.f32 0.0, %v1454
      %v1456 = vpop.f32.mrb[0].mxu0
      %1457 = vmatprep.mubr.f32.mxu0 0.0
      %1458 = vmatmul.mubr.f32.gmra.mrb[0].mxu0 %v1329
      %v1459 = vpop.f32.mrb[0].mxu0
      %v1460 = vadd.f32 0.0, %v1459
      %v1461 = vpop.f32.mrb[0].mxu0
      %1462 = vmatprep.mubr.f32.mxu0 0.0
      %1463 = vmatmul.mubr.f32.gmra.mrb[0].mxu0 %v1332
      %v1464 = vpop.f32.mrb[0].mxu0
      %v1465 = vadd.f32 0.0, %v1464
      %v1466 = vpop.f32.mrb[0].mxu0
      %1467 = vmatprep.mubr.f32.mxu0 0.0
      %1468 = vmatmul.mubr.f32.gmra.mrb[0].mxu0 %v1335
      %v1469 = vpop.f32.mrb[0].mxu0
      %v1470 = vadd.f32 0.0, %v1469
      %v1471 = vpop.f32.mrb[0].mxu0
      %1472 = vmatprep.mubr.f32.mxu0 0.0
      %1473 = vmatmul.mubr.f32.gmra.mrb[0].mxu0 %v1338
      %v1474 = vpop.f32.mrb[0].mxu0
      %v1475 = vadd.f32 0.0, %v1474
      %v1476 = vpop.f32.mrb[0].mxu0
      %1477 = vmatprep.mubr.f32.mxu0 0.0
      %1478 = vmatmul.mubr.f32.gmra.mrb[0].mxu0 %v1341
      %v1479 = vpop.f32.mrb[0].mxu0
      %v1480 = vadd.f32 0.0, %v1479
      %v1481 = vpop.f32.mrb[0].mxu0
      %1482 = vmatprep.mubr.f32.mxu0 0.0
      %1483 = vmatmul.mubr.f32.gmra.mrb[0].mxu0 %v1344
      %v1484 = vpop.f32.mrb[0].mxu0
      %v1485 = vadd.f32 0.0, %v1484
      %v1486 = vpop.f32.mrb[0].mxu0
      %1487 = vmatprep.mubr.f32.mxu0 0.0
      %1488 = vmatmul.mubr.f32.gmra.mrb[0].mxu0 %v1347
      %v1489 = vpop.f32.mrb[0].mxu0
      %v1490 = vadd.f32 0.0, %v1489
      %v1491 = vpop.f32.mrb[0].mxu0
      %1492 = vmatprep.mubr.f32.mxu0 0.0
      %1493 = vmatmul.mubr.f32.gmra.mrb[0].mxu0 %v1350
      %v1494 = vpop.f32.mrb[0].mxu0
      %v1495 = vadd.f32 0.0, %v1494
      %v1496 = vpop.f32.mrb[0].mxu0
      %1497 = vmatprep.mubr.f32.mxu0 0.0
      %1498 = vmatmul.mubr.f32.gmra.mrb[0].mxu0 %v1353
      %v1499 = vpop.f32.mrb[0].mxu0
      %v1500 = vadd.f32 0.0, %v1499
      %v1501 = vpop.f32.mrb[0].mxu0
      %1502 = vdwg.mxu0
      %v1503 = vadd.f32 %v1273, %v1425
      %v1504 = vadd.f32 %v1274, %v1430
      %v1505 = vadd.f32 %v1275, %v1435
      %v1506 = vadd.f32 %v1276, %v1440
      %v1507 = vadd.f32 %v1277, %v1445
      %v1508 = vadd.f32 %v1278, %v1450
      %v1509 = vadd.f32 %v1279, %v1455
      %v1510 = vadd.f32 %v1280, %v1460
      %v1511 = vadd.f32 %v1281, %v1465
      %v1512 = vadd.f32 %v1282, %v1470
      %v1513 = vadd.f32 %v1283, %v1475
      %v1514 = vadd.f32 %v1284, %v1480
      %v1515 = vadd.f32 %v1285, %v1485
      %v1516 = vadd.f32 %v1286, %v1490
      %v1517 = vadd.f32 %v1287, %v1495
      %v1518 = vadd.f32 %v1288, %v1500
      %s1519 = sadd.s32 %s164, 2
      %s1520 = smul.u32 %s1519, 24
      %s1521 = scalar_lea.vmem %s155, %s1520
      %v1522 = vld [vmem:[%s1521] sm:$0xff]
      %v1523 = vld [vmem:[%s1521 + $0x8] sm:$0xff]
      %v1524 = vld [vmem:[%s1521 + $0x18] sm:$0xff]
      %v1525 = vld [vmem:[%s1521 + $0x20] sm:$0xff]
      %v1526 = vld [vmem:[%s1521 + $0x30] sm:$0xff]
      %v1527 = vld [vmem:[%s1521 + $0x38] sm:$0xff]
      %v1528 = vld [vmem:[%s1521 + $0x48] sm:$0xff]
      %v1529 = vld [vmem:[%s1521 + $0x50] sm:$0xff]
      %v1530 = vld [vmem:[%s1521 + $0x60] sm:$0xff]
      %v1531 = vld [vmem:[%s1521 + $0x68] sm:$0xff]
      %v1532 = vld [vmem:[%s1521 + $0x78] sm:$0xff]
      %v1533 = vld [vmem:[%s1521 + $0x80] sm:$0xff]
      %v1534 = vld [vmem:[%s1521 + $0x90] sm:$0xff]
      %v1535 = vld [vmem:[%s1521 + $0x98] sm:$0xff]
      %v1536 = vld [vmem:[%s1521 + $0xa8] sm:$0xff]
      %v1537 = vld [vmem:[%s1521 + $0xb0] sm:$0xff]
      %s1538 = scalar_lea.vmem %s1, 24
      %v1539 = vld [vmem:[%s1538] sm:$0xf]
      %v1541 = vsel %vm202, %v1522, 0
      %v1544 = vsel %vm202, %v1523, 0
      %v1547 = vsel %vm202, %v1524, 0
      %v1550 = vsel %vm202, %v1525, 0
      %v1553 = vsel %vm202, %v1526, 0
      %v1556 = vsel %vm202, %v1527, 0
      %v1559 = vsel %vm202, %v1528, 0
      %v1562 = vsel %vm202, %v1529, 0
      %v1565 = vsel %vm202, %v1530, 0
      %v1568 = vsel %vm202, %v1531, 0
      %v1571 = vsel %vm202, %v1532, 0
      %v1574 = vsel %vm202, %v1533, 0
      %v1577 = vsel %vm202, %v1534, 0
      %v1580 = vsel %vm202, %v1535, 0
      %v1583 = vsel %vm202, %v1536, 0
      %v1586 = vsel %vm202, %v1537, 0
      %v1589 = vsel %vm251, %v1539, 0
      %1591 = vmatprep.subr.mxu0 0.0
      %1592 = vmatpush1.msra.mxu0 %v1589
      %1593 = vmatprep.subr.mxu0 0.0
      %1594 = vmatpush1.msra.mxu0 0.0
      %1595 = vmatprep.subr.mxu0 0.0
      %1596 = vmatpush1.msra.mxu0 0.0
      %1597 = vmatprep.subr.mxu0 0.0
      %1598 = vmatpush1.msra.mxu0 0.0
      %1599 = vmatprep.subr.mxu0 0.0
      %1600 = vmatpush1.msra.mxu0 0.0
      %1601 = vmatprep.subr.mxu0 0.0
      %1602 = vmatpush1.msra.mxu0 0.0
      %1603 = vmatprep.subr.mxu0 0.0
      %1604 = vmatpush1.msra.mxu0 0.0
      %1605 = vmatprep.subr.mxu0 0.0
      %1606 = vmatpush1.msra.mxu0 0.0
      %1607 = vmatprep.subr.mxu0 0.0
      %1608 = vmatpush1.msra.mxu0 0.0
      %1609 = vmatprep.subr.mxu0 0.0
      %1610 = vmatpush1.msra.mxu0 0.0
      %1611 = vmatprep.subr.mxu0 0.0
      %1612 = vmatpush1.msra.mxu0 0.0
      %1613 = vmatprep.subr.mxu0 0.0
      %1614 = vmatpush1.msra.mxu0 0.0
      %1615 = vmatprep.subr.mxu0 0.0
      %1616 = vmatpush1.msra.mxu0 0.0
      %1617 = vmatprep.subr.mxu0 0.0
      %1618 = vmatpush1.msra.mxu0 0.0
      %1619 = vmatprep.subr.mxu0 0.0
      %1620 = vmatpush1.msra.mxu0 0.0
      %1621 = vmatprep.subr.mxu0 0.0
      %1622 = vmatpush1.msra.mxu0 0.0
      %1623 = vmatprep.subr.mxu0 0.0
      %1624 = vmatpush1.msra.mxu0 0.0
      %1625 = vmatprep.subr.mxu0 0.0
      %1626 = vmatpush1.msra.mxu0 0.0
      %1627 = vmatprep.subr.mxu0 0.0
      %1628 = vmatpush1.msra.mxu0 0.0
      %1629 = vmatprep.subr.mxu0 0.0
      %1630 = vmatpush1.msra.mxu0 0.0
      %1631 = vmatprep.subr.mxu0 0.0
      %1632 = vmatpush1.msra.mxu0 0.0
      %1633 = vmatprep.subr.mxu0 0.0
      %1634 = vmatpush1.msra.mxu0 0.0
      %1635 = vmatprep.subr.mxu0 0.0
      %1636 = vmatpush1.msra.mxu0 0.0
      %1637 = vmatprep.subr.mxu0 0.0
      %1638 = vmatpush1.msra.mxu0 0.0
      %1639 = vmatprep.subr.mxu0 0.0
      %1640 = vmatpush1.msra.mxu0 0.0
      %1641 = vmatprep.subr.mxu0 0.0
      %1642 = vmatpush1.msra.mxu0 0.0
      %1643 = vmatprep.subr.mxu0 0.0
      %1644 = vmatpush1.msra.mxu0 0.0
      %1645 = vmatprep.subr.mxu0 0.0
      %1646 = vmatpush1.msra.mxu0 0.0
      %1647 = vmatprep.subr.mxu0 0.0
      %1648 = vmatpush1.msra.mxu0 0.0
      %1649 = vmatprep.subr.mxu0 0.0
      %1650 = vmatpush1.msra.mxu0 0.0
      %1651 = vmatprep.subr.mxu0 0.0
      %1652 = vmatpush1.msra.mxu0 0.0
      %1653 = vmatprep.subr.mxu0 0.0
      %1654 = vmatpush1.msra.mxu0 0.0
      %1655 = vmatprep.mubr.f32.mxu0 0.0
      %1656 = vmatmul.mubr.f32.gmra.mrb[0].mxu0 %v1541
      %v1657 = vpop.f32.mrb[0].mxu0
      %v1658 = vadd.f32 0.0, %v1657
      %v1659 = vpop.f32.mrb[0].mxu0
      %1660 = vmatprep.mubr.f32.mxu0 0.0
      %1661 = vmatmul.mubr.f32.gmra.mrb[0].mxu0 %v1544
      %v1662 = vpop.f32.mrb[0].mxu0
      %v1663 = vadd.f32 0.0, %v1662
      %v1664 = vpop.f32.mrb[0].mxu0
      %1665 = vmatprep.mubr.f32.mxu0 0.0
      %1666 = vmatmul.mubr.f32.gmra.mrb[0].mxu0 %v1547
      %v1667 = vpop.f32.mrb[0].mxu0
      %v1668 = vadd.f32 0.0, %v1667
      %v1669 = vpop.f32.mrb[0].mxu0
      %1670 = vmatprep.mubr.f32.mxu0 0.0
      %1671 = vmatmul.mubr.f32.gmra.mrb[0].mxu0 %v1550
      %v1672 = vpop.f32.mrb[0].mxu0
      %v1673 = vadd.f32 0.0, %v1672
      %v1674 = vpop.f32.mrb[0].mxu0
      %1675 = vmatprep.mubr.f32.mxu0 0.0
      %1676 = vmatmul.mubr.f32.gmra.mrb[0].mxu0 %v1553
      %v1677 = vpop.f32.mrb[0].mxu0
      %v1678 = vadd.f32 0.0, %v1677
      %v1679 = vpop.f32.mrb[0].mxu0
      %1680 = vmatprep.mubr.f32.mxu0 0.0
      %1681 = vmatmul.mubr.f32.gmra.mrb[0].mxu0 %v1556
      %v1682 = vpop.f32.mrb[0].mxu0
      %v1683 = vadd.f32 0.0, %v1682
      %v1684 = vpop.f32.mrb[0].mxu0
      %1685 = vmatprep.mubr.f32.mxu0 0.0
      %1686 = vmatmul.mubr.f32.gmra.mrb[0].mxu0 %v1559
      %v1687 = vpop.f32.mrb[0].mxu0
      %v1688 = vadd.f32 0.0, %v1687
      %v1689 = vpop.f32.mrb[0].mxu0
      %1690 = vmatprep.mubr.f32.mxu0 0.0
      %1691 = vmatmul.mubr.f32.gmra.mrb[0].mxu0 %v1562
      %v1692 = vpop.f32.mrb[0].mxu0
      %v1693 = vadd.f32 0.0, %v1692
      %v1694 = vpop.f32.mrb[0].mxu0
      %1695 = vmatprep.mubr.f32.mxu0 0.0
      %1696 = vmatmul.mubr.f32.gmra.mrb[0].mxu0 %v1565
      %v1697 = vpop.f32.mrb[0].mxu0
      %v1698 = vadd.f32 0.0, %v1697
      %v1699 = vpop.f32.mrb[0].mxu0
      %1700 = vmatprep.mubr.f32.mxu0 0.0
      %1701 = vmatmul.mubr.f32.gmra.mrb[0].mxu0 %v1568
      %v1702 = vpop.f32.mrb[0].mxu0
      %v1703 = vadd.f32 0.0, %v1702
      %v1704 = vpop.f32.mrb[0].mxu0
      %1705 = vmatprep.mubr.f32.mxu0 0.0
      %1706 = vmatmul.mubr.f32.gmra.mrb[0].mxu0 %v1571
      %v1707 = vpop.f32.mrb[0].mxu0
      %v1708 = vadd.f32 0.0, %v1707
      %v1709 = vpop.f32.mrb[0].mxu0
      %1710 = vmatprep.mubr.f32.mxu0 0.0
      %1711 = vmatmul.mubr.f32.gmra.mrb[0].mxu0 %v1574
      %v1712 = vpop.f32.mrb[0].mxu0
      %v1713 = vadd.f32 0.0, %v1712
      %v1714 = vpop.f32.mrb[0].mxu0
      %1715 = vmatprep.mubr.f32.mxu0 0.0
      %1716 = vmatmul.mubr.f32.gmra.mrb[0].mxu0 %v1577
      %v1717 = vpop.f32.mrb[0].mxu0
      %v1718 = vadd.f32 0.0, %v1717
      %v1719 = vpop.f32.mrb[0].mxu0
      %1720 = vmatprep.mubr.f32.mxu0 0.0
      %1721 = vmatmul.mubr.f32.gmra.mrb[0].mxu0 %v1580
      %v1722 = vpop.f32.mrb[0].mxu0
      %v1723 = vadd.f32 0.0, %v1722
      %v1724 = vpop.f32.mrb[0].mxu0
      %1725 = vmatprep.mubr.f32.mxu0 0.0
      %1726 = vmatmul.mubr.f32.gmra.mrb[0].mxu0 %v1583
      %v1727 = vpop.f32.mrb[0].mxu0
      %v1728 = vadd.f32 0.0, %v1727
      %v1729 = vpop.f32.mrb[0].mxu0
      %1730 = vmatprep.mubr.f32.mxu0 0.0
      %1731 = vmatmul.mubr.f32.gmra.mrb[0].mxu0 %v1586
      %v1732 = vpop.f32.mrb[0].mxu0
      %v1733 = vadd.f32 0.0, %v1732
      %v1734 = vpop.f32.mrb[0].mxu0
      %1735 = vdwg.mxu0
      %v1736 = vadd.f32 %v1503, %v1658
      %v1737 = vadd.f32 %v1504, %v1663
      %v1738 = vadd.f32 %v1505, %v1668
      %v1739 = vadd.f32 %v1506, %v1673
      %v1740 = vadd.f32 %v1507, %v1678
      %v1741 = vadd.f32 %v1508, %v1683
      %v1742 = vadd.f32 %v1509, %v1688
      %v1743 = vadd.f32 %v1510, %v1693
      %v1744 = vadd.f32 %v1511, %v1698
      %v1745 = vadd.f32 %v1512, %v1703
      %v1746 = vadd.f32 %v1513, %v1708
      %v1747 = vadd.f32 %v1514, %v1713
      %v1748 = vadd.f32 %v1515, %v1718
      %v1749 = vadd.f32 %v1516, %v1723
      %v1750 = vadd.f32 %v1517, %v1728
      %v1751 = vadd.f32 %v1518, %v1733
      %v1752 = vld [vmem:[%s1521 + $0x1] sm:$0xff]
      %v1753 = vld [vmem:[%s1521 + $0x9] sm:$0xff]
      %v1754 = vld [vmem:[%s1521 + $0x19] sm:$0xff]
      %v1755 = vld [vmem:[%s1521 + $0x21] sm:$0xff]
      %v1756 = vld [vmem:[%s1521 + $0x31] sm:$0xff]
      %v1757 = vld [vmem:[%s1521 + $0x39] sm:$0xff]
      %v1758 = vld [vmem:[%s1521 + $0x49] sm:$0xff]
      %v1759 = vld [vmem:[%s1521 + $0x51] sm:$0xff]
      %v1760 = vld [vmem:[%s1521 + $0x61] sm:$0xff]
      %v1761 = vld [vmem:[%s1521 + $0x69] sm:$0xff]
      %v1762 = vld [vmem:[%s1521 + $0x79] sm:$0xff]
      %v1763 = vld [vmem:[%s1521 + $0x81] sm:$0xff]
      %v1764 = vld [vmem:[%s1521 + $0x91] sm:$0xff]
      %v1765 = vld [vmem:[%s1521 + $0x99] sm:$0xff]
      %v1766 = vld [vmem:[%s1521 + $0xa9] sm:$0xff]
      %v1767 = vld [vmem:[%s1521 + $0xb1] sm:$0xff]
      %s1768 = scalar_lea.vmem %s1, 28
      %v1769 = vld [vmem:[%s1768] sm:$0xf]
      %v1771 = vsel %vm202, %v1752, 0
      %v1774 = vsel %vm202, %v1753, 0
      %v1777 = vsel %vm202, %v1754, 0
      %v1780 = vsel %vm202, %v1755, 0
      %v1783 = vsel %vm202, %v1756, 0
      %v1786 = vsel %vm202, %v1757, 0
      %v1789 = vsel %vm202, %v1758, 0
      %v1792 = vsel %vm202, %v1759, 0
      %v1795 = vsel %vm202, %v1760, 0
      %v1798 = vsel %vm202, %v1761, 0
      %v1801 = vsel %vm202, %v1762, 0
      %v1804 = vsel %vm202, %v1763, 0
      %v1807 = vsel %vm202, %v1764, 0
      %v1810 = vsel %vm202, %v1765, 0
      %v1813 = vsel %vm202, %v1766, 0
      %v1816 = vsel %vm202, %v1767, 0
      %v1819 = vsel %vm251, %v1769, 0
      %1821 = vmatprep.subr.mxu0 0.0
      %1822 = vmatpush1.msra.mxu0 %v1819
      %1823 = vmatprep.subr.mxu0 0.0
      %1824 = vmatpush1.msra.mxu0 0.0
      %1825 = vmatprep.subr.mxu0 0.0
      %1826 = vmatpush1.msra.mxu0 0.0
      %1827 = vmatprep.subr.mxu0 0.0
      %1828 = vmatpush1.msra.mxu0 0.0
      %1829 = vmatprep.subr.mxu0 0.0
      %1830 = vmatpush1.msra.mxu0 0.0
      %1831 = vmatprep.subr.mxu0 0.0
      %1832 = vmatpush1.msra.mxu0 0.0
      %1833 = vmatprep.subr.mxu0 0.0
      %1834 = vmatpush1.msra.mxu0 0.0
      %1835 = vmatprep.subr.mxu0 0.0
      %1836 = vmatpush1.msra.mxu0 0.0
      %1837 = vmatprep.subr.mxu0 0.0
      %1838 = vmatpush1.msra.mxu0 0.0
      %1839 = vmatprep.subr.mxu0 0.0
      %1840 = vmatpush1.msra.mxu0 0.0
      %1841 = vmatprep.subr.mxu0 0.0
      %1842 = vmatpush1.msra.mxu0 0.0
      %1843 = vmatprep.subr.mxu0 0.0
      %1844 = vmatpush1.msra.mxu0 0.0
      %1845 = vmatprep.subr.mxu0 0.0
      %1846 = vmatpush1.msra.mxu0 0.0
      %1847 = vmatprep.subr.mxu0 0.0
      %1848 = vmatpush1.msra.mxu0 0.0
      %1849 = vmatprep.subr.mxu0 0.0
      %1850 = vmatpush1.msra.mxu0 0.0
      %1851 = vmatprep.subr.mxu0 0.0
      %1852 = vmatpush1.msra.mxu0 0.0
      %1853 = vmatprep.subr.mxu0 0.0
      %1854 = vmatpush1.msra.mxu0 0.0
      %1855 = vmatprep.subr.mxu0 0.0
      %1856 = vmatpush1.msra.mxu0 0.0
      %1857 = vmatprep.subr.mxu0 0.0
      %1858 = vmatpush1.msra.mxu0 0.0
      %1859 = vmatprep.subr.mxu0 0.0
      %1860 = vmatpush1.msra.mxu0 0.0
      %1861 = vmatprep.subr.mxu0 0.0
      %1862 = vmatpush1.msra.mxu0 0.0
      %1863 = vmatprep.subr.mxu0 0.0
      %1864 = vmatpush1.msra.mxu0 0.0
      %1865 = vmatprep.subr.mxu0 0.0
      %1866 = vmatpush1.msra.mxu0 0.0
      %1867 = vmatprep.subr.mxu0 0.0
      %1868 = vmatpush1.msra.mxu0 0.0
      %1869 = vmatprep.subr.mxu0 0.0
      %1870 = vmatpush1.msra.mxu0 0.0
      %1871 = vmatprep.subr.mxu0 0.0
      %1872 = vmatpush1.msra.mxu0 0.0
      %1873 = vmatprep.subr.mxu0 0.0
      %1874 = vmatpush1.msra.mxu0 0.0
      %1875 = vmatprep.subr.mxu0 0.0
      %1876 = vmatpush1.msra.mxu0 0.0
      %1877 = vmatprep.subr.mxu0 0.0
      %1878 = vmatpush1.msra.mxu0 0.0
      %1879 = vmatprep.subr.mxu0 0.0
      %1880 = vmatpush1.msra.mxu0 0.0
      %1881 = vmatprep.subr.mxu0 0.0
      %1882 = vmatpush1.msra.mxu0 0.0
      %1883 = vmatprep.subr.mxu0 0.0
      %1884 = vmatpush1.msra.mxu0 0.0
      %1885 = vmatprep.mubr.f32.mxu0 0.0
      %1886 = vmatmul.mubr.f32.gmra.mrb[0].mxu0 %v1771
      %v1887 = vpop.f32.mrb[0].mxu0
      %v1888 = vadd.f32 0.0, %v1887
      %v1889 = vpop.f32.mrb[0].mxu0
      %1890 = vmatprep.mubr.f32.mxu0 0.0
      %1891 = vmatmul.mubr.f32.gmra.mrb[0].mxu0 %v1774
      %v1892 = vpop.f32.mrb[0].mxu0
      %v1893 = vadd.f32 0.0, %v1892
      %v1894 = vpop.f32.mrb[0].mxu0
      %1895 = vmatprep.mubr.f32.mxu0 0.0
      %1896 = vmatmul.mubr.f32.gmra.mrb[0].mxu0 %v1777
      %v1897 = vpop.f32.mrb[0].mxu0
      %v1898 = vadd.f32 0.0, %v1897
      %v1899 = vpop.f32.mrb[0].mxu0
      %1900 = vmatprep.mubr.f32.mxu0 0.0
      %1901 = vmatmul.mubr.f32.gmra.mrb[0].mxu0 %v1780
      %v1902 = vpop.f32.mrb[0].mxu0
      %v1903 = vadd.f32 0.0, %v1902
      %v1904 = vpop.f32.mrb[0].mxu0
      %1905 = vmatprep.mubr.f32.mxu0 0.0
      %1906 = vmatmul.mubr.f32.gmra.mrb[0].mxu0 %v1783
      %v1907 = vpop.f32.mrb[0].mxu0
      %v1908 = vadd.f32 0.0, %v1907
      %v1909 = vpop.f32.mrb[0].mxu0
      %1910 = vmatprep.mubr.f32.mxu0 0.0
      %1911 = vmatmul.mubr.f32.gmra.mrb[0].mxu0 %v1786
      %v1912 = vpop.f32.mrb[0].mxu0
      %v1913 = vadd.f32 0.0, %v1912
      %v1914 = vpop.f32.mrb[0].mxu0
      %1915 = vmatprep.mubr.f32.mxu0 0.0
      %1916 = vmatmul.mubr.f32.gmra.mrb[0].mxu0 %v1789
      %v1917 = vpop.f32.mrb[0].mxu0
      %v1918 = vadd.f32 0.0, %v1917
      %v1919 = vpop.f32.mrb[0].mxu0
      %1920 = vmatprep.mubr.f32.mxu0 0.0
      %1921 = vmatmul.mubr.f32.gmra.mrb[0].mxu0 %v1792
      %v1922 = vpop.f32.mrb[0].mxu0
      %v1923 = vadd.f32 0.0, %v1922
      %v1924 = vpop.f32.mrb[0].mxu0
      %1925 = vmatprep.mubr.f32.mxu0 0.0
      %1926 = vmatmul.mubr.f32.gmra.mrb[0].mxu0 %v1795
      %v1927 = vpop.f32.mrb[0].mxu0
      %v1928 = vadd.f32 0.0, %v1927
      %v1929 = vpop.f32.mrb[0].mxu0
      %1930 = vmatprep.mubr.f32.mxu0 0.0
      %1931 = vmatmul.mubr.f32.gmra.mrb[0].mxu0 %v1798
      %v1932 = vpop.f32.mrb[0].mxu0
      %v1933 = vadd.f32 0.0, %v1932
      %v1934 = vpop.f32.mrb[0].mxu0
      %1935 = vmatprep.mubr.f32.mxu0 0.0
      %1936 = vmatmul.mubr.f32.gmra.mrb[0].mxu0 %v1801
      %v1937 = vpop.f32.mrb[0].mxu0
      %v1938 = vadd.f32 0.0, %v1937
      %v1939 = vpop.f32.mrb[0].mxu0
      %1940 = vmatprep.mubr.f32.mxu0 0.0
      %1941 = vmatmul.mubr.f32.gmra.mrb[0].mxu0 %v1804
      %v1942 = vpop.f32.mrb[0].mxu0
      %v1943 = vadd.f32 0.0, %v1942
      %v1944 = vpop.f32.mrb[0].mxu0
      %1945 = vmatprep.mubr.f32.mxu0 0.0
      %1946 = vmatmul.mubr.f32.gmra.mrb[0].mxu0 %v1807
      %v1947 = vpop.f32.mrb[0].mxu0
      %v1948 = vadd.f32 0.0, %v1947
      %v1949 = vpop.f32.mrb[0].mxu0
      %1950 = vmatprep.mubr.f32.mxu0 0.0
      %1951 = vmatmul.mubr.f32.gmra.mrb[0].mxu0 %v1810
      %v1952 = vpop.f32.mrb[0].mxu0
      %v1953 = vadd.f32 0.0, %v1952
      %v1954 = vpop.f32.mrb[0].mxu0
      %1955 = vmatprep.mubr.f32.mxu0 0.0
      %1956 = vmatmul.mubr.f32.gmra.mrb[0].mxu0 %v1813
      %v1957 = vpop.f32.mrb[0].mxu0
      %v1958 = vadd.f32 0.0, %v1957
      %v1959 = vpop.f32.mrb[0].mxu0
      %1960 = vmatprep.mubr.f32.mxu0 0.0
      %1961 = vmatmul.mubr.f32.gmra.mrb[0].mxu0 %v1816
      %v1962 = vpop.f32.mrb[0].mxu0
      %v1963 = vadd.f32 0.0, %v1962
      %v1964 = vpop.f32.mrb[0].mxu0
      %1965 = vdwg.mxu0
      %v1966 = vadd.f32 %v1736, %v1888
      %v1967 = vadd.f32 %v1737, %v1893
      %v1968 = vadd.f32 %v1738, %v1898
      %v1969 = vadd.f32 %v1739, %v1903
      %v1970 = vadd.f32 %v1740, %v1908
      %v1971 = vadd.f32 %v1741, %v1913
      %v1972 = vadd.f32 %v1742, %v1918
      %v1973 = vadd.f32 %v1743, %v1923
      %v1974 = vadd.f32 %v1744, %v1928
      %v1975 = vadd.f32 %v1745, %v1933
      %v1976 = vadd.f32 %v1746, %v1938
      %v1977 = vadd.f32 %v1747, %v1943
      %v1978 = vadd.f32 %v1748, %v1948
      %v1979 = vadd.f32 %v1749, %v1953
      %v1980 = vadd.f32 %v1750, %v1958
      %v1981 = vadd.f32 %v1751, %v1963
      %v1982 = vld [vmem:[%s1521 + $0x2] sm:$0xff]
      %v1983 = vld [vmem:[%s1521 + $0xa] sm:$0xff]
      %v1984 = vld [vmem:[%s1521 + $0x1a] sm:$0xff]
      %v1985 = vld [vmem:[%s1521 + $0x22] sm:$0xff]
      %v1986 = vld [vmem:[%s1521 + $0x32] sm:$0xff]
      %v1987 = vld [vmem:[%s1521 + $0x3a] sm:$0xff]
      %v1988 = vld [vmem:[%s1521 + $0x4a] sm:$0xff]
      %v1989 = vld [vmem:[%s1521 + $0x52] sm:$0xff]
      %v1990 = vld [vmem:[%s1521 + $0x62] sm:$0xff]
      %v1991 = vld [vmem:[%s1521 + $0x6a] sm:$0xff]
      %v1992 = vld [vmem:[%s1521 + $0x7a] sm:$0xff]
      %v1993 = vld [vmem:[%s1521 + $0x82] sm:$0xff]
      %v1994 = vld [vmem:[%s1521 + $0x92] sm:$0xff]
      %v1995 = vld [vmem:[%s1521 + $0x9a] sm:$0xff]
      %v1996 = vld [vmem:[%s1521 + $0xaa] sm:$0xff]
      %v1997 = vld [vmem:[%s1521 + $0xb2] sm:$0xff]
      %s1998 = scalar_lea.vmem %s1, 32
      %v1999 = vld [vmem:[%s1998] sm:$0xf]
      %v2001 = vsel %vm202, %v1982, 0
      %v2004 = vsel %vm202, %v1983, 0
      %v2007 = vsel %vm202, %v1984, 0
      %v2010 = vsel %vm202, %v1985, 0
      %v2013 = vsel %vm202, %v1986, 0
      %v2016 = vsel %vm202, %v1987, 0
      %v2019 = vsel %vm202, %v1988, 0
      %v2022 = vsel %vm202, %v1989, 0
      %v2025 = vsel %vm202, %v1990, 0
      %v2028 = vsel %vm202, %v1991, 0
      %v2031 = vsel %vm202, %v1992, 0
      %v2034 = vsel %vm202, %v1993, 0
      %v2037 = vsel %vm202, %v1994, 0
      %v2040 = vsel %vm202, %v1995, 0
      %v2043 = vsel %vm202, %v1996, 0
      %v2046 = vsel %vm202, %v1997, 0
      %v2049 = vsel %vm251, %v1999, 0
      %2051 = vmatprep.subr.mxu0 0.0
      %2052 = vmatpush1.msra.mxu0 %v2049
      %2053 = vmatprep.subr.mxu0 0.0
      %2054 = vmatpush1.msra.mxu0 0.0
      %2055 = vmatprep.subr.mxu0 0.0
      %2056 = vmatpush1.msra.mxu0 0.0
      %2057 = vmatprep.subr.mxu0 0.0
      %2058 = vmatpush1.msra.mxu0 0.0
      %2059 = vmatprep.subr.mxu0 0.0
      %2060 = vmatpush1.msra.mxu0 0.0
      %2061 = vmatprep.subr.mxu0 0.0
      %2062 = vmatpush1.msra.mxu0 0.0
      %2063 = vmatprep.subr.mxu0 0.0
      %2064 = vmatpush1.msra.mxu0 0.0
      %2065 = vmatprep.subr.mxu0 0.0
      %2066 = vmatpush1.msra.mxu0 0.0
      %2067 = vmatprep.subr.mxu0 0.0
      %2068 = vmatpush1.msra.mxu0 0.0
      %2069 = vmatprep.subr.mxu0 0.0
      %2070 = vmatpush1.msra.mxu0 0.0
      %2071 = vmatprep.subr.mxu0 0.0
      %2072 = vmatpush1.msra.mxu0 0.0
      %2073 = vmatprep.subr.mxu0 0.0
      %2074 = vmatpush1.msra.mxu0 0.0
      %2075 = vmatprep.subr.mxu0 0.0
      %2076 = vmatpush1.msra.mxu0 0.0
      %2077 = vmatprep.subr.mxu0 0.0
      %2078 = vmatpush1.msra.mxu0 0.0
      %2079 = vmatprep.subr.mxu0 0.0
      %2080 = vmatpush1.msra.mxu0 0.0
      %2081 = vmatprep.subr.mxu0 0.0
      %2082 = vmatpush1.msra.mxu0 0.0
      %2083 = vmatprep.subr.mxu0 0.0
      %2084 = vmatpush1.msra.mxu0 0.0
      %2085 = vmatprep.subr.mxu0 0.0
      %2086 = vmatpush1.msra.mxu0 0.0
      %2087 = vmatprep.subr.mxu0 0.0
      %2088 = vmatpush1.msra.mxu0 0.0
      %2089 = vmatprep.subr.mxu0 0.0
      %2090 = vmatpush1.msra.mxu0 0.0
      %2091 = vmatprep.subr.mxu0 0.0
      %2092 = vmatpush1.msra.mxu0 0.0
      %2093 = vmatprep.subr.mxu0 0.0
      %2094 = vmatpush1.msra.mxu0 0.0
      %2095 = vmatprep.subr.mxu0 0.0
      %2096 = vmatpush1.msra.mxu0 0.0
      %2097 = vmatprep.subr.mxu0 0.0
      %2098 = vmatpush1.msra.mxu0 0.0
      %2099 = vmatprep.subr.mxu0 0.0
      %2100 = vmatpush1.msra.mxu0 0.0
      %2101 = vmatprep.subr.mxu0 0.0
      %2102 = vmatpush1.msra.mxu0 0.0
      %2103 = vmatprep.subr.mxu0 0.0
      %2104 = vmatpush1.msra.mxu0 0.0
      %2105 = vmatprep.subr.mxu0 0.0
      %2106 = vmatpush1.msra.mxu0 0.0
      %2107 = vmatprep.subr.mxu0 0.0
      %2108 = vmatpush1.msra.mxu0 0.0
      %2109 = vmatprep.subr.mxu0 0.0
      %2110 = vmatpush1.msra.mxu0 0.0
      %2111 = vmatprep.subr.mxu0 0.0
      %2112 = vmatpush1.msra.mxu0 0.0
      %2113 = vmatprep.subr.mxu0 0.0
      %2114 = vmatpush1.msra.mxu0 0.0
      %2115 = vmatprep.mubr.f32.mxu0 0.0
      %2116 = vmatmul.mubr.f32.gmra.mrb[0].mxu0 %v2001
      %v2117 = vpop.f32.mrb[0].mxu0
      %v2118 = vadd.f32 0.0, %v2117
      %v2119 = vpop.f32.mrb[0].mxu0
      %2120 = vmatprep.mubr.f32.mxu0 0.0
      %2121 = vmatmul.mubr.f32.gmra.mrb[0].mxu0 %v2004
      %v2122 = vpop.f32.mrb[0].mxu0
      %v2123 = vadd.f32 0.0, %v2122
      %v2124 = vpop.f32.mrb[0].mxu0
      %2125 = vmatprep.mubr.f32.mxu0 0.0
      %2126 = vmatmul.mubr.f32.gmra.mrb[0].mxu0 %v2007
      %v2127 = vpop.f32.mrb[0].mxu0
      %v2128 = vadd.f32 0.0, %v2127
      %v2129 = vpop.f32.mrb[0].mxu0
      %2130 = vmatprep.mubr.f32.mxu0 0.0
      %2131 = vmatmul.mubr.f32.gmra.mrb[0].mxu0 %v2010
      %v2132 = vpop.f32.mrb[0].mxu0
      %v2133 = vadd.f32 0.0, %v2132
      %v2134 = vpop.f32.mrb[0].mxu0
      %2135 = vmatprep.mubr.f32.mxu0 0.0
      %2136 = vmatmul.mubr.f32.gmra.mrb[0].mxu0 %v2013
      %v2137 = vpop.f32.mrb[0].mxu0
      %v2138 = vadd.f32 0.0, %v2137
      %v2139 = vpop.f32.mrb[0].mxu0
      %2140 = vmatprep.mubr.f32.mxu0 0.0
      %2141 = vmatmul.mubr.f32.gmra.mrb[0].mxu0 %v2016
      %v2142 = vpop.f32.mrb[0].mxu0
      %v2143 = vadd.f32 0.0, %v2142
      %v2144 = vpop.f32.mrb[0].mxu0
      %2145 = vmatprep.mubr.f32.mxu0 0.0
      %2146 = vmatmul.mubr.f32.gmra.mrb[0].mxu0 %v2019
      %v2147 = vpop.f32.mrb[0].mxu0
      %v2148 = vadd.f32 0.0, %v2147
      %v2149 = vpop.f32.mrb[0].mxu0
      %2150 = vmatprep.mubr.f32.mxu0 0.0
      %2151 = vmatmul.mubr.f32.gmra.mrb[0].mxu0 %v2022
      %v2152 = vpop.f32.mrb[0].mxu0
      %v2153 = vadd.f32 0.0, %v2152
      %v2154 = vpop.f32.mrb[0].mxu0
      %2155 = vmatprep.mubr.f32.mxu0 0.0
      %2156 = vmatmul.mubr.f32.gmra.mrb[0].mxu0 %v2025
      %v2157 = vpop.f32.mrb[0].mxu0
      %v2158 = vadd.f32 0.0, %v2157
      %v2159 = vpop.f32.mrb[0].mxu0
      %2160 = vmatprep.mubr.f32.mxu0 0.0
      %2161 = vmatmul.mubr.f32.gmra.mrb[0].mxu0 %v2028
      %v2162 = vpop.f32.mrb[0].mxu0
      %v2163 = vadd.f32 0.0, %v2162
      %v2164 = vpop.f32.mrb[0].mxu0
      %2165 = vmatprep.mubr.f32.mxu0 0.0
      %2166 = vmatmul.mubr.f32.gmra.mrb[0].mxu0 %v2031
      %v2167 = vpop.f32.mrb[0].mxu0
      %v2168 = vadd.f32 0.0, %v2167
      %v2169 = vpop.f32.mrb[0].mxu0
      %2170 = vmatprep.mubr.f32.mxu0 0.0
      %2171 = vmatmul.mubr.f32.gmra.mrb[0].mxu0 %v2034
      %v2172 = vpop.f32.mrb[0].mxu0
      %v2173 = vadd.f32 0.0, %v2172
      %v2174 = vpop.f32.mrb[0].mxu0
      %2175 = vmatprep.mubr.f32.mxu0 0.0
      %2176 = vmatmul.mubr.f32.gmra.mrb[0].mxu0 %v2037
      %v2177 = vpop.f32.mrb[0].mxu0
      %v2178 = vadd.f32 0.0, %v2177
      %v2179 = vpop.f32.mrb[0].mxu0
      %2180 = vmatprep.mubr.f32.mxu0 0.0
      %2181 = vmatmul.mubr.f32.gmra.mrb[0].mxu0 %v2040
      %v2182 = vpop.f32.mrb[0].mxu0
      %v2183 = vadd.f32 0.0, %v2182
      %v2184 = vpop.f32.mrb[0].mxu0
      %2185 = vmatprep.mubr.f32.mxu0 0.0
      %2186 = vmatmul.mubr.f32.gmra.mrb[0].mxu0 %v2043
      %v2187 = vpop.f32.mrb[0].mxu0
      %v2188 = vadd.f32 0.0, %v2187
      %v2189 = vpop.f32.mrb[0].mxu0
      %2190 = vmatprep.mubr.f32.mxu0 0.0
      %2191 = vmatmul.mubr.f32.gmra.mrb[0].mxu0 %v2046
      %v2192 = vpop.f32.mrb[0].mxu0
      %v2193 = vadd.f32 0.0, %v2192
      %v2194 = vpop.f32.mrb[0].mxu0
      %2195 = vdwg.mxu0
      %v2196 = vadd.f32 %v1966, %v2118
      %v2197 = vadd.f32 %v1967, %v2123
      %v2198 = vadd.f32 %v1968, %v2128
      %v2199 = vadd.f32 %v1969, %v2133
      %v2200 = vadd.f32 %v1970, %v2138
      %v2201 = vadd.f32 %v1971, %v2143
      %v2202 = vadd.f32 %v1972, %v2148
      %v2203 = vadd.f32 %v1973, %v2153
      %v2204 = vadd.f32 %v1974, %v2158
      %v2205 = vadd.f32 %v1975, %v2163
      %v2206 = vadd.f32 %v1976, %v2168
      %v2207 = vadd.f32 %v1977, %v2173
      %v2208 = vadd.f32 %v1978, %v2178
      %v2209 = vadd.f32 %v1979, %v2183
      %v2210 = vadd.f32 %v1980, %v2188
      %v2211 = vadd.f32 %v1981, %v2193
      %v2212 = vadd.f32 %v2196, %v2197
      %v2213 = vadd.f32 %v2212, %v2198
      %v2214 = vadd.f32 %v2213, %v2199
      %v2215 = vadd.f32 %v2214, %v2200
      %v2216 = vadd.f32 %v2215, %v2201
      %v2217 = vadd.f32 %v2216, %v2202
      %v2218 = vadd.f32 %v2217, %v2203
      %v2219 = vadd.f32 %v2218, %v2204
      %v2220 = vadd.f32 %v2219, %v2205
      %v2221 = vadd.f32 %v2220, %v2206
      %v2222 = vadd.f32 %v2221, %v2207
      %v2223 = vadd.f32 %v2222, %v2208
      %v2224 = vadd.f32 %v2223, %v2209
      %v2225 = vadd.f32 %v2224, %v2210
      %v2226 = vadd.f32 %v2225, %v2211
      %v2227 = vrot.slane %v2226, 4
      %v2228 = vadd.f32 %v2226, %v2227
      %v2229 = vrot.slane %v2228, 2
      %v2230 = vadd.f32 %v2228, %v2229
      %v2231 = vrot.slane %v2230, 1
      %v2232 = vadd.f32 %v2230, %v2231
      %2233 = vst [vmem:[%s161] sm:$0x1] %v2232
      %v2234 = vmul.f32 %v2196, %v2196
      %v2235 = vmul.f32 %v2197, %v2197
      %v2236 = vmul.f32 %v2198, %v2198
      %v2237 = vmul.f32 %v2199, %v2199
      %v2238 = vmul.f32 %v2200, %v2200
      %v2239 = vmul.f32 %v2201, %v2201
      %v2240 = vmul.f32 %v2202, %v2202
      %v2241 = vmul.f32 %v2203, %v2203
      %v2242 = vmul.f32 %v2204, %v2204
      %v2243 = vmul.f32 %v2205, %v2205
      %v2244 = vmul.f32 %v2206, %v2206
      %v2245 = vmul.f32 %v2207, %v2207
      %v2246 = vmul.f32 %v2208, %v2208
      %v2247 = vmul.f32 %v2209, %v2209
      %v2248 = vmul.f32 %v2210, %v2210
      %v2249 = vmul.f32 %v2211, %v2211
      %v2250 = vadd.f32 %v2234, %v2235
      %v2251 = vadd.f32 %v2250, %v2236
      %v2252 = vadd.f32 %v2251, %v2237
      %v2253 = vadd.f32 %v2252, %v2238
      %v2254 = vadd.f32 %v2253, %v2239
      %v2255 = vadd.f32 %v2254, %v2240
      %v2256 = vadd.f32 %v2255, %v2241
      %v2257 = vadd.f32 %v2256, %v2242
      %v2258 = vadd.f32 %v2257, %v2243
      %v2259 = vadd.f32 %v2258, %v2244
      %v2260 = vadd.f32 %v2259, %v2245
      %v2261 = vadd.f32 %v2260, %v2246
      %v2262 = vadd.f32 %v2261, %v2247
      %v2263 = vadd.f32 %v2262, %v2248
      %v2264 = vadd.f32 %v2263, %v2249
      %v2265 = vrot.slane %v2264, 4
      %v2266 = vadd.f32 %v2264, %v2265
      %v2267 = vrot.slane %v2266, 2
      %v2268 = vadd.f32 %v2266, %v2267
      %v2269 = vrot.slane %v2268, 1
      %v2270 = vadd.f32 %v2268, %v2269
      %2271 = vst [vmem:[%s161 + $0x1] sm:$0x1] %v2270
      %s2272 = smul.u32 %s17, 2
      %s2273 = sadd.s32 %s2272, %s18
      %p2274 = scmp.lt.s32.totalorder %s2273, 3
      %s2275 = scalar_select %p2274, %s2273, 3
      %s2276 = smul.addr %s2275, 8
      %s2277 = scalar_lea.vmem %s2, %s2276
      // Predicated region
      $region29: #{conv_bn_layer.2} parent=27 // pred_check
        %p2278 = pneg %p94
      $region30: #{conv_bn_layer.2} parent=27 // pred_check_branch
        %2280 = sbr.rel (%p2278) target = $region32
      $region31: #{conv_bn_layer.2} parent=27 // pred_region
        %s2281 = smul.u32 %s17, 2
        %s2282 = sadd.s32 %s2281, %s18
      $region32: #{conv_bn_layer.2} parent=27 // pred_fallthru
        _
    $region28: #{conv_bn_layer.2} parent=5 // pred_fallthru
      _
    %p2283 = scmp.le.s32.totalorder 2, %s8
    // Predicated region
    $region33: #{conv_bn_layer.2} parent=5 // pred_check
      %p2284 = pneg %p2283
    $region34: #{conv_bn_layer.2} parent=5 // pred_check_branch
      %2286 = sbr.rel (%p2284) target = $region36
    $region35: #{conv_bn_layer.2} parent=5 // pred_region
      %s2287 = ssub.s32 %s8, 2
      // Predicated region
      $region37: #{conv_bn_layer.2} parent=35 // pred_check
        %p2288 = pneg %p100
      $region38: #{conv_bn_layer.2} parent=35 // pred_check_branch
        %2290 = sbr.rel (%p2288) target = $region40
      $region39: #{conv_bn_layer.2} parent=35 // pred_region
        %s2291 = smul.u32 %s19, 2
        %s2292 = sadd.s32 %s2291, %s20
        %p2293 = scmp.lt.s32.totalorder %s2292, 3
        %s2294 = scalar_select %p2293, %s2292, 3
        %s2295 = smul.addr %s2294, 8
        %s2296 = scalar_lea.vmem %s2, %s2295
      $region40: #{conv_bn_layer.2} parent=35 // pred_fallthru
        _
    $region36: #{conv_bn_layer.2} parent=5 // pred_fallthru
      _
  $region6: #{conv_bn_layer.2} parent=0 // loop_footer
    %s12 = sadd.s32 1, %s8
  $region7: #{conv_bn_layer.2} parent=0 // loop_footer_branch
    %7 = sbr.rel target = $region3
  $region8: #{conv_bn_layer.2} parent=0 // loop_exit
    _

// kernel: conv_bn_layer.3
$region0: #{conv_bn_layer.3}
  #allocation0 [shape = 'u32[]', space=smem, size = 0x4, offset = 0x4, fixed_abs, tag = 'smem constant byte address 0x4 - core index']
  #allocation1 [shape = 'u32[144,128]{1,0:T(1,128)}', space=vmem, size = 0x12000, scoped, tag = 'internal scratch']
  %s0 = inlined_call_operand.vmem [shape: f32[2,18,18,4], index: 0, kind: input, shape index: {}]
  %s1 = inlined_call_operand.vmem [shape: f32[9,4,128], index: 1, kind: input, shape index: {}]
  %s2 = inlined_call_operand.vmem [shape: f32[1,128], index: 2, kind: input, shape index: {}]
  %s3 = inlined_call_operand.vmem [shape: f32[1,128], index: 3, kind: input, shape index: {}]
  %s4 = inlined_call_operand.vmem [shape: f32[512,128], index: 4, kind: output, shape index: {}]
  %s5 = sld [smem:[#allocation0]]
  $region49: #{conv_bn_layer.3} parent=0
    _
  %s7 = ssub.s32 1, %s5
  %s8 = scalar_select 0, %s7, %s5
  loop: start=0, step=1, limit=6
  $region2: #{conv_bn_layer.3} parent=0 // loop_pre_header
    _
  $region3: #{conv_bn_layer.3} parent=0 // loop_header
    %s10 = sphi 0, %s14
    %p11 = scmp.ge.s32.totalorder %s10, 6
    %s17 = sphi 0, %s29
    %s18 = sphi 0, %s25
    %s19 = sphi 0, %s17
    %s20 = sphi 0, %s18
    %s21 = sphi 0, %s19
    %s22 = sphi 0, %s20
    %s32 = sphi 0, %s34
    %s35 = sphi 0, %s32
    %s36 = sphi 0, %s35
    %s52 = sphi 0, %s36
    %s56 = sphi 0, %s56
    %s58 = sphi 0, %s56
    %s59 = sphi 0, %s58
    %s73 = sphi 0, %s59
    %s77 = sphi 0, %s77
    %s79 = sphi 0, %s77
    %s80 = sphi 0, %s79
    %s94 = sphi 0, %s80
    %s98 = sphi 0, %s98
    %s100 = sphi 0, %s98
    %s101 = sphi 0, %s100
    %s115 = sphi 0, %s101
    %s125 = sphi 0, %s127
    %s128 = sphi 0, %s125
    %s129 = sphi 0, %s128
    %s145 = sphi 0, %s129
  $region4: #{conv_bn_layer.3} parent=0 // loop_header_branch
    %13 = sbr.rel (%p11) target = $region8
  $region5: #{conv_bn_layer.3} parent=0 // loop_body
    %s15 = ssub.s32 %s10, 1
    %s16 = ssub.s32 %s10, 2
    %s23 = sadd.s32 1, %s18
    %p24 = scmp.ge.s32.totalorder %s23, 2
    %s25 = scalar_select %p24, 0, %s23
    %s26 = sadd.s32 1, %s17
    %s27 = scalar_select %p24, %s26, %s17
    %p28 = scmp.ge.s32.totalorder %s27, 2
    %s29 = scalar_select %p28, 0, %s27
    %s30 = ssub.s32 %s17, %s29
    %p31 = scmp.eq.s32.totalorder %s30, 0
    %s33 = sadd.s32 %s32, 1
    %s34 = scalar_select %p31, %s32, %s33
    %p37 = pneg %p31
    %p38 = scmp.eq.s32.totalorder %s10, 3
    %p39 = por %p37, %p38
    %p40 = scmp.ne.s32.totalorder %s32, %s35
    %p41 = scmp.eq.s32.totalorder %s10, 0
    %p42 = por %p40, %p41
    %p43 = scmp.ne.s32.totalorder %s32, %s35
    %p44 = scmp.eq.s32.totalorder %s15, 3
    %p45 = por %p43, %p44
    %p46 = scmp.ne.s32.totalorder %s35, %s36
    %p47 = scmp.eq.s32.totalorder %s15, 0
    %p48 = por %p46, %p47
    %p49 = scmp.ne.s32.totalorder %s35, %s36
    %p50 = scmp.eq.s32.totalorder %s16, 3
    %p51 = por %p49, %p50
    %p53 = scmp.ne.s32.totalorder %s36, %s52
    %p54 = scmp.eq.s32.totalorder %s16, 0
    %p55 = por %p53, %p54
    %s57 = sadd.s32 %s56, 1
    %p60 = scmp.eq.s32.totalorder %s10, 3
    %p61 = scmp.ne.s32.totalorder %s56, %s58
    %p62 = scmp.eq.s32.totalorder %s10, 0
    %p63 = por %p61, %p62
    %p64 = scmp.ne.s32.totalorder %s56, %s58
    %p65 = scmp.eq.s32.totalorder %s15, 3
    %p66 = por %p64, %p65
    %p67 = scmp.ne.s32.totalorder %s58, %s59
    %p68 = scmp.eq.s32.totalorder %s15, 0
    %p69 = por %p67, %p68
    %p70 = scmp.ne.s32.totalorder %s58, %s59
    %p71 = scmp.eq.s32.totalorder %s16, 3
    %p72 = por %p70, %p71
    %p74 = scmp.ne.s32.totalorder %s59, %s73
    %p75 = scmp.eq.s32.totalorder %s16, 0
    %p76 = por %p74, %p75
    %s78 = sadd.s32 %s77, 1
    %p81 = scmp.eq.s32.totalorder %s10, 3
    %p82 = scmp.ne.s32.totalorder %s77, %s79
    %p83 = scmp.eq.s32.totalorder %s10, 0
    %p84 = por %p82, %p83
    %p85 = scmp.ne.s32.totalorder %s77, %s79
    %p86 = scmp.eq.s32.totalorder %s15, 3
    %p87 = por %p85, %p86
    %p88 = scmp.ne.s32.totalorder %s79, %s80
    %p89 = scmp.eq.s32.totalorder %s15, 0
    %p90 = por %p88, %p89
    %p91 = scmp.ne.s32.totalorder %s79, %s80
    %p92 = scmp.eq.s32.totalorder %s16, 3
    %p93 = por %p91, %p92
    %p95 = scmp.ne.s32.totalorder %s80, %s94
    %p96 = scmp.eq.s32.totalorder %s16, 0
    %p97 = por %p95, %p96
    %s99 = sadd.s32 %s98, 1
    %p102 = scmp.eq.s32.totalorder %s10, 3
    %p103 = scmp.ne.s32.totalorder %s98, %s100
    %p104 = scmp.eq.s32.totalorder %s10, 0
    %p105 = por %p103, %p104
    %p106 = scmp.ne.s32.totalorder %s98, %s100
    %p107 = scmp.eq.s32.totalorder %s15, 3
    %p108 = por %p106, %p107
    %p109 = scmp.ne.s32.totalorder %s100, %s101
    %p110 = scmp.eq.s32.totalorder %s15, 0
    %p111 = por %p109, %p110
    %p112 = scmp.ne.s32.totalorder %s100, %s101
    %p113 = scmp.eq.s32.totalorder %s16, 3
    %p114 = por %p112, %p113
    %p116 = scmp.ne.s32.totalorder %s101, %s115
    %p117 = scmp.eq.s32.totalorder %s16, 0
    %p118 = por %p116, %p117
    %s119 = smul.u32 %s17, 2
    %s120 = sadd.s32 %s119, %s18
    %s121 = smul.u32 %s29, 2
    %s122 = sadd.s32 %s121, %s25
    %s123 = ssub.s32 %s120, %s122
    %p124 = scmp.eq.s32.totalorder %s123, 0
    %s126 = sadd.s32 %s125, 1
    %s127 = scalar_select %p124, %s125, %s126
    %p130 = pneg %p124
    %p131 = scmp.eq.s32.totalorder %s10, 3
    %p132 = por %p130, %p131
    %p133 = scmp.ne.s32.totalorder %s125, %s128
    %p134 = scmp.eq.s32.totalorder %s10, 0
    %p135 = por %p133, %p134
    %p136 = scmp.ne.s32.totalorder %s125, %s128
    %p137 = scmp.eq.s32.totalorder %s15, 3
    %p138 = por %p136, %p137
    %p139 = scmp.ne.s32.totalorder %s128, %s129
    %p140 = scmp.eq.s32.totalorder %s15, 0
    %p141 = por %p139, %p140
    %p142 = scmp.ne.s32.totalorder %s128, %s129
    %p143 = scmp.eq.s32.totalorder %s16, 3
    %p144 = por %p142, %p143
    %p146 = scmp.ne.s32.totalorder %s129, %s145
    %p147 = scmp.eq.s32.totalorder %s16, 0
    %p148 = por %p146, %p147
    %p149 = scmp.le.s32.totalorder 1, %s10
    %p150 = scmp.lt.s32.totalorder %s10, 5
    %p151 = pnand %p149, %p150
    %p152 = pneg %p151
    // Predicated region
    $region9: #{conv_bn_layer.3} parent=5 // pred_check
      _
    $region10: #{conv_bn_layer.3} parent=5 // pred_check_branch
      %154 = sbr.rel (%p151) target = $region12
    $region11: #{conv_bn_layer.3} parent=5 // pred_region
      %s155 = ssub.s32 %s10, 1
      // Predicated region
      $region13: #{conv_bn_layer.3} parent=11 // pred_check
        %p156 = pneg %p69
      $region14: #{conv_bn_layer.3} parent=11 // pred_check_branch
        %158 = sbr.rel (%p156) target = $region16
      $region15: #{conv_bn_layer.3} parent=11 // pred_region
        _
      $region16: #{conv_bn_layer.3} parent=11 // pred_fallthru
        _
      // Predicated region
      $region17: #{conv_bn_layer.3} parent=11 // pred_check
        %p159 = pneg %p90
      $region18: #{conv_bn_layer.3} parent=11 // pred_check_branch
        %161 = sbr.rel (%p159) target = $region20
      $region19: #{conv_bn_layer.3} parent=11 // pred_region
        _
      $region20: #{conv_bn_layer.3} parent=11 // pred_fallthru
        _
      // Predicated region
      $region21: #{conv_bn_layer.3} parent=11 // pred_check
        %p162 = pneg %p111
      $region22: #{conv_bn_layer.3} parent=11 // pred_check_branch
        %164 = sbr.rel (%p162) target = $region24
      $region23: #{conv_bn_layer.3} parent=11 // pred_region
        _
      $region24: #{conv_bn_layer.3} parent=11 // pred_fallthru
        _
    $region12: #{conv_bn_layer.3} parent=5 // pred_fallthru
      _
    %p165 = scmp.lt.s32.totalorder %s10, 4
    // Predicated region
    $region25: #{conv_bn_layer.3} parent=5 // pred_check
      %p166 = pneg %p165
    $region26: #{conv_bn_layer.3} parent=5 // pred_check_branch
      %168 = sbr.rel (%p166) target = $region28
    $region27: #{conv_bn_layer.3} parent=5 // pred_region
      // Predicated region
      $region29: #{conv_bn_layer.3} parent=27 // pred_check
        %p169 = pneg %p42
      $region30: #{conv_bn_layer.3} parent=27 // pred_check_branch
        %171 = sbr.rel (%p169) target = $region32
      $region31: #{conv_bn_layer.3} parent=27 // pred_region
        %p172 = scmp.lt.s32.totalorder %s17, 1
        %s173 = scalar_select %p172, %s17, 1
        %s174 = smul.addr %s173, 54
        %s175 = smul.addr %s174, 8
        %s176 = scalar_lea.vmem %s0, %s175
      $region32: #{conv_bn_layer.3} parent=27 // pred_fallthru
        _
    $region28: #{conv_bn_layer.3} parent=5 // pred_fallthru
      _
    %p177 = scmp.le.s32.totalorder 1, %s10
    %p178 = scmp.lt.s32.totalorder %s10, 5
    %p179 = pnand %p177, %p178
    %p180 = pneg %p179
    // Predicated region
    $region33: #{conv_bn_layer.3} parent=5 // pred_check
      _
    $region34: #{conv_bn_layer.3} parent=5 // pred_check_branch
      %182 = sbr.rel (%p179) target = $region36
    $region35: #{conv_bn_layer.3} parent=5 // pred_region
      %s183 = ssub.s32 %s10, 1
      %p184 = scmp.lt.s32.totalorder %s19, 1
      %s185 = scalar_select %p184, %s19, 1
      %s186 = smul.addr %s185, 54
      %s187 = smul.addr %s186, 8
      %s188 = scalar_lea.vmem %s0, %s187
      %p189 = pneg %p48
      %p190 = pneg %p45
      %p191 = pneg %p69
      %p192 = pneg %p66
      %p193 = pneg %p90
      %p194 = pneg %p87
      %p195 = pneg %p111
      %p196 = pneg %p108
      %p197 = pneg %p141
      %p198 = pneg %p138
      %s199 = smul.u32 %s19, 2
      %s200 = sadd.s32 %s199, %s20
      %s201 = smul.u32 16, %s200
      %p202 = scmp.lt.s32.totalorder %s201, 63
      %s203 = scalar_select %p202, %s201, 63
      %s204 = smul.addr %s203, 8
      %s205 = scalar_lea.vmem %s4, %s204
      %p206 = scmp.lt.s32.totalorder %s19, 1
      %s207 = scalar_select %p206, %s19, 1
      %s208 = smul.addr %s207, 54
      %s209 = smul.addr %s208, 8
      %s210 = scalar_lea.vmem %s0, %s209
      %s211 = smul.u32 %s19, 2
      %s212 = sadd.s32 %s211, %s20
      %s213 = smul.u32 16, %s212
      %p214 = scmp.lt.s32.totalorder %s213, 63
      %s215 = scalar_select %p214, %s213, 63
      %s216 = smul.addr %s215, 8
      %s217 = scalar_lea.vmem %s4, %s216
      %s218 = smul.u32 %s19, 2
      %s219 = sadd.s32 %s218, %s20
      %s220 = smul.u32 16, %s219
      %s221 = smul.u32 %s20, 8
      %s222 = smul.u32 %s221, 24
      %s223 = scalar_lea.vmem %s210, %s222
      %v224 = vld [vmem:[%s223] sm:$0xff]
      %v225 = vld [vmem:[%s223 + $0x8] sm:$0xff]
      %v226 = vld [vmem:[%s223 + $0x18] sm:$0xff]
      %v227 = vld [vmem:[%s223 + $0x20] sm:$0xff]
      %v228 = vld [vmem:[%s223 + $0x30] sm:$0xff]
      %v229 = vld [vmem:[%s223 + $0x38] sm:$0xff]
      %v230 = vld [vmem:[%s223 + $0x48] sm:$0xff]
      %v231 = vld [vmem:[%s223 + $0x50] sm:$0xff]
      %v232 = vld [vmem:[%s223 + $0x60] sm:$0xff]
      %v233 = vld [vmem:[%s223 + $0x68] sm:$0xff]
      %v234 = vld [vmem:[%s223 + $0x78] sm:$0xff]
      %v235 = vld [vmem:[%s223 + $0x80] sm:$0xff]
      %v236 = vld [vmem:[%s223 + $0x90] sm:$0xff]
      %v237 = vld [vmem:[%s223 + $0x98] sm:$0xff]
      %v238 = vld [vmem:[%s223 + $0xa8] sm:$0xff]
      %v239 = vld [vmem:[%s223 + $0xb0] sm:$0xff]
      %v240 = vld [vmem:[%s1] sm:$0xf]
      %v241 = vld [vmem:[%s223 + $0x1] sm:$0xff]
      %v242 = vld [vmem:[%s223 + $0x9] sm:$0xff]
      %v243 = vld [vmem:[%s223 + $0x19] sm:$0xff]
      %v244 = vld [vmem:[%s223 + $0x21] sm:$0xff]
      %v245 = vld [vmem:[%s223 + $0x31] sm:$0xff]
      %v246 = vld [vmem:[%s223 + $0x39] sm:$0xff]
      %v247 = vld [vmem:[%s223 + $0x49] sm:$0xff]
      %v248 = vld [vmem:[%s223 + $0x51] sm:$0xff]
      %v249 = vld [vmem:[%s223 + $0x61] sm:$0xff]
      %v250 = vld [vmem:[%s223 + $0x69] sm:$0xff]
      %v251 = vld [vmem:[%s223 + $0x79] sm:$0xff]
      %v252 = vld [vmem:[%s223 + $0x81] sm:$0xff]
      %v253 = vld [vmem:[%s223 + $0x91] sm:$0xff]
      %v254 = vld [vmem:[%s223 + $0x99] sm:$0xff]
      %v255 = vld [vmem:[%s223 + $0xa9] sm:$0xff]
      %v256 = vld [vmem:[%s223 + $0xb1] sm:$0xff]
      %s257 = scalar_lea.vmem %s1, 4
      %v258 = vld [vmem:[%s257] sm:$0xf]
      %vm259 = vcmask 31744
      %v261 = vsel %vm259, %v241, 0
      %v264 = vsel %vm259, %v242, 0
      %v267 = vsel %vm259, %v243, 0
      %v270 = vsel %vm259, %v244, 0
      %v273 = vsel %vm259, %v245, 0
      %v276 = vsel %vm259, %v246, 0
      %v279 = vsel %vm259, %v247, 0
      %v282 = vsel %vm259, %v248, 0
      %v285 = vsel %vm259, %v249, 0
      %v288 = vsel %vm259, %v250, 0
      %v291 = vsel %vm259, %v251, 0
      %v294 = vsel %vm259, %v252, 0
      %v297 = vsel %vm259, %v253, 0
      %v300 = vsel %vm259, %v254, 0
      %v303 = vsel %vm259, %v255, 0
      %v306 = vsel %vm259, %v256, 0
      %vm308 = vcmask 1043456
      %v310 = vsel %vm308, %v258, 0
      %312 = vmatprep.subr.mxu0 0.0
      %313 = vmatpush1.msra.mxu0 %v310
      %314 = vmatprep.subr.mxu0 0.0
      %315 = vmatpush1.msra.mxu0 0.0
      %316 = vmatprep.subr.mxu0 0.0
      %317 = vmatpush1.msra.mxu0 0.0
      %318 = vmatprep.subr.mxu0 0.0
      %319 = vmatpush1.msra.mxu0 0.0
      %320 = vmatprep.subr.mxu0 0.0
      %321 = vmatpush1.msra.mxu0 0.0
      %322 = vmatprep.subr.mxu0 0.0
      %323 = vmatpush1.msra.mxu0 0.0
      %324 = vmatprep.subr.mxu0 0.0
      %325 = vmatpush1.msra.mxu0 0.0
      %326 = vmatprep.subr.mxu0 0.0
      %327 = vmatpush1.msra.mxu0 0.0
      %328 = vmatprep.subr.mxu0 0.0
      %329 = vmatpush1.msra.mxu0 0.0
      %330 = vmatprep.subr.mxu0 0.0
      %331 = vmatpush1.msra.mxu0 0.0
      %332 = vmatprep.subr.mxu0 0.0
      %333 = vmatpush1.msra.mxu0 0.0
      %334 = vmatprep.subr.mxu0 0.0
      %335 = vmatpush1.msra.mxu0 0.0
      %336 = vmatprep.subr.mxu0 0.0
      %337 = vmatpush1.msra.mxu0 0.0
      %338 = vmatprep.subr.mxu0 0.0
      %339 = vmatpush1.msra.mxu0 0.0
      %340 = vmatprep.subr.mxu0 0.0
      %341 = vmatpush1.msra.mxu0 0.0
      %342 = vmatprep.subr.mxu0 0.0
      %343 = vmatpush1.msra.mxu0 0.0
      %344 = vmatprep.subr.mxu0 0.0
      %345 = vmatpush1.msra.mxu0 0.0
      %346 = vmatprep.subr.mxu0 0.0
      %347 = vmatpush1.msra.mxu0 0.0
      %348 = vmatprep.subr.mxu0 0.0
      %349 = vmatpush1.msra.mxu0 0.0
      %350 = vmatprep.subr.mxu0 0.0
      %351 = vmatpush1.msra.mxu0 0.0
      %352 = vmatprep.subr.mxu0 0.0
      %353 = vmatpush1.msra.mxu0 0.0
      %354 = vmatprep.subr.mxu0 0.0
      %355 = vmatpush1.msra.mxu0 0.0
      %356 = vmatprep.subr.mxu0 0.0
      %357 = vmatpush1.msra.mxu0 0.0
      %358 = vmatprep.subr.mxu0 0.0
      %359 = vmatpush1.msra.mxu0 0.0
      %360 = vmatprep.subr.mxu0 0.0
      %361 = vmatpush1.msra.mxu0 0.0
      %362 = vmatprep.subr.mxu0 0.0
      %363 = vmatpush1.msra.mxu0 0.0
      %364 = vmatprep.subr.mxu0 0.0
      %365 = vmatpush1.msra.mxu0 0.0
      %366 = vmatprep.subr.mxu0 0.0
      %367 = vmatpush1.msra.mxu0 0.0
      %368 = vmatprep.subr.mxu0 0.0
      %369 = vmatpush1.msra.mxu0 0.0
      %370 = vmatprep.subr.mxu0 0.0
      %371 = vmatpush1.msra.mxu0 0.0
      %372 = vmatprep.subr.mxu0 0.0
      %373 = vmatpush1.msra.mxu0 0.0
      %374 = vmatprep.subr.mxu0 0.0
      %375 = vmatpush1.msra.mxu0 0.0
      %376 = vmatprep.mubr.f32.mxu0 0.0
      %377 = vmatmul.mubr.f32.gmra.mrb[0].mxu0 %v261
      %v378 = vpop.f32.mrb[0].mxu0
      %v379 = vadd.f32 0.0, %v378
      %v380 = vpop.f32.mrb[0].mxu0
      %381 = vmatprep.mubr.f32.mxu0 0.0
      %382 = vmatmul.mubr.f32.gmra.mrb[0].mxu0 %v264
      %v383 = vpop.f32.mrb[0].mxu0
      %v384 = vadd.f32 0.0, %v383
      %v385 = vpop.f32.mrb[0].mxu0
      %386 = vmatprep.mubr.f32.mxu0 0.0
      %387 = vmatmul.mubr.f32.gmra.mrb[0].mxu0 %v267
      %v388 = vpop.f32.mrb[0].mxu0
      %v389 = vadd.f32 0.0, %v388
      %v390 = vpop.f32.mrb[0].mxu0
      %391 = vmatprep.mubr.f32.mxu0 0.0
      %392 = vmatmul.mubr.f32.gmra.mrb[0].mxu0 %v270
      %v393 = vpop.f32.mrb[0].mxu0
      %v394 = vadd.f32 0.0, %v393
      %v395 = vpop.f32.mrb[0].mxu0
      %396 = vmatprep.mubr.f32.mxu0 0.0
      %397 = vmatmul.mubr.f32.gmra.mrb[0].mxu0 %v273
      %v398 = vpop.f32.mrb[0].mxu0
      %v399 = vadd.f32 0.0, %v398
      %v400 = vpop.f32.mrb[0].mxu0
      %401 = vmatprep.mubr.f32.mxu0 0.0
      %402 = vmatmul.mubr.f32.gmra.mrb[0].mxu0 %v276
      %v403 = vpop.f32.mrb[0].mxu0
      %v404 = vadd.f32 0.0, %v403
      %v405 = vpop.f32.mrb[0].mxu0
      %406 = vmatprep.mubr.f32.mxu0 0.0
      %407 = vmatmul.mubr.f32.gmra.mrb[0].mxu0 %v279
      %v408 = vpop.f32.mrb[0].mxu0
      %v409 = vadd.f32 0.0, %v408
      %v410 = vpop.f32.mrb[0].mxu0
      %411 = vmatprep.mubr.f32.mxu0 0.0
      %412 = vmatmul.mubr.f32.gmra.mrb[0].mxu0 %v282
      %v413 = vpop.f32.mrb[0].mxu0
      %v414 = vadd.f32 0.0, %v413
      %v415 = vpop.f32.mrb[0].mxu0
      %416 = vmatprep.mubr.f32.mxu0 0.0
      %417 = vmatmul.mubr.f32.gmra.mrb[0].mxu0 %v285
      %v418 = vpop.f32.mrb[0].mxu0
      %v419 = vadd.f32 0.0, %v418
      %v420 = vpop.f32.mrb[0].mxu0
      %421 = vmatprep.mubr.f32.mxu0 0.0
      %422 = vmatmul.mubr.f32.gmra.mrb[0].mxu0 %v288
      %v423 = vpop.f32.mrb[0].mxu0
      %v424 = vadd.f32 0.0, %v423
      %v425 = vpop.f32.mrb[0].mxu0
      %426 = vmatprep.mubr.f32.mxu0 0.0
      %427 = vmatmul.mubr.f32.gmra.mrb[0].mxu0 %v291
      %v428 = vpop.f32.mrb[0].mxu0
      %v429 = vadd.f32 0.0, %v428
      %v430 = vpop.f32.mrb[0].mxu0
      %431 = vmatprep.mubr.f32.mxu0 0.0
      %432 = vmatmul.mubr.f32.gmra.mrb[0].mxu0 %v294
      %v433 = vpop.f32.mrb[0].mxu0
      %v434 = vadd.f32 0.0, %v433
      %v435 = vpop.f32.mrb[0].mxu0
      %436 = vmatprep.mubr.f32.mxu0 0.0
      %437 = vmatmul.mubr.f32.gmra.mrb[0].mxu0 %v297
      %v438 = vpop.f32.mrb[0].mxu0
      %v439 = vadd.f32 0.0, %v438
      %v440 = vpop.f32.mrb[0].mxu0
      %441 = vmatprep.mubr.f32.mxu0 0.0
      %442 = vmatmul.mubr.f32.gmra.mrb[0].mxu0 %v300
      %v443 = vpop.f32.mrb[0].mxu0
      %v444 = vadd.f32 0.0, %v443
      %v445 = vpop.f32.mrb[0].mxu0
      %446 = vmatprep.mubr.f32.mxu0 0.0
      %447 = vmatmul.mubr.f32.gmra.mrb[0].mxu0 %v303
      %v448 = vpop.f32.mrb[0].mxu0
      %v449 = vadd.f32 0.0, %v448
      %v450 = vpop.f32.mrb[0].mxu0
      %451 = vmatprep.mubr.f32.mxu0 0.0
      %452 = vmatmul.mubr.f32.gmra.mrb[0].mxu0 %v306
      %v453 = vpop.f32.mrb[0].mxu0
      %v454 = vadd.f32 0.0, %v453
      %v455 = vpop.f32.mrb[0].mxu0
      %456 = vdwg.mxu0
      %v458 = vsel %vm259, %v224, 0
      %v461 = vsel %vm259, %v225, 0
      %v464 = vsel %vm259, %v226, 0
      %v467 = vsel %vm259, %v227, 0
      %v470 = vsel %vm259, %v228, 0
      %v473 = vsel %vm259, %v229, 0
      %v476 = vsel %vm259, %v230, 0
      %v479 = vsel %vm259, %v231, 0
      %v482 = vsel %vm259, %v232, 0
      %v485 = vsel %vm259, %v233, 0
      %v488 = vsel %vm259, %v234, 0
      %v491 = vsel %vm259, %v235, 0
      %v494 = vsel %vm259, %v236, 0
      %v497 = vsel %vm259, %v237, 0
      %v500 = vsel %vm259, %v238, 0
      %v503 = vsel %vm259, %v239, 0
      %v506 = vsel %vm308, %v240, 0
      %508 = vmatprep.subr.mxu0 0.0
      %509 = vmatpush1.msra.mxu0 %v506
      %510 = vmatprep.subr.mxu0 0.0
      %511 = vmatpush1.msra.mxu0 0.0
      %512 = vmatprep.subr.mxu0 0.0
      %513 = vmatpush1.msra.mxu0 0.0
      %514 = vmatprep.subr.mxu0 0.0
      %515 = vmatpush1.msra.mxu0 0.0
      %516 = vmatprep.subr.mxu0 0.0
      %517 = vmatpush1.msra.mxu0 0.0
      %518 = vmatprep.subr.mxu0 0.0
      %519 = vmatpush1.msra.mxu0 0.0
      %520 = vmatprep.subr.mxu0 0.0
      %521 = vmatpush1.msra.mxu0 0.0
      %522 = vmatprep.subr.mxu0 0.0
      %523 = vmatpush1.msra.mxu0 0.0
      %524 = vmatprep.subr.mxu0 0.0
      %525 = vmatpush1.msra.mxu0 0.0
      %526 = vmatprep.subr.mxu0 0.0
      %527 = vmatpush1.msra.mxu0 0.0
      %528 = vmatprep.subr.mxu0 0.0
      %529 = vmatpush1.msra.mxu0 0.0
      %530 = vmatprep.subr.mxu0 0.0
      %531 = vmatpush1.msra.mxu0 0.0
      %532 = vmatprep.subr.mxu0 0.0
      %533 = vmatpush1.msra.mxu0 0.0
      %534 = vmatprep.subr.mxu0 0.0
      %535 = vmatpush1.msra.mxu0 0.0
      %536 = vmatprep.subr.mxu0 0.0
      %537 = vmatpush1.msra.mxu0 0.0
      %538 = vmatprep.subr.mxu0 0.0
      %539 = vmatpush1.msra.mxu0 0.0
      %540 = vmatprep.subr.mxu0 0.0
      %541 = vmatpush1.msra.mxu0 0.0
      %542 = vmatprep.subr.mxu0 0.0
      %543 = vmatpush1.msra.mxu0 0.0
      %544 = vmatprep.subr.mxu0 0.0
      %545 = vmatpush1.msra.mxu0 0.0
      %546 = vmatprep.subr.mxu0 0.0
      %547 = vmatpush1.msra.mxu0 0.0
      %548 = vmatprep.subr.mxu0 0.0
      %549 = vmatpush1.msra.mxu0 0.0
      %550 = vmatprep.subr.mxu0 0.0
      %551 = vmatpush1.msra.mxu0 0.0
      %552 = vmatprep.subr.mxu0 0.0
      %553 = vmatpush1.msra.mxu0 0.0
      %554 = vmatprep.subr.mxu0 0.0
      %555 = vmatpush1.msra.mxu0 0.0
      %556 = vmatprep.subr.mxu0 0.0
      %557 = vmatpush1.msra.mxu0 0.0
      %558 = vmatprep.subr.mxu0 0.0
      %559 = vmatpush1.msra.mxu0 0.0
      %560 = vmatprep.subr.mxu0 0.0
      %561 = vmatpush1.msra.mxu0 0.0
      %562 = vmatprep.subr.mxu0 0.0
      %563 = vmatpush1.msra.mxu0 0.0
      %564 = vmatprep.subr.mxu0 0.0
      %565 = vmatpush1.msra.mxu0 0.0
      %566 = vmatprep.subr.mxu0 0.0
      %567 = vmatpush1.msra.mxu0 0.0
      %568 = vmatprep.subr.mxu0 0.0
      %569 = vmatpush1.msra.mxu0 0.0
      %570 = vmatprep.subr.mxu0 0.0
      %571 = vmatpush1.msra.mxu0 0.0
      %572 = vmatprep.mubr.f32.mxu0 0.0
      %573 = vmatmul.mubr.f32.gmra.mrb[0].mxu0 %v458
      %v574 = vpop.f32.mrb[0].mxu0
      %v575 = vadd.f32 %v379, %v574
      %v576 = vpop.f32.mrb[0].mxu0
      %577 = vmatprep.mubr.f32.mxu0 0.0
      %578 = vmatmul.mubr.f32.gmra.mrb[0].mxu0 %v461
      %v579 = vpop.f32.mrb[0].mxu0
      %v580 = vadd.f32 %v384, %v579
      %v581 = vpop.f32.mrb[0].mxu0
      %582 = vmatprep.mubr.f32.mxu0 0.0
      %583 = vmatmul.mubr.f32.gmra.mrb[0].mxu0 %v464
      %v584 = vpop.f32.mrb[0].mxu0
      %v585 = vadd.f32 %v389, %v584
      %v586 = vpop.f32.mrb[0].mxu0
      %587 = vmatprep.mubr.f32.mxu0 0.0
      %588 = vmatmul.mubr.f32.gmra.mrb[0].mxu0 %v467
      %v589 = vpop.f32.mrb[0].mxu0
      %v590 = vadd.f32 %v394, %v589
      %v591 = vpop.f32.mrb[0].mxu0
      %592 = vmatprep.mubr.f32.mxu0 0.0
      %593 = vmatmul.mubr.f32.gmra.mrb[0].mxu0 %v470
      %v594 = vpop.f32.mrb[0].mxu0
      %v595 = vadd.f32 %v399, %v594
      %v596 = vpop.f32.mrb[0].mxu0
      %597 = vmatprep.mubr.f32.mxu0 0.0
      %598 = vmatmul.mubr.f32.gmra.mrb[0].mxu0 %v473
      %v599 = vpop.f32.mrb[0].mxu0
      %v600 = vadd.f32 %v404, %v599
      %v601 = vpop.f32.mrb[0].mxu0
      %602 = vmatprep.mubr.f32.mxu0 0.0
      %603 = vmatmul.mubr.f32.gmra.mrb[0].mxu0 %v476
      %v604 = vpop.f32.mrb[0].mxu0
      %v605 = vadd.f32 %v409, %v604
      %v606 = vpop.f32.mrb[0].mxu0
      %607 = vmatprep.mubr.f32.mxu0 0.0
      %608 = vmatmul.mubr.f32.gmra.mrb[0].mxu0 %v479
      %v609 = vpop.f32.mrb[0].mxu0
      %v610 = vadd.f32 %v414, %v609
      %v611 = vpop.f32.mrb[0].mxu0
      %612 = vmatprep.mubr.f32.mxu0 0.0
      %613 = vmatmul.mubr.f32.gmra.mrb[0].mxu0 %v482
      %v614 = vpop.f32.mrb[0].mxu0
      %v615 = vadd.f32 %v419, %v614
      %v616 = vpop.f32.mrb[0].mxu0
      %617 = vmatprep.mubr.f32.mxu0 0.0
      %618 = vmatmul.mubr.f32.gmra.mrb[0].mxu0 %v485
      %v619 = vpop.f32.mrb[0].mxu0
      %v620 = vadd.f32 %v424, %v619
      %v621 = vpop.f32.mrb[0].mxu0
      %622 = vmatprep.mubr.f32.mxu0 0.0
      %623 = vmatmul.mubr.f32.gmra.mrb[0].mxu0 %v488
      %v624 = vpop.f32.mrb[0].mxu0
      %v625 = vadd.f32 %v429, %v624
      %v626 = vpop.f32.mrb[0].mxu0
      %627 = vmatprep.mubr.f32.mxu0 0.0
      %628 = vmatmul.mubr.f32.gmra.mrb[0].mxu0 %v491
      %v629 = vpop.f32.mrb[0].mxu0
      %v630 = vadd.f32 %v434, %v629
      %v631 = vpop.f32.mrb[0].mxu0
      %632 = vmatprep.mubr.f32.mxu0 0.0
      %633 = vmatmul.mubr.f32.gmra.mrb[0].mxu0 %v494
      %v634 = vpop.f32.mrb[0].mxu0
      %v635 = vadd.f32 %v439, %v634
      %v636 = vpop.f32.mrb[0].mxu0
      %637 = vmatprep.mubr.f32.mxu0 0.0
      %638 = vmatmul.mubr.f32.gmra.mrb[0].mxu0 %v497
      %v639 = vpop.f32.mrb[0].mxu0
      %v640 = vadd.f32 %v444, %v639
      %v641 = vpop.f32.mrb[0].mxu0
      %642 = vmatprep.mubr.f32.mxu0 0.0
      %643 = vmatmul.mubr.f32.gmra.mrb[0].mxu0 %v500
      %v644 = vpop.f32.mrb[0].mxu0
      %v645 = vadd.f32 %v449, %v644
      %v646 = vpop.f32.mrb[0].mxu0
      %647 = vmatprep.mubr.f32.mxu0 0.0
      %648 = vmatmul.mubr.f32.gmra.mrb[0].mxu0 %v503
      %v649 = vpop.f32.mrb[0].mxu0
      %v650 = vadd.f32 %v454, %v649
      %v651 = vpop.f32.mrb[0].mxu0
      %652 = vdwg.mxu0
      %v653 = vld [vmem:[%s223 + $0x2] sm:$0xff]
      %v654 = vld [vmem:[%s223 + $0xa] sm:$0xff]
      %v655 = vld [vmem:[%s223 + $0x1a] sm:$0xff]
      %v656 = vld [vmem:[%s223 + $0x22] sm:$0xff]
      %v657 = vld [vmem:[%s223 + $0x32] sm:$0xff]
      %v658 = vld [vmem:[%s223 + $0x3a] sm:$0xff]
      %v659 = vld [vmem:[%s223 + $0x4a] sm:$0xff]
      %v660 = vld [vmem:[%s223 + $0x52] sm:$0xff]
      %v661 = vld [vmem:[%s223 + $0x62] sm:$0xff]
      %v662 = vld [vmem:[%s223 + $0x6a] sm:$0xff]
      %v663 = vld [vmem:[%s223 + $0x7a] sm:$0xff]
      %v664 = vld [vmem:[%s223 + $0x82] sm:$0xff]
      %v665 = vld [vmem:[%s223 + $0x92] sm:$0xff]
      %v666 = vld [vmem:[%s223 + $0x9a] sm:$0xff]
      %v667 = vld [vmem:[%s223 + $0xaa] sm:$0xff]
      %v668 = vld [vmem:[%s223 + $0xb2] sm:$0xff]
      %s669 = scalar_lea.vmem %s1, 8
      %v670 = vld [vmem:[%s669] sm:$0xf]
      %v672 = vsel %vm259, %v653, 0
      %v675 = vsel %vm259, %v654, 0
      %v678 = vsel %vm259, %v655, 0
      %v681 = vsel %vm259, %v656, 0
      %v684 = vsel %vm259, %v657, 0
      %v687 = vsel %vm259, %v658, 0
      %v690 = vsel %vm259, %v659, 0
      %v693 = vsel %vm259, %v660, 0
      %v696 = vsel %vm259, %v661, 0
      %v699 = vsel %vm259, %v662, 0
      %v702 = vsel %vm259, %v663, 0
      %v705 = vsel %vm259, %v664, 0
      %v708 = vsel %vm259, %v665, 0
      %v711 = vsel %vm259, %v666, 0
      %v714 = vsel %vm259, %v667, 0
      %v717 = vsel %vm259, %v668, 0
      %v720 = vsel %vm308, %v670, 0
      %722 = vmatprep.subr.mxu0 0.0
      %723 = vmatpush1.msra.mxu0 %v720
      %724 = vmatprep.subr.mxu0 0.0
      %725 = vmatpush1.msra.mxu0 0.0
      %726 = vmatprep.subr.mxu0 0.0
      %727 = vmatpush1.msra.mxu0 0.0
      %728 = vmatprep.subr.mxu0 0.0
      %729 = vmatpush1.msra.mxu0 0.0
      %730 = vmatprep.subr.mxu0 0.0
      %731 = vmatpush1.msra.mxu0 0.0
      %732 = vmatprep.subr.mxu0 0.0
      %733 = vmatpush1.msra.mxu0 0.0
      %734 = vmatprep.subr.mxu0 0.0
      %735 = vmatpush1.msra.mxu0 0.0
      %736 = vmatprep.subr.mxu0 0.0
      %737 = vmatpush1.msra.mxu0 0.0
      %738 = vmatprep.subr.mxu0 0.0
      %739 = vmatpush1.msra.mxu0 0.0
      %740 = vmatprep.subr.mxu0 0.0
      %741 = vmatpush1.msra.mxu0 0.0
      %742 = vmatprep.subr.mxu0 0.0
      %743 = vmatpush1.msra.mxu0 0.0
      %744 = vmatprep.subr.mxu0 0.0
      %745 = vmatpush1.msra.mxu0 0.0
      %746 = vmatprep.subr.mxu0 0.0
      %747 = vmatpush1.msra.mxu0 0.0
      %748 = vmatprep.subr.mxu0 0.0
      %749 = vmatpush1.msra.mxu0 0.0
      %750 = vmatprep.subr.mxu0 0.0
      %751 = vmatpush1.msra.mxu0 0.0
      %752 = vmatprep.subr.mxu0 0.0
      %753 = vmatpush1.msra.mxu0 0.0
      %754 = vmatprep.subr.mxu0 0.0
      %755 = vmatpush1.msra.mxu0 0.0
      %756 = vmatprep.subr.mxu0 0.0
      %757 = vmatpush1.msra.mxu0 0.0
      %758 = vmatprep.subr.mxu0 0.0
      %759 = vmatpush1.msra.mxu0 0.0
      %760 = vmatprep.subr.mxu0 0.0
      %761 = vmatpush1.msra.mxu0 0.0
      %762 = vmatprep.subr.mxu0 0.0
      %763 = vmatpush1.msra.mxu0 0.0
      %764 = vmatprep.subr.mxu0 0.0
      %765 = vmatpush1.msra.mxu0 0.0
      %766 = vmatprep.subr.mxu0 0.0
      %767 = vmatpush1.msra.mxu0 0.0
      %768 = vmatprep.subr.mxu0 0.0
      %769 = vmatpush1.msra.mxu0 0.0
      %770 = vmatprep.subr.mxu0 0.0
      %771 = vmatpush1.msra.mxu0 0.0
      %772 = vmatprep.subr.mxu0 0.0
      %773 = vmatpush1.msra.mxu0 0.0
      %774 = vmatprep.subr.mxu0 0.0
      %775 = vmatpush1.msra.mxu0 0.0
      %776 = vmatprep.subr.mxu0 0.0
      %777 = vmatpush1.msra.mxu0 0.0
      %778 = vmatprep.subr.mxu0 0.0
      %779 = vmatpush1.msra.mxu0 0.0
      %780 = vmatprep.subr.mxu0 0.0
      %781 = vmatpush1.msra.mxu0 0.0
      %782 = vmatprep.subr.mxu0 0.0
      %783 = vmatpush1.msra.mxu0 0.0
      %784 = vmatprep.subr.mxu0 0.0
      %785 = vmatpush1.msra.mxu0 0.0
      %786 = vmatprep.mubr.f32.mxu0 0.0
      %787 = vmatmul.mubr.f32.gmra.mrb[0].mxu0 %v672
      %v788 = vpop.f32.mrb[0].mxu0
      %v789 = vadd.f32 0.0, %v788
      %v790 = vpop.f32.mrb[0].mxu0
      %791 = vmatprep.mubr.f32.mxu0 0.0
      %792 = vmatmul.mubr.f32.gmra.mrb[0].mxu0 %v675
      %v793 = vpop.f32.mrb[0].mxu0
      %v794 = vadd.f32 0.0, %v793
      %v795 = vpop.f32.mrb[0].mxu0
      %796 = vmatprep.mubr.f32.mxu0 0.0
      %797 = vmatmul.mubr.f32.gmra.mrb[0].mxu0 %v678
      %v798 = vpop.f32.mrb[0].mxu0
      %v799 = vadd.f32 0.0, %v798
      %v800 = vpop.f32.mrb[0].mxu0
      %801 = vmatprep.mubr.f32.mxu0 0.0
      %802 = vmatmul.mubr.f32.gmra.mrb[0].mxu0 %v681
      %v803 = vpop.f32.mrb[0].mxu0
      %v804 = vadd.f32 0.0, %v803
      %v805 = vpop.f32.mrb[0].mxu0
      %806 = vmatprep.mubr.f32.mxu0 0.0
      %807 = vmatmul.mubr.f32.gmra.mrb[0].mxu0 %v684
      %v808 = vpop.f32.mrb[0].mxu0
      %v809 = vadd.f32 0.0, %v808
      %v810 = vpop.f32.mrb[0].mxu0
      %811 = vmatprep.mubr.f32.mxu0 0.0
      %812 = vmatmul.mubr.f32.gmra.mrb[0].mxu0 %v687
      %v813 = vpop.f32.mrb[0].mxu0
      %v814 = vadd.f32 0.0, %v813
      %v815 = vpop.f32.mrb[0].mxu0
      %816 = vmatprep.mubr.f32.mxu0 0.0
      %817 = vmatmul.mubr.f32.gmra.mrb[0].mxu0 %v690
      %v818 = vpop.f32.mrb[0].mxu0
      %v819 = vadd.f32 0.0, %v818
      %v820 = vpop.f32.mrb[0].mxu0
      %821 = vmatprep.mubr.f32.mxu0 0.0
      %822 = vmatmul.mubr.f32.gmra.mrb[0].mxu0 %v693
      %v823 = vpop.f32.mrb[0].mxu0
      %v824 = vadd.f32 0.0, %v823
      %v825 = vpop.f32.mrb[0].mxu0
      %826 = vmatprep.mubr.f32.mxu0 0.0
      %827 = vmatmul.mubr.f32.gmra.mrb[0].mxu0 %v696
      %v828 = vpop.f32.mrb[0].mxu0
      %v829 = vadd.f32 0.0, %v828
      %v830 = vpop.f32.mrb[0].mxu0
      %831 = vmatprep.mubr.f32.mxu0 0.0
      %832 = vmatmul.mubr.f32.gmra.mrb[0].mxu0 %v699
      %v833 = vpop.f32.mrb[0].mxu0
      %v834 = vadd.f32 0.0, %v833
      %v835 = vpop.f32.mrb[0].mxu0
      %836 = vmatprep.mubr.f32.mxu0 0.0
      %837 = vmatmul.mubr.f32.gmra.mrb[0].mxu0 %v702
      %v838 = vpop.f32.mrb[0].mxu0
      %v839 = vadd.f32 0.0, %v838
      %v840 = vpop.f32.mrb[0].mxu0
      %841 = vmatprep.mubr.f32.mxu0 0.0
      %842 = vmatmul.mubr.f32.gmra.mrb[0].mxu0 %v705
      %v843 = vpop.f32.mrb[0].mxu0
      %v844 = vadd.f32 0.0, %v843
      %v845 = vpop.f32.mrb[0].mxu0
      %846 = vmatprep.mubr.f32.mxu0 0.0
      %847 = vmatmul.mubr.f32.gmra.mrb[0].mxu0 %v708
      %v848 = vpop.f32.mrb[0].mxu0
      %v849 = vadd.f32 0.0, %v848
      %v850 = vpop.f32.mrb[0].mxu0
      %851 = vmatprep.mubr.f32.mxu0 0.0
      %852 = vmatmul.mubr.f32.gmra.mrb[0].mxu0 %v711
      %v853 = vpop.f32.mrb[0].mxu0
      %v854 = vadd.f32 0.0, %v853
      %v855 = vpop.f32.mrb[0].mxu0
      %856 = vmatprep.mubr.f32.mxu0 0.0
      %857 = vmatmul.mubr.f32.gmra.mrb[0].mxu0 %v714
      %v858 = vpop.f32.mrb[0].mxu0
      %v859 = vadd.f32 0.0, %v858
      %v860 = vpop.f32.mrb[0].mxu0
      %861 = vmatprep.mubr.f32.mxu0 0.0
      %862 = vmatmul.mubr.f32.gmra.mrb[0].mxu0 %v717
      %v863 = vpop.f32.mrb[0].mxu0
      %v864 = vadd.f32 0.0, %v863
      %v865 = vpop.f32.mrb[0].mxu0
      %866 = vdwg.mxu0
      %v867 = vadd.f32 %v575, %v789
      %v868 = vadd.f32 %v580, %v794
      %v869 = vadd.f32 %v585, %v799
      %v870 = vadd.f32 %v590, %v804
      %v871 = vadd.f32 %v595, %v809
      %v872 = vadd.f32 %v600, %v814
      %v873 = vadd.f32 %v605, %v819
      %v874 = vadd.f32 %v610, %v824
      %v875 = vadd.f32 %v615, %v829
      %v876 = vadd.f32 %v620, %v834
      %v877 = vadd.f32 %v625, %v839
      %v878 = vadd.f32 %v630, %v844
      %v879 = vadd.f32 %v635, %v849
      %v880 = vadd.f32 %v640, %v854
      %v881 = vadd.f32 %v645, %v859
      %v882 = vadd.f32 %v650, %v864
      %s883 = sadd.s32 %s221, 1
      %s884 = smul.u32 %s883, 24
      %s885 = scalar_lea.vmem %s210, %s884
      %v886 = vld [vmem:[%s885] sm:$0xff]
      %v887 = vld [vmem:[%s885 + $0x8] sm:$0xff]
      %v888 = vld [vmem:[%s885 + $0x18] sm:$0xff]
      %v889 = vld [vmem:[%s885 + $0x20] sm:$0xff]
      %v890 = vld [vmem:[%s885 + $0x30] sm:$0xff]
      %v891 = vld [vmem:[%s885 + $0x38] sm:$0xff]
      %v892 = vld [vmem:[%s885 + $0x48] sm:$0xff]
      %v893 = vld [vmem:[%s885 + $0x50] sm:$0xff]
      %v894 = vld [vmem:[%s885 + $0x60] sm:$0xff]
      %v895 = vld [vmem:[%s885 + $0x68] sm:$0xff]
      %v896 = vld [vmem:[%s885 + $0x78] sm:$0xff]
      %v897 = vld [vmem:[%s885 + $0x80] sm:$0xff]
      %v898 = vld [vmem:[%s885 + $0x90] sm:$0xff]
      %v899 = vld [vmem:[%s885 + $0x98] sm:$0xff]
      %v900 = vld [vmem:[%s885 + $0xa8] sm:$0xff]
      %v901 = vld [vmem:[%s885 + $0xb0] sm:$0xff]
      %s902 = scalar_lea.vmem %s1, 12
      %v903 = vld [vmem:[%s902] sm:$0xf]
      %v905 = vsel %vm259, %v886, 0
      %v908 = vsel %vm259, %v887, 0
      %v911 = vsel %vm259, %v888, 0
      %v914 = vsel %vm259, %v889, 0
      %v917 = vsel %vm259, %v890, 0
      %v920 = vsel %vm259, %v891, 0
      %v923 = vsel %vm259, %v892, 0
      %v926 = vsel %vm259, %v893, 0
      %v929 = vsel %vm259, %v894, 0
      %v932 = vsel %vm259, %v895, 0
      %v935 = vsel %vm259, %v896, 0
      %v938 = vsel %vm259, %v897, 0
      %v941 = vsel %vm259, %v898, 0
      %v944 = vsel %vm259, %v899, 0
      %v947 = vsel %vm259, %v900, 0
      %v950 = vsel %vm259, %v901, 0
      %v953 = vsel %vm308, %v903, 0
      %955 = vmatprep.subr.mxu0 0.0
      %956 = vmatpush1.msra.mxu0 %v953
      %957 = vmatprep.subr.mxu0 0.0
      %958 = vmatpush1.msra.mxu0 0.0
      %959 = vmatprep.subr.mxu0 0.0
      %960 = vmatpush1.msra.mxu0 0.0
      %961 = vmatprep.subr.mxu0 0.0
      %962 = vmatpush1.msra.mxu0 0.0
      %963 = vmatprep.subr.mxu0 0.0
      %964 = vmatpush1.msra.mxu0 0.0
      %965 = vmatprep.subr.mxu0 0.0
      %966 = vmatpush1.msra.mxu0 0.0
      %967 = vmatprep.subr.mxu0 0.0
      %968 = vmatpush1.msra.mxu0 0.0
      %969 = vmatprep.subr.mxu0 0.0
      %970 = vmatpush1.msra.mxu0 0.0
      %971 = vmatprep.subr.mxu0 0.0
      %972 = vmatpush1.msra.mxu0 0.0
      %973 = vmatprep.subr.mxu0 0.0
      %974 = vmatpush1.msra.mxu0 0.0
      %975 = vmatprep.subr.mxu0 0.0
      %976 = vmatpush1.msra.mxu0 0.0
      %977 = vmatprep.subr.mxu0 0.0
      %978 = vmatpush1.msra.mxu0 0.0
      %979 = vmatprep.subr.mxu0 0.0
      %980 = vmatpush1.msra.mxu0 0.0
      %981 = vmatprep.subr.mxu0 0.0
      %982 = vmatpush1.msra.mxu0 0.0
      %983 = vmatprep.subr.mxu0 0.0
      %984 = vmatpush1.msra.mxu0 0.0
      %985 = vmatprep.subr.mxu0 0.0
      %986 = vmatpush1.msra.mxu0 0.0
      %987 = vmatprep.subr.mxu0 0.0
      %988 = vmatpush1.msra.mxu0 0.0
      %989 = vmatprep.subr.mxu0 0.0
      %990 = vmatpush1.msra.mxu0 0.0
      %991 = vmatprep.subr.mxu0 0.0
      %992 = vmatpush1.msra.mxu0 0.0
      %993 = vmatprep.subr.mxu0 0.0
      %994 = vmatpush1.msra.mxu0 0.0
      %995 = vmatprep.subr.mxu0 0.0
      %996 = vmatpush1.msra.mxu0 0.0
      %997 = vmatprep.subr.mxu0 0.0
      %998 = vmatpush1.msra.mxu0 0.0
      %999 = vmatprep.subr.mxu0 0.0
      %1000 = vmatpush1.msra.mxu0 0.0
      %1001 = vmatprep.subr.mxu0 0.0
      %1002 = vmatpush1.msra.mxu0 0.0
      %1003 = vmatprep.subr.mxu0 0.0
      %1004 = vmatpush1.msra.mxu0 0.0
      %1005 = vmatprep.subr.mxu0 0.0
      %1006 = vmatpush1.msra.mxu0 0.0
      %1007 = vmatprep.subr.mxu0 0.0
      %1008 = vmatpush1.msra.mxu0 0.0
      %1009 = vmatprep.subr.mxu0 0.0
      %1010 = vmatpush1.msra.mxu0 0.0
      %1011 = vmatprep.subr.mxu0 0.0
      %1012 = vmatpush1.msra.mxu0 0.0
      %1013 = vmatprep.subr.mxu0 0.0
      %1014 = vmatpush1.msra.mxu0 0.0
      %1015 = vmatprep.subr.mxu0 0.0
      %1016 = vmatpush1.msra.mxu0 0.0
      %1017 = vmatprep.subr.mxu0 0.0
      %1018 = vmatpush1.msra.mxu0 0.0
      %1019 = vmatprep.mubr.f32.mxu0 0.0
      %1020 = vmatmul.mubr.f32.gmra.mrb[0].mxu0 %v905
      %v1021 = vpop.f32.mrb[0].mxu0
      %v1022 = vadd.f32 0.0, %v1021
      %v1023 = vpop.f32.mrb[0].mxu0
      %1024 = vmatprep.mubr.f32.mxu0 0.0
      %1025 = vmatmul.mubr.f32.gmra.mrb[0].mxu0 %v908
      %v1026 = vpop.f32.mrb[0].mxu0
      %v1027 = vadd.f32 0.0, %v1026
      %v1028 = vpop.f32.mrb[0].mxu0
      %1029 = vmatprep.mubr.f32.mxu0 0.0
      %1030 = vmatmul.mubr.f32.gmra.mrb[0].mxu0 %v911
      %v1031 = vpop.f32.mrb[0].mxu0
      %v1032 = vadd.f32 0.0, %v1031
      %v1033 = vpop.f32.mrb[0].mxu0
      %1034 = vmatprep.mubr.f32.mxu0 0.0
      %1035 = vmatmul.mubr.f32.gmra.mrb[0].mxu0 %v914
      %v1036 = vpop.f32.mrb[0].mxu0
      %v1037 = vadd.f32 0.0, %v1036
      %v1038 = vpop.f32.mrb[0].mxu0
      %1039 = vmatprep.mubr.f32.mxu0 0.0
      %1040 = vmatmul.mubr.f32.gmra.mrb[0].mxu0 %v917
      %v1041 = vpop.f32.mrb[0].mxu0
      %v1042 = vadd.f32 0.0, %v1041
      %v1043 = vpop.f32.mrb[0].mxu0
      %1044 = vmatprep.mubr.f32.mxu0 0.0
      %1045 = vmatmul.mubr.f32.gmra.mrb[0].mxu0 %v920
      %v1046 = vpop.f32.mrb[0].mxu0
      %v1047 = vadd.f32 0.0, %v1046
      %v1048 = vpop.f32.mrb[0].mxu0
      %1049 = vmatprep.mubr.f32.mxu0 0.0
      %1050 = vmatmul.mubr.f32.gmra.mrb[0].mxu0 %v923
      %v1051 = vpop.f32.mrb[0].mxu0
      %v1052 = vadd.f32 0.0, %v1051
      %v1053 = vpop.f32.mrb[0].mxu0
      %1054 = vmatprep.mubr.f32.mxu0 0.0
      %1055 = vmatmul.mubr.f32.gmra.mrb[0].mxu0 %v926
      %v1056 = vpop.f32.mrb[0].mxu0
      %v1057 = vadd.f32 0.0, %v1056
      %v1058 = vpop.f32.mrb[0].mxu0
      %1059 = vmatprep.mubr.f32.mxu0 0.0
      %1060 = vmatmul.mubr.f32.gmra.mrb[0].mxu0 %v929
      %v1061 = vpop.f32.mrb[0].mxu0
      %v1062 = vadd.f32 0.0, %v1061
      %v1063 = vpop.f32.mrb[0].mxu0
      %1064 = vmatprep.mubr.f32.mxu0 0.0
      %1065 = vmatmul.mubr.f32.gmra.mrb[0].mxu0 %v932
      %v1066 = vpop.f32.mrb[0].mxu0
      %v1067 = vadd.f32 0.0, %v1066
      %v1068 = vpop.f32.mrb[0].mxu0
      %1069 = vmatprep.mubr.f32.mxu0 0.0
      %1070 = vmatmul.mubr.f32.gmra.mrb[0].mxu0 %v935
      %v1071 = vpop.f32.mrb[0].mxu0
      %v1072 = vadd.f32 0.0, %v1071
      %v1073 = vpop.f32.mrb[0].mxu0
      %1074 = vmatprep.mubr.f32.mxu0 0.0
      %1075 = vmatmul.mubr.f32.gmra.mrb[0].mxu0 %v938
      %v1076 = vpop.f32.mrb[0].mxu0
      %v1077 = vadd.f32 0.0, %v1076
      %v1078 = vpop.f32.mrb[0].mxu0
      %1079 = vmatprep.mubr.f32.mxu0 0.0
      %1080 = vmatmul.mubr.f32.gmra.mrb[0].mxu0 %v941
      %v1081 = vpop.f32.mrb[0].mxu0
      %v1082 = vadd.f32 0.0, %v1081
      %v1083 = vpop.f32.mrb[0].mxu0
      %1084 = vmatprep.mubr.f32.mxu0 0.0
      %1085 = vmatmul.mubr.f32.gmra.mrb[0].mxu0 %v944
      %v1086 = vpop.f32.mrb[0].mxu0
      %v1087 = vadd.f32 0.0, %v1086
      %v1088 = vpop.f32.mrb[0].mxu0
      %1089 = vmatprep.mubr.f32.mxu0 0.0
      %1090 = vmatmul.mubr.f32.gmra.mrb[0].mxu0 %v947
      %v1091 = vpop.f32.mrb[0].mxu0
      %v1092 = vadd.f32 0.0, %v1091
      %v1093 = vpop.f32.mrb[0].mxu0
      %1094 = vmatprep.mubr.f32.mxu0 0.0
      %1095 = vmatmul.mubr.f32.gmra.mrb[0].mxu0 %v950
      %v1096 = vpop.f32.mrb[0].mxu0
      %v1097 = vadd.f32 0.0, %v1096
      %v1098 = vpop.f32.mrb[0].mxu0
      %1099 = vdwg.mxu0
      %v1100 = vadd.f32 %v867, %v1022
      %v1101 = vadd.f32 %v868, %v1027
      %v1102 = vadd.f32 %v869, %v1032
      %v1103 = vadd.f32 %v870, %v1037
      %v1104 = vadd.f32 %v871, %v1042
      %v1105 = vadd.f32 %v872, %v1047
      %v1106 = vadd.f32 %v873, %v1052
      %v1107 = vadd.f32 %v874, %v1057
      %v1108 = vadd.f32 %v875, %v1062
      %v1109 = vadd.f32 %v876, %v1067
      %v1110 = vadd.f32 %v877, %v1072
      %v1111 = vadd.f32 %v878, %v1077
      %v1112 = vadd.f32 %v879, %v1082
      %v1113 = vadd.f32 %v880, %v1087
      %v1114 = vadd.f32 %v881, %v1092
      %v1115 = vadd.f32 %v882, %v1097
      %v1116 = vld [vmem:[%s885 + $0x1] sm:$0xff]
      %v1117 = vld [vmem:[%s885 + $0x9] sm:$0xff]
      %v1118 = vld [vmem:[%s885 + $0x19] sm:$0xff]
      %v1119 = vld [vmem:[%s885 + $0x21] sm:$0xff]
      %v1120 = vld [vmem:[%s885 + $0x31] sm:$0xff]
      %v1121 = vld [vmem:[%s885 + $0x39] sm:$0xff]
      %v1122 = vld [vmem:[%s885 + $0x49] sm:$0xff]
      %v1123 = vld [vmem:[%s885 + $0x51] sm:$0xff]
      %v1124 = vld [vmem:[%s885 + $0x61] sm:$0xff]
      %v1125 = vld [vmem:[%s885 + $0x69] sm:$0xff]
      %v1126 = vld [vmem:[%s885 + $0x79] sm:$0xff]
      %v1127 = vld [vmem:[%s885 + $0x81] sm:$0xff]
      %v1128 = vld [vmem:[%s885 + $0x91] sm:$0xff]
      %v1129 = vld [vmem:[%s885 + $0x99] sm:$0xff]
      %v1130 = vld [vmem:[%s885 + $0xa9] sm:$0xff]
      %v1131 = vld [vmem:[%s885 + $0xb1] sm:$0xff]
      %s1132 = scalar_lea.vmem %s1, 16
      %v1133 = vld [vmem:[%s1132] sm:$0xf]
      %v1135 = vsel %vm259, %v1116, 0
      %v1138 = vsel %vm259, %v1117, 0
      %v1141 = vsel %vm259, %v1118, 0
      %v1144 = vsel %vm259, %v1119, 0
      %v1147 = vsel %vm259, %v1120, 0
      %v1150 = vsel %vm259, %v1121, 0
      %v1153 = vsel %vm259, %v1122, 0
      %v1156 = vsel %vm259, %v1123, 0
      %v1159 = vsel %vm259, %v1124, 0
      %v1162 = vsel %vm259, %v1125, 0
      %v1165 = vsel %vm259, %v1126, 0
      %v1168 = vsel %vm259, %v1127, 0
      %v1171 = vsel %vm259, %v1128, 0
      %v1174 = vsel %vm259, %v1129, 0
      %v1177 = vsel %vm259, %v1130, 0
      %v1180 = vsel %vm259, %v1131, 0
      %v1183 = vsel %vm308, %v1133, 0
      %1185 = vmatprep.subr.mxu0 0.0
      %1186 = vmatpush1.msra.mxu0 %v1183
      %1187 = vmatprep.subr.mxu0 0.0
      %1188 = vmatpush1.msra.mxu0 0.0
      %1189 = vmatprep.subr.mxu0 0.0
      %1190 = vmatpush1.msra.mxu0 0.0
      %1191 = vmatprep.subr.mxu0 0.0
      %1192 = vmatpush1.msra.mxu0 0.0
      %1193 = vmatprep.subr.mxu0 0.0
      %1194 = vmatpush1.msra.mxu0 0.0
      %1195 = vmatprep.subr.mxu0 0.0
      %1196 = vmatpush1.msra.mxu0 0.0
      %1197 = vmatprep.subr.mxu0 0.0
      %1198 = vmatpush1.msra.mxu0 0.0
      %1199 = vmatprep.subr.mxu0 0.0
      %1200 = vmatpush1.msra.mxu0 0.0
      %1201 = vmatprep.subr.mxu0 0.0
      %1202 = vmatpush1.msra.mxu0 0.0
      %1203 = vmatprep.subr.mxu0 0.0
      %1204 = vmatpush1.msra.mxu0 0.0
      %1205 = vmatprep.subr.mxu0 0.0
      %1206 = vmatpush1.msra.mxu0 0.0
      %1207 = vmatprep.subr.mxu0 0.0
      %1208 = vmatpush1.msra.mxu0 0.0
      %1209 = vmatprep.subr.mxu0 0.0
      %1210 = vmatpush1.msra.mxu0 0.0
      %1211 = vmatprep.subr.mxu0 0.0
      %1212 = vmatpush1.msra.mxu0 0.0
      %1213 = vmatprep.subr.mxu0 0.0
      %1214 = vmatpush1.msra.mxu0 0.0
      %1215 = vmatprep.subr.mxu0 0.0
      %1216 = vmatpush1.msra.mxu0 0.0
      %1217 = vmatprep.subr.mxu0 0.0
      %1218 = vmatpush1.msra.mxu0 0.0
      %1219 = vmatprep.subr.mxu0 0.0
      %1220 = vmatpush1.msra.mxu0 0.0
      %1221 = vmatprep.subr.mxu0 0.0
      %1222 = vmatpush1.msra.mxu0 0.0
      %1223 = vmatprep.subr.mxu0 0.0
      %1224 = vmatpush1.msra.mxu0 0.0
      %1225 = vmatprep.subr.mxu0 0.0
      %1226 = vmatpush1.msra.mxu0 0.0
      %1227 = vmatprep.subr.mxu0 0.0
      %1228 = vmatpush1.msra.mxu0 0.0
      %1229 = vmatprep.subr.mxu0 0.0
      %1230 = vmatpush1.msra.mxu0 0.0
      %1231 = vmatprep.subr.mxu0 0.0
      %1232 = vmatpush1.msra.mxu0 0.0
      %1233 = vmatprep.subr.mxu0 0.0
      %1234 = vmatpush1.msra.mxu0 0.0
      %1235 = vmatprep.subr.mxu0 0.0
      %1236 = vmatpush1.msra.mxu0 0.0
      %1237 = vmatprep.subr.mxu0 0.0
      %1238 = vmatpush1.msra.mxu0 0.0
      %1239 = vmatprep.subr.mxu0 0.0
      %1240 = vmatpush1.msra.mxu0 0.0
      %1241 = vmatprep.subr.mxu0 0.0
      %1242 = vmatpush1.msra.mxu0 0.0
      %1243 = vmatprep.subr.mxu0 0.0
      %1244 = vmatpush1.msra.mxu0 0.0
      %1245 = vmatprep.subr.mxu0 0.0
      %1246 = vmatpush1.msra.mxu0 0.0
      %1247 = vmatprep.subr.mxu0 0.0
      %1248 = vmatpush1.msra.mxu0 0.0
      %1249 = vmatprep.mubr.f32.mxu0 0.0
      %1250 = vmatmul.mubr.f32.gmra.mrb[0].mxu0 %v1135
      %v1251 = vpop.f32.mrb[0].mxu0
      %v1252 = vadd.f32 0.0, %v1251
      %v1253 = vpop.f32.mrb[0].mxu0
      %1254 = vmatprep.mubr.f32.mxu0 0.0
      %1255 = vmatmul.mubr.f32.gmra.mrb[0].mxu0 %v1138
      %v1256 = vpop.f32.mrb[0].mxu0
      %v1257 = vadd.f32 0.0, %v1256
      %v1258 = vpop.f32.mrb[0].mxu0
      %1259 = vmatprep.mubr.f32.mxu0 0.0
      %1260 = vmatmul.mubr.f32.gmra.mrb[0].mxu0 %v1141
      %v1261 = vpop.f32.mrb[0].mxu0
      %v1262 = vadd.f32 0.0, %v1261
      %v1263 = vpop.f32.mrb[0].mxu0
      %1264 = vmatprep.mubr.f32.mxu0 0.0
      %1265 = vmatmul.mubr.f32.gmra.mrb[0].mxu0 %v1144
      %v1266 = vpop.f32.mrb[0].mxu0
      %v1267 = vadd.f32 0.0, %v1266
      %v1268 = vpop.f32.mrb[0].mxu0
      %1269 = vmatprep.mubr.f32.mxu0 0.0
      %1270 = vmatmul.mubr.f32.gmra.mrb[0].mxu0 %v1147
      %v1271 = vpop.f32.mrb[0].mxu0
      %v1272 = vadd.f32 0.0, %v1271
      %v1273 = vpop.f32.mrb[0].mxu0
      %1274 = vmatprep.mubr.f32.mxu0 0.0
      %1275 = vmatmul.mubr.f32.gmra.mrb[0].mxu0 %v1150
      %v1276 = vpop.f32.mrb[0].mxu0
      %v1277 = vadd.f32 0.0, %v1276
      %v1278 = vpop.f32.mrb[0].mxu0
      %1279 = vmatprep.mubr.f32.mxu0 0.0
      %1280 = vmatmul.mubr.f32.gmra.mrb[0].mxu0 %v1153
      %v1281 = vpop.f32.mrb[0].mxu0
      %v1282 = vadd.f32 0.0, %v1281
      %v1283 = vpop.f32.mrb[0].mxu0
      %1284 = vmatprep.mubr.f32.mxu0 0.0
      %1285 = vmatmul.mubr.f32.gmra.mrb[0].mxu0 %v1156
      %v1286 = vpop.f32.mrb[0].mxu0
      %v1287 = vadd.f32 0.0, %v1286
      %v1288 = vpop.f32.mrb[0].mxu0
      %1289 = vmatprep.mubr.f32.mxu0 0.0
      %1290 = vmatmul.mubr.f32.gmra.mrb[0].mxu0 %v1159
      %v1291 = vpop.f32.mrb[0].mxu0
      %v1292 = vadd.f32 0.0, %v1291
      %v1293 = vpop.f32.mrb[0].mxu0
      %1294 = vmatprep.mubr.f32.mxu0 0.0
      %1295 = vmatmul.mubr.f32.gmra.mrb[0].mxu0 %v1162
      %v1296 = vpop.f32.mrb[0].mxu0
      %v1297 = vadd.f32 0.0, %v1296
      %v1298 = vpop.f32.mrb[0].mxu0
      %1299 = vmatprep.mubr.f32.mxu0 0.0
      %1300 = vmatmul.mubr.f32.gmra.mrb[0].mxu0 %v1165
      %v1301 = vpop.f32.mrb[0].mxu0
      %v1302 = vadd.f32 0.0, %v1301
      %v1303 = vpop.f32.mrb[0].mxu0
      %1304 = vmatprep.mubr.f32.mxu0 0.0
      %1305 = vmatmul.mubr.f32.gmra.mrb[0].mxu0 %v1168
      %v1306 = vpop.f32.mrb[0].mxu0
      %v1307 = vadd.f32 0.0, %v1306
      %v1308 = vpop.f32.mrb[0].mxu0
      %1309 = vmatprep.mubr.f32.mxu0 0.0
      %1310 = vmatmul.mubr.f32.gmra.mrb[0].mxu0 %v1171
      %v1311 = vpop.f32.mrb[0].mxu0
      %v1312 = vadd.f32 0.0, %v1311
      %v1313 = vpop.f32.mrb[0].mxu0
      %1314 = vmatprep.mubr.f32.mxu0 0.0
      %1315 = vmatmul.mubr.f32.gmra.mrb[0].mxu0 %v1174
      %v1316 = vpop.f32.mrb[0].mxu0
      %v1317 = vadd.f32 0.0, %v1316
      %v1318 = vpop.f32.mrb[0].mxu0
      %1319 = vmatprep.mubr.f32.mxu0 0.0
      %1320 = vmatmul.mubr.f32.gmra.mrb[0].mxu0 %v1177
      %v1321 = vpop.f32.mrb[0].mxu0
      %v1322 = vadd.f32 0.0, %v1321
      %v1323 = vpop.f32.mrb[0].mxu0
      %1324 = vmatprep.mubr.f32.mxu0 0.0
      %1325 = vmatmul.mubr.f32.gmra.mrb[0].mxu0 %v1180
      %v1326 = vpop.f32.mrb[0].mxu0
      %v1327 = vadd.f32 0.0, %v1326
      %v1328 = vpop.f32.mrb[0].mxu0
      %1329 = vdwg.mxu0
      %v1330 = vadd.f32 %v1100, %v1252
      %v1331 = vadd.f32 %v1101, %v1257
      %v1332 = vadd.f32 %v1102, %v1262
      %v1333 = vadd.f32 %v1103, %v1267
      %v1334 = vadd.f32 %v1104, %v1272
      %v1335 = vadd.f32 %v1105, %v1277
      %v1336 = vadd.f32 %v1106, %v1282
      %v1337 = vadd.f32 %v1107, %v1287
      %v1338 = vadd.f32 %v1108, %v1292
      %v1339 = vadd.f32 %v1109, %v1297
      %v1340 = vadd.f32 %v1110, %v1302
      %v1341 = vadd.f32 %v1111, %v1307
      %v1342 = vadd.f32 %v1112, %v1312
      %v1343 = vadd.f32 %v1113, %v1317
      %v1344 = vadd.f32 %v1114, %v1322
      %v1345 = vadd.f32 %v1115, %v1327
      %v1346 = vld [vmem:[%s885 + $0x2] sm:$0xff]
      %v1347 = vld [vmem:[%s885 + $0xa] sm:$0xff]
      %v1348 = vld [vmem:[%s885 + $0x1a] sm:$0xff]
      %v1349 = vld [vmem:[%s885 + $0x22] sm:$0xff]
      %v1350 = vld [vmem:[%s885 + $0x32] sm:$0xff]
      %v1351 = vld [vmem:[%s885 + $0x3a] sm:$0xff]
      %v1352 = vld [vmem:[%s885 + $0x4a] sm:$0xff]
      %v1353 = vld [vmem:[%s885 + $0x52] sm:$0xff]
      %v1354 = vld [vmem:[%s885 + $0x62] sm:$0xff]
      %v1355 = vld [vmem:[%s885 + $0x6a] sm:$0xff]
      %v1356 = vld [vmem:[%s885 + $0x7a] sm:$0xff]
      %v1357 = vld [vmem:[%s885 + $0x82] sm:$0xff]
      %v1358 = vld [vmem:[%s885 + $0x92] sm:$0xff]
      %v1359 = vld [vmem:[%s885 + $0x9a] sm:$0xff]
      %v1360 = vld [vmem:[%s885 + $0xaa] sm:$0xff]
      %v1361 = vld [vmem:[%s885 + $0xb2] sm:$0xff]
      %s1362 = scalar_lea.vmem %s1, 20
      %v1363 = vld [vmem:[%s1362] sm:$0xf]
      %v1365 = vsel %vm259, %v1346, 0
      %v1368 = vsel %vm259, %v1347, 0
      %v1371 = vsel %vm259, %v1348, 0
      %v1374 = vsel %vm259, %v1349, 0
      %v1377 = vsel %vm259, %v1350, 0
      %v1380 = vsel %vm259, %v1351, 0
      %v1383 = vsel %vm259, %v1352, 0
      %v1386 = vsel %vm259, %v1353, 0
      %v1389 = vsel %vm259, %v1354, 0
      %v1392 = vsel %vm259, %v1355, 0
      %v1395 = vsel %vm259, %v1356, 0
      %v1398 = vsel %vm259, %v1357, 0
      %v1401 = vsel %vm259, %v1358, 0
      %v1404 = vsel %vm259, %v1359, 0
      %v1407 = vsel %vm259, %v1360, 0
      %v1410 = vsel %vm259, %v1361, 0
      %v1413 = vsel %vm308, %v1363, 0
      %1415 = vmatprep.subr.mxu0 0.0
      %1416 = vmatpush1.msra.mxu0 %v1413
      %1417 = vmatprep.subr.mxu0 0.0
      %1418 = vmatpush1.msra.mxu0 0.0
      %1419 = vmatprep.subr.mxu0 0.0
      %1420 = vmatpush1.msra.mxu0 0.0
      %1421 = vmatprep.subr.mxu0 0.0
      %1422 = vmatpush1.msra.mxu0 0.0
      %1423 = vmatprep.subr.mxu0 0.0
      %1424 = vmatpush1.msra.mxu0 0.0
      %1425 = vmatprep.subr.mxu0 0.0
      %1426 = vmatpush1.msra.mxu0 0.0
      %1427 = vmatprep.subr.mxu0 0.0
      %1428 = vmatpush1.msra.mxu0 0.0
      %1429 = vmatprep.subr.mxu0 0.0
      %1430 = vmatpush1.msra.mxu0 0.0
      %1431 = vmatprep.subr.mxu0 0.0
      %1432 = vmatpush1.msra.mxu0 0.0
      %1433 = vmatprep.subr.mxu0 0.0
      %1434 = vmatpush1.msra.mxu0 0.0
      %1435 = vmatprep.subr.mxu0 0.0
      %1436 = vmatpush1.msra.mxu0 0.0
      %1437 = vmatprep.subr.mxu0 0.0
      %1438 = vmatpush1.msra.mxu0 0.0
      %1439 = vmatprep.subr.mxu0 0.0
      %1440 = vmatpush1.msra.mxu0 0.0
      %1441 = vmatprep.subr.mxu0 0.0
      %1442 = vmatpush1.msra.mxu0 0.0
      %1443 = vmatprep.subr.mxu0 0.0
      %1444 = vmatpush1.msra.mxu0 0.0
      %1445 = vmatprep.subr.mxu0 0.0
      %1446 = vmatpush1.msra.mxu0 0.0
      %1447 = vmatprep.subr.mxu0 0.0
      %1448 = vmatpush1.msra.mxu0 0.0
      %1449 = vmatprep.subr.mxu0 0.0
      %1450 = vmatpush1.msra.mxu0 0.0
      %1451 = vmatprep.subr.mxu0 0.0
      %1452 = vmatpush1.msra.mxu0 0.0
      %1453 = vmatprep.subr.mxu0 0.0
      %1454 = vmatpush1.msra.mxu0 0.0
      %1455 = vmatprep.subr.mxu0 0.0
      %1456 = vmatpush1.msra.mxu0 0.0
      %1457 = vmatprep.subr.mxu0 0.0
      %1458 = vmatpush1.msra.mxu0 0.0
      %1459 = vmatprep.subr.mxu0 0.0
      %1460 = vmatpush1.msra.mxu0 0.0
      %1461 = vmatprep.subr.mxu0 0.0
      %1462 = vmatpush1.msra.mxu0 0.0
      %1463 = vmatprep.subr.mxu0 0.0
      %1464 = vmatpush1.msra.mxu0 0.0
      %1465 = vmatprep.subr.mxu0 0.0
      %1466 = vmatpush1.msra.mxu0 0.0
      %1467 = vmatprep.subr.mxu0 0.0
      %1468 = vmatpush1.msra.mxu0 0.0
      %1469 = vmatprep.subr.mxu0 0.0
      %1470 = vmatpush1.msra.mxu0 0.0
      %1471 = vmatprep.subr.mxu0 0.0
      %1472 = vmatpush1.msra.mxu0 0.0
      %1473 = vmatprep.subr.mxu0 0.0
      %1474 = vmatpush1.msra.mxu0 0.0
      %1475 = vmatprep.subr.mxu0 0.0
      %1476 = vmatpush1.msra.mxu0 0.0
      %1477 = vmatprep.subr.mxu0 0.0
      %1478 = vmatpush1.msra.mxu0 0.0
      %1479 = vmatprep.mubr.f32.mxu0 0.0
      %1480 = vmatmul.mubr.f32.gmra.mrb[0].mxu0 %v1365
      %v1481 = vpop.f32.mrb[0].mxu0
      %v1482 = vadd.f32 0.0, %v1481
      %v1483 = vpop.f32.mrb[0].mxu0
      %1484 = vmatprep.mubr.f32.mxu0 0.0
      %1485 = vmatmul.mubr.f32.gmra.mrb[0].mxu0 %v1368
      %v1486 = vpop.f32.mrb[0].mxu0
      %v1487 = vadd.f32 0.0, %v1486
      %v1488 = vpop.f32.mrb[0].mxu0
      %1489 = vmatprep.mubr.f32.mxu0 0.0
      %1490 = vmatmul.mubr.f32.gmra.mrb[0].mxu0 %v1371
      %v1491 = vpop.f32.mrb[0].mxu0
      %v1492 = vadd.f32 0.0, %v1491
      %v1493 = vpop.f32.mrb[0].mxu0
      %1494 = vmatprep.mubr.f32.mxu0 0.0
      %1495 = vmatmul.mubr.f32.gmra.mrb[0].mxu0 %v1374
      %v1496 = vpop.f32.mrb[0].mxu0
      %v1497 = vadd.f32 0.0, %v1496
      %v1498 = vpop.f32.mrb[0].mxu0
      %1499 = vmatprep.mubr.f32.mxu0 0.0
      %1500 = vmatmul.mubr.f32.gmra.mrb[0].mxu0 %v1377
      %v1501 = vpop.f32.mrb[0].mxu0
      %v1502 = vadd.f32 0.0, %v1501
      %v1503 = vpop.f32.mrb[0].mxu0
      %1504 = vmatprep.mubr.f32.mxu0 0.0
      %1505 = vmatmul.mubr.f32.gmra.mrb[0].mxu0 %v1380
      %v1506 = vpop.f32.mrb[0].mxu0
      %v1507 = vadd.f32 0.0, %v1506
      %v1508 = vpop.f32.mrb[0].mxu0
      %1509 = vmatprep.mubr.f32.mxu0 0.0
      %1510 = vmatmul.mubr.f32.gmra.mrb[0].mxu0 %v1383
      %v1511 = vpop.f32.mrb[0].mxu0
      %v1512 = vadd.f32 0.0, %v1511
      %v1513 = vpop.f32.mrb[0].mxu0
      %1514 = vmatprep.mubr.f32.mxu0 0.0
      %1515 = vmatmul.mubr.f32.gmra.mrb[0].mxu0 %v1386
      %v1516 = vpop.f32.mrb[0].mxu0
      %v1517 = vadd.f32 0.0, %v1516
      %v1518 = vpop.f32.mrb[0].mxu0
      %1519 = vmatprep.mubr.f32.mxu0 0.0
      %1520 = vmatmul.mubr.f32.gmra.mrb[0].mxu0 %v1389
      %v1521 = vpop.f32.mrb[0].mxu0
      %v1522 = vadd.f32 0.0, %v1521
      %v1523 = vpop.f32.mrb[0].mxu0
      %1524 = vmatprep.mubr.f32.mxu0 0.0
      %1525 = vmatmul.mubr.f32.gmra.mrb[0].mxu0 %v1392
      %v1526 = vpop.f32.mrb[0].mxu0
      %v1527 = vadd.f32 0.0, %v1526
      %v1528 = vpop.f32.mrb[0].mxu0
      %1529 = vmatprep.mubr.f32.mxu0 0.0
      %1530 = vmatmul.mubr.f32.gmra.mrb[0].mxu0 %v1395
      %v1531 = vpop.f32.mrb[0].mxu0
      %v1532 = vadd.f32 0.0, %v1531
      %v1533 = vpop.f32.mrb[0].mxu0
      %1534 = vmatprep.mubr.f32.mxu0 0.0
      %1535 = vmatmul.mubr.f32.gmra.mrb[0].mxu0 %v1398
      %v1536 = vpop.f32.mrb[0].mxu0
      %v1537 = vadd.f32 0.0, %v1536
      %v1538 = vpop.f32.mrb[0].mxu0
      %1539 = vmatprep.mubr.f32.mxu0 0.0
      %1540 = vmatmul.mubr.f32.gmra.mrb[0].mxu0 %v1401
      %v1541 = vpop.f32.mrb[0].mxu0
      %v1542 = vadd.f32 0.0, %v1541
      %v1543 = vpop.f32.mrb[0].mxu0
      %1544 = vmatprep.mubr.f32.mxu0 0.0
      %1545 = vmatmul.mubr.f32.gmra.mrb[0].mxu0 %v1404
      %v1546 = vpop.f32.mrb[0].mxu0
      %v1547 = vadd.f32 0.0, %v1546
      %v1548 = vpop.f32.mrb[0].mxu0
      %1549 = vmatprep.mubr.f32.mxu0 0.0
      %1550 = vmatmul.mubr.f32.gmra.mrb[0].mxu0 %v1407
      %v1551 = vpop.f32.mrb[0].mxu0
      %v1552 = vadd.f32 0.0, %v1551
      %v1553 = vpop.f32.mrb[0].mxu0
      %1554 = vmatprep.mubr.f32.mxu0 0.0
      %1555 = vmatmul.mubr.f32.gmra.mrb[0].mxu0 %v1410
      %v1556 = vpop.f32.mrb[0].mxu0
      %v1557 = vadd.f32 0.0, %v1556
      %v1558 = vpop.f32.mrb[0].mxu0
      %1559 = vdwg.mxu0
      %v1560 = vadd.f32 %v1330, %v1482
      %v1561 = vadd.f32 %v1331, %v1487
      %v1562 = vadd.f32 %v1332, %v1492
      %v1563 = vadd.f32 %v1333, %v1497
      %v1564 = vadd.f32 %v1334, %v1502
      %v1565 = vadd.f32 %v1335, %v1507
      %v1566 = vadd.f32 %v1336, %v1512
      %v1567 = vadd.f32 %v1337, %v1517
      %v1568 = vadd.f32 %v1338, %v1522
      %v1569 = vadd.f32 %v1339, %v1527
      %v1570 = vadd.f32 %v1340, %v1532
      %v1571 = vadd.f32 %v1341, %v1537
      %v1572 = vadd.f32 %v1342, %v1542
      %v1573 = vadd.f32 %v1343, %v1547
      %v1574 = vadd.f32 %v1344, %v1552
      %v1575 = vadd.f32 %v1345, %v1557
      %s1576 = sadd.s32 %s221, 2
      %s1577 = smul.u32 %s1576, 24
      %s1578 = scalar_lea.vmem %s210, %s1577
      %v1579 = vld [vmem:[%s1578] sm:$0xff]
      %v1580 = vld [vmem:[%s1578 + $0x8] sm:$0xff]
      %v1581 = vld [vmem:[%s1578 + $0x18] sm:$0xff]
      %v1582 = vld [vmem:[%s1578 + $0x20] sm:$0xff]
      %v1583 = vld [vmem:[%s1578 + $0x30] sm:$0xff]
      %v1584 = vld [vmem:[%s1578 + $0x38] sm:$0xff]
      %v1585 = vld [vmem:[%s1578 + $0x48] sm:$0xff]
      %v1586 = vld [vmem:[%s1578 + $0x50] sm:$0xff]
      %v1587 = vld [vmem:[%s1578 + $0x60] sm:$0xff]
      %v1588 = vld [vmem:[%s1578 + $0x68] sm:$0xff]
      %v1589 = vld [vmem:[%s1578 + $0x78] sm:$0xff]
      %v1590 = vld [vmem:[%s1578 + $0x80] sm:$0xff]
      %v1591 = vld [vmem:[%s1578 + $0x90] sm:$0xff]
      %v1592 = vld [vmem:[%s1578 + $0x98] sm:$0xff]
      %v1593 = vld [vmem:[%s1578 + $0xa8] sm:$0xff]
      %v1594 = vld [vmem:[%s1578 + $0xb0] sm:$0xff]
      %s1595 = scalar_lea.vmem %s1, 24
      %v1596 = vld [vmem:[%s1595] sm:$0xf]
      %v1598 = vsel %vm259, %v1579, 0
      %v1601 = vsel %vm259, %v1580, 0
      %v1604 = vsel %vm259, %v1581, 0
      %v1607 = vsel %vm259, %v1582, 0
      %v1610 = vsel %vm259, %v1583, 0
      %v1613 = vsel %vm259, %v1584, 0
      %v1616 = vsel %vm259, %v1585, 0
      %v1619 = vsel %vm259, %v1586, 0
      %v1622 = vsel %vm259, %v1587, 0
      %v1625 = vsel %vm259, %v1588, 0
      %v1628 = vsel %vm259, %v1589, 0
      %v1631 = vsel %vm259, %v1590, 0
      %v1634 = vsel %vm259, %v1591, 0
      %v1637 = vsel %vm259, %v1592, 0
      %v1640 = vsel %vm259, %v1593, 0
      %v1643 = vsel %vm259, %v1594, 0
      %v1646 = vsel %vm308, %v1596, 0
      %1648 = vmatprep.subr.mxu0 0.0
      %1649 = vmatpush1.msra.mxu0 %v1646
      %1650 = vmatprep.subr.mxu0 0.0
      %1651 = vmatpush1.msra.mxu0 0.0
      %1652 = vmatprep.subr.mxu0 0.0
      %1653 = vmatpush1.msra.mxu0 0.0
      %1654 = vmatprep.subr.mxu0 0.0
      %1655 = vmatpush1.msra.mxu0 0.0
      %1656 = vmatprep.subr.mxu0 0.0
      %1657 = vmatpush1.msra.mxu0 0.0
      %1658 = vmatprep.subr.mxu0 0.0
      %1659 = vmatpush1.msra.mxu0 0.0
      %1660 = vmatprep.subr.mxu0 0.0
      %1661 = vmatpush1.msra.mxu0 0.0
      %1662 = vmatprep.subr.mxu0 0.0
      %1663 = vmatpush1.msra.mxu0 0.0
      %1664 = vmatprep.subr.mxu0 0.0
      %1665 = vmatpush1.msra.mxu0 0.0
      %1666 = vmatprep.subr.mxu0 0.0
      %1667 = vmatpush1.msra.mxu0 0.0
      %1668 = vmatprep.subr.mxu0 0.0
      %1669 = vmatpush1.msra.mxu0 0.0
      %1670 = vmatprep.subr.mxu0 0.0
      %1671 = vmatpush1.msra.mxu0 0.0
      %1672 = vmatprep.subr.mxu0 0.0
      %1673 = vmatpush1.msra.mxu0 0.0
      %1674 = vmatprep.subr.mxu0 0.0
      %1675 = vmatpush1.msra.mxu0 0.0
      %1676 = vmatprep.subr.mxu0 0.0
      %1677 = vmatpush1.msra.mxu0 0.0
      %1678 = vmatprep.subr.mxu0 0.0
      %1679 = vmatpush1.msra.mxu0 0.0
      %1680 = vmatprep.subr.mxu0 0.0
      %1681 = vmatpush1.msra.mxu0 0.0
      %1682 = vmatprep.subr.mxu0 0.0
      %1683 = vmatpush1.msra.mxu0 0.0
      %1684 = vmatprep.subr.mxu0 0.0
      %1685 = vmatpush1.msra.mxu0 0.0
      %1686 = vmatprep.subr.mxu0 0.0
      %1687 = vmatpush1.msra.mxu0 0.0
      %1688 = vmatprep.subr.mxu0 0.0
      %1689 = vmatpush1.msra.mxu0 0.0
      %1690 = vmatprep.subr.mxu0 0.0
      %1691 = vmatpush1.msra.mxu0 0.0
      %1692 = vmatprep.subr.mxu0 0.0
      %1693 = vmatpush1.msra.mxu0 0.0
      %1694 = vmatprep.subr.mxu0 0.0
      %1695 = vmatpush1.msra.mxu0 0.0
      %1696 = vmatprep.subr.mxu0 0.0
      %1697 = vmatpush1.msra.mxu0 0.0
      %1698 = vmatprep.subr.mxu0 0.0
      %1699 = vmatpush1.msra.mxu0 0.0
      %1700 = vmatprep.subr.mxu0 0.0
      %1701 = vmatpush1.msra.mxu0 0.0
      %1702 = vmatprep.subr.mxu0 0.0
      %1703 = vmatpush1.msra.mxu0 0.0
      %1704 = vmatprep.subr.mxu0 0.0
      %1705 = vmatpush1.msra.mxu0 0.0
      %1706 = vmatprep.subr.mxu0 0.0
      %1707 = vmatpush1.msra.mxu0 0.0
      %1708 = vmatprep.subr.mxu0 0.0
      %1709 = vmatpush1.msra.mxu0 0.0
      %1710 = vmatprep.subr.mxu0 0.0
      %1711 = vmatpush1.msra.mxu0 0.0
      %1712 = vmatprep.mubr.f32.mxu0 0.0
      %1713 = vmatmul.mubr.f32.gmra.mrb[0].mxu0 %v1598
      %v1714 = vpop.f32.mrb[0].mxu0
      %v1715 = vadd.f32 0.0, %v1714
      %v1716 = vpop.f32.mrb[0].mxu0
      %1717 = vmatprep.mubr.f32.mxu0 0.0
      %1718 = vmatmul.mubr.f32.gmra.mrb[0].mxu0 %v1601
      %v1719 = vpop.f32.mrb[0].mxu0
      %v1720 = vadd.f32 0.0, %v1719
      %v1721 = vpop.f32.mrb[0].mxu0
      %1722 = vmatprep.mubr.f32.mxu0 0.0
      %1723 = vmatmul.mubr.f32.gmra.mrb[0].mxu0 %v1604
      %v1724 = vpop.f32.mrb[0].mxu0
      %v1725 = vadd.f32 0.0, %v1724
      %v1726 = vpop.f32.mrb[0].mxu0
      %1727 = vmatprep.mubr.f32.mxu0 0.0
      %1728 = vmatmul.mubr.f32.gmra.mrb[0].mxu0 %v1607
      %v1729 = vpop.f32.mrb[0].mxu0
      %v1730 = vadd.f32 0.0, %v1729
      %v1731 = vpop.f32.mrb[0].mxu0
      %1732 = vmatprep.mubr.f32.mxu0 0.0
      %1733 = vmatmul.mubr.f32.gmra.mrb[0].mxu0 %v1610
      %v1734 = vpop.f32.mrb[0].mxu0
      %v1735 = vadd.f32 0.0, %v1734
      %v1736 = vpop.f32.mrb[0].mxu0
      %1737 = vmatprep.mubr.f32.mxu0 0.0
      %1738 = vmatmul.mubr.f32.gmra.mrb[0].mxu0 %v1613
      %v1739 = vpop.f32.mrb[0].mxu0
      %v1740 = vadd.f32 0.0, %v1739
      %v1741 = vpop.f32.mrb[0].mxu0
      %1742 = vmatprep.mubr.f32.mxu0 0.0
      %1743 = vmatmul.mubr.f32.gmra.mrb[0].mxu0 %v1616
      %v1744 = vpop.f32.mrb[0].mxu0
      %v1745 = vadd.f32 0.0, %v1744
      %v1746 = vpop.f32.mrb[0].mxu0
      %1747 = vmatprep.mubr.f32.mxu0 0.0
      %1748 = vmatmul.mubr.f32.gmra.mrb[0].mxu0 %v1619
      %v1749 = vpop.f32.mrb[0].mxu0
      %v1750 = vadd.f32 0.0, %v1749
      %v1751 = vpop.f32.mrb[0].mxu0
      %1752 = vmatprep.mubr.f32.mxu0 0.0
      %1753 = vmatmul.mubr.f32.gmra.mrb[0].mxu0 %v1622
      %v1754 = vpop.f32.mrb[0].mxu0
      %v1755 = vadd.f32 0.0, %v1754
      %v1756 = vpop.f32.mrb[0].mxu0
      %1757 = vmatprep.mubr.f32.mxu0 0.0
      %1758 = vmatmul.mubr.f32.gmra.mrb[0].mxu0 %v1625
      %v1759 = vpop.f32.mrb[0].mxu0
      %v1760 = vadd.f32 0.0, %v1759
      %v1761 = vpop.f32.mrb[0].mxu0
      %1762 = vmatprep.mubr.f32.mxu0 0.0
      %1763 = vmatmul.mubr.f32.gmra.mrb[0].mxu0 %v1628
      %v1764 = vpop.f32.mrb[0].mxu0
      %v1765 = vadd.f32 0.0, %v1764
      %v1766 = vpop.f32.mrb[0].mxu0
      %1767 = vmatprep.mubr.f32.mxu0 0.0
      %1768 = vmatmul.mubr.f32.gmra.mrb[0].mxu0 %v1631
      %v1769 = vpop.f32.mrb[0].mxu0
      %v1770 = vadd.f32 0.0, %v1769
      %v1771 = vpop.f32.mrb[0].mxu0
      %1772 = vmatprep.mubr.f32.mxu0 0.0
      %1773 = vmatmul.mubr.f32.gmra.mrb[0].mxu0 %v1634
      %v1774 = vpop.f32.mrb[0].mxu0
      %v1775 = vadd.f32 0.0, %v1774
      %v1776 = vpop.f32.mrb[0].mxu0
      %1777 = vmatprep.mubr.f32.mxu0 0.0
      %1778 = vmatmul.mubr.f32.gmra.mrb[0].mxu0 %v1637
      %v1779 = vpop.f32.mrb[0].mxu0
      %v1780 = vadd.f32 0.0, %v1779
      %v1781 = vpop.f32.mrb[0].mxu0
      %1782 = vmatprep.mubr.f32.mxu0 0.0
      %1783 = vmatmul.mubr.f32.gmra.mrb[0].mxu0 %v1640
      %v1784 = vpop.f32.mrb[0].mxu0
      %v1785 = vadd.f32 0.0, %v1784
      %v1786 = vpop.f32.mrb[0].mxu0
      %1787 = vmatprep.mubr.f32.mxu0 0.0
      %1788 = vmatmul.mubr.f32.gmra.mrb[0].mxu0 %v1643
      %v1789 = vpop.f32.mrb[0].mxu0
      %v1790 = vadd.f32 0.0, %v1789
      %v1791 = vpop.f32.mrb[0].mxu0
      %1792 = vdwg.mxu0
      %v1793 = vadd.f32 %v1560, %v1715
      %v1794 = vadd.f32 %v1561, %v1720
      %v1795 = vadd.f32 %v1562, %v1725
      %v1796 = vadd.f32 %v1563, %v1730
      %v1797 = vadd.f32 %v1564, %v1735
      %v1798 = vadd.f32 %v1565, %v1740
      %v1799 = vadd.f32 %v1566, %v1745
      %v1800 = vadd.f32 %v1567, %v1750
      %v1801 = vadd.f32 %v1568, %v1755
      %v1802 = vadd.f32 %v1569, %v1760
      %v1803 = vadd.f32 %v1570, %v1765
      %v1804 = vadd.f32 %v1571, %v1770
      %v1805 = vadd.f32 %v1572, %v1775
      %v1806 = vadd.f32 %v1573, %v1780
      %v1807 = vadd.f32 %v1574, %v1785
      %v1808 = vadd.f32 %v1575, %v1790
      %v1809 = vld [vmem:[%s1578 + $0x1] sm:$0xff]
      %v1810 = vld [vmem:[%s1578 + $0x9] sm:$0xff]
      %v1811 = vld [vmem:[%s1578 + $0x19] sm:$0xff]
      %v1812 = vld [vmem:[%s1578 + $0x21] sm:$0xff]
      %v1813 = vld [vmem:[%s1578 + $0x31] sm:$0xff]
      %v1814 = vld [vmem:[%s1578 + $0x39] sm:$0xff]
      %v1815 = vld [vmem:[%s1578 + $0x49] sm:$0xff]
      %v1816 = vld [vmem:[%s1578 + $0x51] sm:$0xff]
      %v1817 = vld [vmem:[%s1578 + $0x61] sm:$0xff]
      %v1818 = vld [vmem:[%s1578 + $0x69] sm:$0xff]
      %v1819 = vld [vmem:[%s1578 + $0x79] sm:$0xff]
      %v1820 = vld [vmem:[%s1578 + $0x81] sm:$0xff]
      %v1821 = vld [vmem:[%s1578 + $0x91] sm:$0xff]
      %v1822 = vld [vmem:[%s1578 + $0x99] sm:$0xff]
      %v1823 = vld [vmem:[%s1578 + $0xa9] sm:$0xff]
      %v1824 = vld [vmem:[%s1578 + $0xb1] sm:$0xff]
      %s1825 = scalar_lea.vmem %s1, 28
      %v1826 = vld [vmem:[%s1825] sm:$0xf]
      %v1828 = vsel %vm259, %v1809, 0
      %v1831 = vsel %vm259, %v1810, 0
      %v1834 = vsel %vm259, %v1811, 0
      %v1837 = vsel %vm259, %v1812, 0
      %v1840 = vsel %vm259, %v1813, 0
      %v1843 = vsel %vm259, %v1814, 0
      %v1846 = vsel %vm259, %v1815, 0
      %v1849 = vsel %vm259, %v1816, 0
      %v1852 = vsel %vm259, %v1817, 0
      %v1855 = vsel %vm259, %v1818, 0
      %v1858 = vsel %vm259, %v1819, 0
      %v1861 = vsel %vm259, %v1820, 0
      %v1864 = vsel %vm259, %v1821, 0
      %v1867 = vsel %vm259, %v1822, 0
      %v1870 = vsel %vm259, %v1823, 0
      %v1873 = vsel %vm259, %v1824, 0
      %v1876 = vsel %vm308, %v1826, 0
      %1878 = vmatprep.subr.mxu0 0.0
      %1879 = vmatpush1.msra.mxu0 %v1876
      %1880 = vmatprep.subr.mxu0 0.0
      %1881 = vmatpush1.msra.mxu0 0.0
      %1882 = vmatprep.subr.mxu0 0.0
      %1883 = vmatpush1.msra.mxu0 0.0
      %1884 = vmatprep.subr.mxu0 0.0
      %1885 = vmatpush1.msra.mxu0 0.0
      %1886 = vmatprep.subr.mxu0 0.0
      %1887 = vmatpush1.msra.mxu0 0.0
      %1888 = vmatprep.subr.mxu0 0.0
      %1889 = vmatpush1.msra.mxu0 0.0
      %1890 = vmatprep.subr.mxu0 0.0
      %1891 = vmatpush1.msra.mxu0 0.0
      %1892 = vmatprep.subr.mxu0 0.0
      %1893 = vmatpush1.msra.mxu0 0.0
      %1894 = vmatprep.subr.mxu0 0.0
      %1895 = vmatpush1.msra.mxu0 0.0
      %1896 = vmatprep.subr.mxu0 0.0
      %1897 = vmatpush1.msra.mxu0 0.0
      %1898 = vmatprep.subr.mxu0 0.0
      %1899 = vmatpush1.msra.mxu0 0.0
      %1900 = vmatprep.subr.mxu0 0.0
      %1901 = vmatpush1.msra.mxu0 0.0
      %1902 = vmatprep.subr.mxu0 0.0
      %1903 = vmatpush1.msra.mxu0 0.0
      %1904 = vmatprep.subr.mxu0 0.0
      %1905 = vmatpush1.msra.mxu0 0.0
      %1906 = vmatprep.subr.mxu0 0.0
      %1907 = vmatpush1.msra.mxu0 0.0
      %1908 = vmatprep.subr.mxu0 0.0
      %1909 = vmatpush1.msra.mxu0 0.0
      %1910 = vmatprep.subr.mxu0 0.0
      %1911 = vmatpush1.msra.mxu0 0.0
      %1912 = vmatprep.subr.mxu0 0.0
      %1913 = vmatpush1.msra.mxu0 0.0
      %1914 = vmatprep.subr.mxu0 0.0
      %1915 = vmatpush1.msra.mxu0 0.0
      %1916 = vmatprep.subr.mxu0 0.0
      %1917 = vmatpush1.msra.mxu0 0.0
      %1918 = vmatprep.subr.mxu0 0.0
      %1919 = vmatpush1.msra.mxu0 0.0
      %1920 = vmatprep.subr.mxu0 0.0
      %1921 = vmatpush1.msra.mxu0 0.0
      %1922 = vmatprep.subr.mxu0 0.0
      %1923 = vmatpush1.msra.mxu0 0.0
      %1924 = vmatprep.subr.mxu0 0.0
      %1925 = vmatpush1.msra.mxu0 0.0
      %1926 = vmatprep.subr.mxu0 0.0
      %1927 = vmatpush1.msra.mxu0 0.0
      %1928 = vmatprep.subr.mxu0 0.0
      %1929 = vmatpush1.msra.mxu0 0.0
      %1930 = vmatprep.subr.mxu0 0.0
      %1931 = vmatpush1.msra.mxu0 0.0
      %1932 = vmatprep.subr.mxu0 0.0
      %1933 = vmatpush1.msra.mxu0 0.0
      %1934 = vmatprep.subr.mxu0 0.0
      %1935 = vmatpush1.msra.mxu0 0.0
      %1936 = vmatprep.subr.mxu0 0.0
      %1937 = vmatpush1.msra.mxu0 0.0
      %1938 = vmatprep.subr.mxu0 0.0
      %1939 = vmatpush1.msra.mxu0 0.0
      %1940 = vmatprep.subr.mxu0 0.0
      %1941 = vmatpush1.msra.mxu0 0.0
      %1942 = vmatprep.mubr.f32.mxu0 0.0
      %1943 = vmatmul.mubr.f32.gmra.mrb[0].mxu0 %v1828
      %v1944 = vpop.f32.mrb[0].mxu0
      %v1945 = vadd.f32 0.0, %v1944
      %v1946 = vpop.f32.mrb[0].mxu0
      %1947 = vmatprep.mubr.f32.mxu0 0.0
      %1948 = vmatmul.mubr.f32.gmra.mrb[0].mxu0 %v1831
      %v1949 = vpop.f32.mrb[0].mxu0
      %v1950 = vadd.f32 0.0, %v1949
      %v1951 = vpop.f32.mrb[0].mxu0
      %1952 = vmatprep.mubr.f32.mxu0 0.0
      %1953 = vmatmul.mubr.f32.gmra.mrb[0].mxu0 %v1834
      %v1954 = vpop.f32.mrb[0].mxu0
      %v1955 = vadd.f32 0.0, %v1954
      %v1956 = vpop.f32.mrb[0].mxu0
      %1957 = vmatprep.mubr.f32.mxu0 0.0
      %1958 = vmatmul.mubr.f32.gmra.mrb[0].mxu0 %v1837
      %v1959 = vpop.f32.mrb[0].mxu0
      %v1960 = vadd.f32 0.0, %v1959
      %v1961 = vpop.f32.mrb[0].mxu0
      %1962 = vmatprep.mubr.f32.mxu0 0.0
      %1963 = vmatmul.mubr.f32.gmra.mrb[0].mxu0 %v1840
      %v1964 = vpop.f32.mrb[0].mxu0
      %v1965 = vadd.f32 0.0, %v1964
      %v1966 = vpop.f32.mrb[0].mxu0
      %1967 = vmatprep.mubr.f32.mxu0 0.0
      %1968 = vmatmul.mubr.f32.gmra.mrb[0].mxu0 %v1843
      %v1969 = vpop.f32.mrb[0].mxu0
      %v1970 = vadd.f32 0.0, %v1969
      %v1971 = vpop.f32.mrb[0].mxu0
      %1972 = vmatprep.mubr.f32.mxu0 0.0
      %1973 = vmatmul.mubr.f32.gmra.mrb[0].mxu0 %v1846
      %v1974 = vpop.f32.mrb[0].mxu0
      %v1975 = vadd.f32 0.0, %v1974
      %v1976 = vpop.f32.mrb[0].mxu0
      %1977 = vmatprep.mubr.f32.mxu0 0.0
      %1978 = vmatmul.mubr.f32.gmra.mrb[0].mxu0 %v1849
      %v1979 = vpop.f32.mrb[0].mxu0
      %v1980 = vadd.f32 0.0, %v1979
      %v1981 = vpop.f32.mrb[0].mxu0
      %1982 = vmatprep.mubr.f32.mxu0 0.0
      %1983 = vmatmul.mubr.f32.gmra.mrb[0].mxu0 %v1852
      %v1984 = vpop.f32.mrb[0].mxu0
      %v1985 = vadd.f32 0.0, %v1984
      %v1986 = vpop.f32.mrb[0].mxu0
      %1987 = vmatprep.mubr.f32.mxu0 0.0
      %1988 = vmatmul.mubr.f32.gmra.mrb[0].mxu0 %v1855
      %v1989 = vpop.f32.mrb[0].mxu0
      %v1990 = vadd.f32 0.0, %v1989
      %v1991 = vpop.f32.mrb[0].mxu0
      %1992 = vmatprep.mubr.f32.mxu0 0.0
      %1993 = vmatmul.mubr.f32.gmra.mrb[0].mxu0 %v1858
      %v1994 = vpop.f32.mrb[0].mxu0
      %v1995 = vadd.f32 0.0, %v1994
      %v1996 = vpop.f32.mrb[0].mxu0
      %1997 = vmatprep.mubr.f32.mxu0 0.0
      %1998 = vmatmul.mubr.f32.gmra.mrb[0].mxu0 %v1861
      %v1999 = vpop.f32.mrb[0].mxu0
      %v2000 = vadd.f32 0.0, %v1999
      %v2001 = vpop.f32.mrb[0].mxu0
      %2002 = vmatprep.mubr.f32.mxu0 0.0
      %2003 = vmatmul.mubr.f32.gmra.mrb[0].mxu0 %v1864
      %v2004 = vpop.f32.mrb[0].mxu0
      %v2005 = vadd.f32 0.0, %v2004
      %v2006 = vpop.f32.mrb[0].mxu0
      %2007 = vmatprep.mubr.f32.mxu0 0.0
      %2008 = vmatmul.mubr.f32.gmra.mrb[0].mxu0 %v1867
      %v2009 = vpop.f32.mrb[0].mxu0
      %v2010 = vadd.f32 0.0, %v2009
      %v2011 = vpop.f32.mrb[0].mxu0
      %2012 = vmatprep.mubr.f32.mxu0 0.0
      %2013 = vmatmul.mubr.f32.gmra.mrb[0].mxu0 %v1870
      %v2014 = vpop.f32.mrb[0].mxu0
      %v2015 = vadd.f32 0.0, %v2014
      %v2016 = vpop.f32.mrb[0].mxu0
      %2017 = vmatprep.mubr.f32.mxu0 0.0
      %2018 = vmatmul.mubr.f32.gmra.mrb[0].mxu0 %v1873
      %v2019 = vpop.f32.mrb[0].mxu0
      %v2020 = vadd.f32 0.0, %v2019
      %v2021 = vpop.f32.mrb[0].mxu0
      %2022 = vdwg.mxu0
      %v2023 = vadd.f32 %v1793, %v1945
      %v2024 = vadd.f32 %v1794, %v1950
      %v2025 = vadd.f32 %v1795, %v1955
      %v2026 = vadd.f32 %v1796, %v1960
      %v2027 = vadd.f32 %v1797, %v1965
      %v2028 = vadd.f32 %v1798, %v1970
      %v2029 = vadd.f32 %v1799, %v1975
      %v2030 = vadd.f32 %v1800, %v1980
      %v2031 = vadd.f32 %v1801, %v1985
      %v2032 = vadd.f32 %v1802, %v1990
      %v2033 = vadd.f32 %v1803, %v1995
      %v2034 = vadd.f32 %v1804, %v2000
      %v2035 = vadd.f32 %v1805, %v2005
      %v2036 = vadd.f32 %v1806, %v2010
      %v2037 = vadd.f32 %v1807, %v2015
      %v2038 = vadd.f32 %v1808, %v2020
      %v2039 = vld [vmem:[%s1578 + $0x2] sm:$0xff]
      %v2040 = vld [vmem:[%s1578 + $0xa] sm:$0xff]
      %v2041 = vld [vmem:[%s1578 + $0x1a] sm:$0xff]
      %v2042 = vld [vmem:[%s1578 + $0x22] sm:$0xff]
      %v2043 = vld [vmem:[%s1578 + $0x32] sm:$0xff]
      %v2044 = vld [vmem:[%s1578 + $0x3a] sm:$0xff]
      %v2045 = vld [vmem:[%s1578 + $0x4a] sm:$0xff]
      %v2046 = vld [vmem:[%s1578 + $0x52] sm:$0xff]
      %v2047 = vld [vmem:[%s1578 + $0x62] sm:$0xff]
      %v2048 = vld [vmem:[%s1578 + $0x6a] sm:$0xff]
      %v2049 = vld [vmem:[%s1578 + $0x7a] sm:$0xff]
      %v2050 = vld [vmem:[%s1578 + $0x82] sm:$0xff]
      %v2051 = vld [vmem:[%s1578 + $0x92] sm:$0xff]
      %v2052 = vld [vmem:[%s1578 + $0x9a] sm:$0xff]
      %v2053 = vld [vmem:[%s1578 + $0xaa] sm:$0xff]
      %v2054 = vld [vmem:[%s1578 + $0xb2] sm:$0xff]
      %s2055 = scalar_lea.vmem %s1, 32
      %v2056 = vld [vmem:[%s2055] sm:$0xf]
      %v2058 = vsel %vm259, %v2039, 0
      %v2061 = vsel %vm259, %v2040, 0
      %v2064 = vsel %vm259, %v2041, 0
      %v2067 = vsel %vm259, %v2042, 0
      %v2070 = vsel %vm259, %v2043, 0
      %v2073 = vsel %vm259, %v2044, 0
      %v2076 = vsel %vm259, %v2045, 0
      %v2079 = vsel %vm259, %v2046, 0
      %v2082 = vsel %vm259, %v2047, 0
      %v2085 = vsel %vm259, %v2048, 0
      %v2088 = vsel %vm259, %v2049, 0
      %v2091 = vsel %vm259, %v2050, 0
      %v2094 = vsel %vm259, %v2051, 0
      %v2097 = vsel %vm259, %v2052, 0
      %v2100 = vsel %vm259, %v2053, 0
      %v2103 = vsel %vm259, %v2054, 0
      %v2106 = vsel %vm308, %v2056, 0
      %2108 = vmatprep.subr.mxu0 0.0
      %2109 = vmatpush1.msra.mxu0 %v2106
      %2110 = vmatprep.subr.mxu0 0.0
      %2111 = vmatpush1.msra.mxu0 0.0
      %2112 = vmatprep.subr.mxu0 0.0
      %2113 = vmatpush1.msra.mxu0 0.0
      %2114 = vmatprep.subr.mxu0 0.0
      %2115 = vmatpush1.msra.mxu0 0.0
      %2116 = vmatprep.subr.mxu0 0.0
      %2117 = vmatpush1.msra.mxu0 0.0
      %2118 = vmatprep.subr.mxu0 0.0
      %2119 = vmatpush1.msra.mxu0 0.0
      %2120 = vmatprep.subr.mxu0 0.0
      %2121 = vmatpush1.msra.mxu0 0.0
      %2122 = vmatprep.subr.mxu0 0.0
      %2123 = vmatpush1.msra.mxu0 0.0
      %2124 = vmatprep.subr.mxu0 0.0
      %2125 = vmatpush1.msra.mxu0 0.0
      %2126 = vmatprep.subr.mxu0 0.0
      %2127 = vmatpush1.msra.mxu0 0.0
      %2128 = vmatprep.subr.mxu0 0.0
      %2129 = vmatpush1.msra.mxu0 0.0
      %2130 = vmatprep.subr.mxu0 0.0
      %2131 = vmatpush1.msra.mxu0 0.0
      %2132 = vmatprep.subr.mxu0 0.0
      %2133 = vmatpush1.msra.mxu0 0.0
      %2134 = vmatprep.subr.mxu0 0.0
      %2135 = vmatpush1.msra.mxu0 0.0
      %2136 = vmatprep.subr.mxu0 0.0
      %2137 = vmatpush1.msra.mxu0 0.0
      %2138 = vmatprep.subr.mxu0 0.0
      %2139 = vmatpush1.msra.mxu0 0.0
      %2140 = vmatprep.subr.mxu0 0.0
      %2141 = vmatpush1.msra.mxu0 0.0
      %2142 = vmatprep.subr.mxu0 0.0
      %2143 = vmatpush1.msra.mxu0 0.0
      %2144 = vmatprep.subr.mxu0 0.0
      %2145 = vmatpush1.msra.mxu0 0.0
      %2146 = vmatprep.subr.mxu0 0.0
      %2147 = vmatpush1.msra.mxu0 0.0
      %2148 = vmatprep.subr.mxu0 0.0
      %2149 = vmatpush1.msra.mxu0 0.0
      %2150 = vmatprep.subr.mxu0 0.0
      %2151 = vmatpush1.msra.mxu0 0.0
      %2152 = vmatprep.subr.mxu0 0.0
      %2153 = vmatpush1.msra.mxu0 0.0
      %2154 = vmatprep.subr.mxu0 0.0
      %2155 = vmatpush1.msra.mxu0 0.0
      %2156 = vmatprep.subr.mxu0 0.0
      %2157 = vmatpush1.msra.mxu0 0.0
      %2158 = vmatprep.subr.mxu0 0.0
      %2159 = vmatpush1.msra.mxu0 0.0
      %2160 = vmatprep.subr.mxu0 0.0
      %2161 = vmatpush1.msra.mxu0 0.0
      %2162 = vmatprep.subr.mxu0 0.0
      %2163 = vmatpush1.msra.mxu0 0.0
      %2164 = vmatprep.subr.mxu0 0.0
      %2165 = vmatpush1.msra.mxu0 0.0
      %2166 = vmatprep.subr.mxu0 0.0
      %2167 = vmatpush1.msra.mxu0 0.0
      %2168 = vmatprep.subr.mxu0 0.0
      %2169 = vmatpush1.msra.mxu0 0.0
      %2170 = vmatprep.subr.mxu0 0.0
      %2171 = vmatpush1.msra.mxu0 0.0
      %2172 = vmatprep.mubr.f32.mxu0 0.0
      %2173 = vmatmul.mubr.f32.gmra.mrb[0].mxu0 %v2058
      %v2174 = vpop.f32.mrb[0].mxu0
      %v2175 = vadd.f32 0.0, %v2174
      %v2176 = vpop.f32.mrb[0].mxu0
      %2177 = vmatprep.mubr.f32.mxu0 0.0
      %2178 = vmatmul.mubr.f32.gmra.mrb[0].mxu0 %v2061
      %v2179 = vpop.f32.mrb[0].mxu0
      %v2180 = vadd.f32 0.0, %v2179
      %v2181 = vpop.f32.mrb[0].mxu0
      %2182 = vmatprep.mubr.f32.mxu0 0.0
      %2183 = vmatmul.mubr.f32.gmra.mrb[0].mxu0 %v2064
      %v2184 = vpop.f32.mrb[0].mxu0
      %v2185 = vadd.f32 0.0, %v2184
      %v2186 = vpop.f32.mrb[0].mxu0
      %2187 = vmatprep.mubr.f32.mxu0 0.0
      %2188 = vmatmul.mubr.f32.gmra.mrb[0].mxu0 %v2067
      %v2189 = vpop.f32.mrb[0].mxu0
      %v2190 = vadd.f32 0.0, %v2189
      %v2191 = vpop.f32.mrb[0].mxu0
      %2192 = vmatprep.mubr.f32.mxu0 0.0
      %2193 = vmatmul.mubr.f32.gmra.mrb[0].mxu0 %v2070
      %v2194 = vpop.f32.mrb[0].mxu0
      %v2195 = vadd.f32 0.0, %v2194
      %v2196 = vpop.f32.mrb[0].mxu0
      %2197 = vmatprep.mubr.f32.mxu0 0.0
      %2198 = vmatmul.mubr.f32.gmra.mrb[0].mxu0 %v2073
      %v2199 = vpop.f32.mrb[0].mxu0
      %v2200 = vadd.f32 0.0, %v2199
      %v2201 = vpop.f32.mrb[0].mxu0
      %2202 = vmatprep.mubr.f32.mxu0 0.0
      %2203 = vmatmul.mubr.f32.gmra.mrb[0].mxu0 %v2076
      %v2204 = vpop.f32.mrb[0].mxu0
      %v2205 = vadd.f32 0.0, %v2204
      %v2206 = vpop.f32.mrb[0].mxu0
      %2207 = vmatprep.mubr.f32.mxu0 0.0
      %2208 = vmatmul.mubr.f32.gmra.mrb[0].mxu0 %v2079
      %v2209 = vpop.f32.mrb[0].mxu0
      %v2210 = vadd.f32 0.0, %v2209
      %v2211 = vpop.f32.mrb[0].mxu0
      %2212 = vmatprep.mubr.f32.mxu0 0.0
      %2213 = vmatmul.mubr.f32.gmra.mrb[0].mxu0 %v2082
      %v2214 = vpop.f32.mrb[0].mxu0
      %v2215 = vadd.f32 0.0, %v2214
      %v2216 = vpop.f32.mrb[0].mxu0
      %2217 = vmatprep.mubr.f32.mxu0 0.0
      %2218 = vmatmul.mubr.f32.gmra.mrb[0].mxu0 %v2085
      %v2219 = vpop.f32.mrb[0].mxu0
      %v2220 = vadd.f32 0.0, %v2219
      %v2221 = vpop.f32.mrb[0].mxu0
      %2222 = vmatprep.mubr.f32.mxu0 0.0
      %2223 = vmatmul.mubr.f32.gmra.mrb[0].mxu0 %v2088
      %v2224 = vpop.f32.mrb[0].mxu0
      %v2225 = vadd.f32 0.0, %v2224
      %v2226 = vpop.f32.mrb[0].mxu0
      %2227 = vmatprep.mubr.f32.mxu0 0.0
      %2228 = vmatmul.mubr.f32.gmra.mrb[0].mxu0 %v2091
      %v2229 = vpop.f32.mrb[0].mxu0
      %v2230 = vadd.f32 0.0, %v2229
      %v2231 = vpop.f32.mrb[0].mxu0
      %2232 = vmatprep.mubr.f32.mxu0 0.0
      %2233 = vmatmul.mubr.f32.gmra.mrb[0].mxu0 %v2094
      %v2234 = vpop.f32.mrb[0].mxu0
      %v2235 = vadd.f32 0.0, %v2234
      %v2236 = vpop.f32.mrb[0].mxu0
      %2237 = vmatprep.mubr.f32.mxu0 0.0
      %2238 = vmatmul.mubr.f32.gmra.mrb[0].mxu0 %v2097
      %v2239 = vpop.f32.mrb[0].mxu0
      %v2240 = vadd.f32 0.0, %v2239
      %v2241 = vpop.f32.mrb[0].mxu0
      %2242 = vmatprep.mubr.f32.mxu0 0.0
      %2243 = vmatmul.mubr.f32.gmra.mrb[0].mxu0 %v2100
      %v2244 = vpop.f32.mrb[0].mxu0
      %v2245 = vadd.f32 0.0, %v2244
      %v2246 = vpop.f32.mrb[0].mxu0
      %2247 = vmatprep.mubr.f32.mxu0 0.0
      %2248 = vmatmul.mubr.f32.gmra.mrb[0].mxu0 %v2103
      %v2249 = vpop.f32.mrb[0].mxu0
      %v2250 = vadd.f32 0.0, %v2249
      %v2251 = vpop.f32.mrb[0].mxu0
      %2252 = vdwg.mxu0
      %v2253 = vadd.f32 %v2023, %v2175
      %v2254 = vadd.f32 %v2024, %v2180
      %v2255 = vadd.f32 %v2025, %v2185
      %v2256 = vadd.f32 %v2026, %v2190
      %v2257 = vadd.f32 %v2027, %v2195
      %v2258 = vadd.f32 %v2028, %v2200
      %v2259 = vadd.f32 %v2029, %v2205
      %v2260 = vadd.f32 %v2030, %v2210
      %v2261 = vadd.f32 %v2031, %v2215
      %v2262 = vadd.f32 %v2032, %v2220
      %v2263 = vadd.f32 %v2033, %v2225
      %v2264 = vadd.f32 %v2034, %v2230
      %v2265 = vadd.f32 %v2035, %v2235
      %v2266 = vadd.f32 %v2036, %v2240
      %v2267 = vadd.f32 %v2037, %v2245
      %v2268 = vadd.f32 %v2038, %v2250
      %v2269 = vld [vmem:[%s2] sm:$0x1]
      %v2271 = vlaneseq
      %v2272 = vshrl.u32 %v2271, 7
      %v2273 = vsub.s32 0, %v2272
      %v2274 = vrot.slane %v2269, %v2273
      %v2276 = vmul.f32 %v2253, %v2274
      %v2277 = vmul.f32 %v2254, %v2274
      %v2278 = vmul.f32 %v2255, %v2274
      %v2279 = vmul.f32 %v2256, %v2274
      %v2280 = vmul.f32 %v2257, %v2274
      %v2281 = vmul.f32 %v2258, %v2274
      %v2282 = vmul.f32 %v2259, %v2274
      %v2283 = vmul.f32 %v2260, %v2274
      %v2284 = vmul.f32 %v2261, %v2274
      %v2285 = vmul.f32 %v2262, %v2274
      %v2286 = vmul.f32 %v2263, %v2274
      %v2287 = vmul.f32 %v2264, %v2274
      %v2288 = vmul.f32 %v2265, %v2274
      %v2289 = vmul.f32 %v2266, %v2274
      %v2290 = vmul.f32 %v2267, %v2274
      %v2291 = vmul.f32 %v2268, %v2274
      %v2292 = vld [vmem:[%s3] sm:$0x1]
      %v2294 = vlaneseq
      %v2295 = vshrl.u32 %v2294, 7
      %v2296 = vsub.s32 0, %v2295
      %v2297 = vrot.slane %v2292, %v2296
      %v2299 = vadd.f32 %v2276, %v2297
      %v2300 = vadd.f32 %v2277, %v2297
      %v2301 = vadd.f32 %v2278, %v2297
      %v2302 = vadd.f32 %v2279, %v2297
      %v2303 = vadd.f32 %v2280, %v2297
      %v2304 = vadd.f32 %v2281, %v2297
      %v2305 = vadd.f32 %v2282, %v2297
      %v2306 = vadd.f32 %v2283, %v2297
      %v2307 = vadd.f32 %v2284, %v2297
      %v2308 = vadd.f32 %v2285, %v2297
      %v2309 = vadd.f32 %v2286, %v2297
      %v2310 = vadd.f32 %v2287, %v2297
      %v2311 = vadd.f32 %v2288, %v2297
      %v2312 = vadd.f32 %v2289, %v2297
      %v2313 = vadd.f32 %v2290, %v2297
      %v2314 = vadd.f32 %v2291, %v2297
      %v2315 = vmax.f32 %v2299, 0.0
      %v2316 = vmax.f32 %v2300, 0.0
      %v2317 = vmax.f32 %v2301, 0.0
      %v2318 = vmax.f32 %v2302, 0.0
      %v2319 = vmax.f32 %v2303, 0.0
      %v2320 = vmax.f32 %v2304, 0.0
      %v2321 = vmax.f32 %v2305, 0.0
      %v2322 = vmax.f32 %v2306, 0.0
      %v2323 = vmax.f32 %v2307, 0.0
      %v2324 = vmax.f32 %v2308, 0.0
      %v2325 = vmax.f32 %v2309, 0.0
      %v2326 = vmax.f32 %v2310, 0.0
      %v2327 = vmax.f32 %v2311, 0.0
      %v2328 = vmax.f32 %v2312, 0.0
      %v2329 = vmax.f32 %v2313, 0.0
      %v2330 = vmax.f32 %v2314, 0.0
      %2331 = vst [vmem:[%s217] sm:$0xff] %v2315
      %2332 = vst [vmem:[%s217 + $0x8] sm:$0xff] %v2316
      %2333 = vst [vmem:[%s217 + $0x10] sm:$0xff] %v2317
      %2334 = vst [vmem:[%s217 + $0x18] sm:$0xff] %v2318
      %2335 = vst [vmem:[%s217 + $0x20] sm:$0xff] %v2319
      %2336 = vst [vmem:[%s217 + $0x28] sm:$0xff] %v2320
      %2337 = vst [vmem:[%s217 + $0x30] sm:$0xff] %v2321
      %2338 = vst [vmem:[%s217 + $0x38] sm:$0xff] %v2322
      %2339 = vst [vmem:[%s217 + $0x40] sm:$0xff] %v2323
      %2340 = vst [vmem:[%s217 + $0x48] sm:$0xff] %v2324
      %2341 = vst [vmem:[%s217 + $0x50] sm:$0xff] %v2325
      %2342 = vst [vmem:[%s217 + $0x58] sm:$0xff] %v2326
      %2343 = vst [vmem:[%s217 + $0x60] sm:$0xff] %v2327
      %2344 = vst [vmem:[%s217 + $0x68] sm:$0xff] %v2328
      %2345 = vst [vmem:[%s217 + $0x70] sm:$0xff] %v2329
      %2346 = vst [vmem:[%s217 + $0x78] sm:$0xff] %v2330
      %s2347 = smul.u32 %s19, 2
      %s2348 = sadd.s32 %s2347, %s20
      %s2349 = smul.u32 16, %s2348
      %p2350 = scmp.lt.s32.totalorder %s2349, 63
      %s2351 = scalar_select %p2350, %s2349, 63
      %s2352 = smul.addr %s2351, 8
      %s2353 = scalar_lea.vmem %s4, %s2352
      // Predicated region
      $region37: #{conv_bn_layer.3} parent=35 // pred_check
        %p2354 = pneg %p138
      $region38: #{conv_bn_layer.3} parent=35 // pred_check_branch
        %2356 = sbr.rel (%p2354) target = $region40
      $region39: #{conv_bn_layer.3} parent=35 // pred_region
        %s2357 = smul.u32 %s19, 2
        %s2358 = sadd.s32 %s2357, %s20
        %s2359 = smul.u32 16, %s2358
      $region40: #{conv_bn_layer.3} parent=35 // pred_fallthru
        _
    $region36: #{conv_bn_layer.3} parent=5 // pred_fallthru
      _
    %p2360 = scmp.le.s32.totalorder 2, %s10
    // Predicated region
    $region41: #{conv_bn_layer.3} parent=5 // pred_check
      %p2361 = pneg %p2360
    $region42: #{conv_bn_layer.3} parent=5 // pred_check_branch
      %2363 = sbr.rel (%p2361) target = $region44
    $region43: #{conv_bn_layer.3} parent=5 // pred_region
      %s2364 = ssub.s32 %s10, 2
      // Predicated region
      $region45: #{conv_bn_layer.3} parent=43 // pred_check
        %p2365 = pneg %p144
      $region46: #{conv_bn_layer.3} parent=43 // pred_check_branch
        %2367 = sbr.rel (%p2365) target = $region48
      $region47: #{conv_bn_layer.3} parent=43 // pred_region
        %s2368 = smul.u32 %s21, 2
        %s2369 = sadd.s32 %s2368, %s22
        %s2370 = smul.u32 16, %s2369
        %p2371 = scmp.lt.s32.totalorder %s2370, 63
        %s2372 = scalar_select %p2371, %s2370, 63
        %s2373 = smul.addr %s2372, 8
        %s2374 = scalar_lea.vmem %s4, %s2373
      $region48: #{conv_bn_layer.3} parent=43 // pred_fallthru
        _
    $region44: #{conv_bn_layer.3} parent=5 // pred_fallthru
      _
  $region6: #{conv_bn_layer.3} parent=0 // loop_footer
    %s14 = sadd.s32 1, %s10
  $region7: #{conv_bn_layer.3} parent=0 // loop_footer_branch
    %9 = sbr.rel target = $region3
  $region8: #{conv_bn_layer.3} parent=0 // loop_exit
    _

</llo_original>
